<compile_context>
chip_gen: v7x
topology: tpu7x:2x2x1
jax: 0.10.0
libtpu: 0.0.40
codegen_flags: <defaults>
</compile_context>

<pallas_src>
import functools

import jax
import jax.numpy as jnp
from jax import lax
from jax.experimental import pallas as pl
from jax.experimental.pallas import tpu as pltpu


def _generator_kernel(
    x_ref,      # (S, B, 1)   time-major input
    wih0_ref,   # (1, 4H)     layer-0 input weights (input_size == 1)
    whh0_ref,   # (H, 4H)     layer-0 recurrent weights (transposed)
    b0_ref,     # (1, 4H)     layer-0 combined bias (b_ih0 + b_hh0)
    wih1_ref,   # (H, 4H)     layer-1 input weights (transposed)
    whh1_ref,   # (H, 4H)     layer-1 recurrent weights (transposed)
    b1_ref,     # (1, 4H)     layer-1 combined bias (b_ih1 + b_hh1)
    wout_ref,   # (1, H)      output Linear weight (row form)
    bout_ref,   # (1, 1)      output Linear bias
    h0_ref,     # (2, B, H)   initial hidden state
    c0_ref,     # (2, B, H)   initial cell state
    out_ref,    # (B, S)      output: projected sequence (batch-first)
    *, seq_len, hidden_dim, batch,
):
    H = hidden_dim
    B = batch
    S = seq_len

    # Hoist weight loads, bias broadcasts, and the column iota out of the
    # recurrence (JAX does not CSE broadcast_in_dim across loop iterations).
    wih0 = wih0_ref[...]                                   # (1, 4H)
    whh0 = whh0_ref[...]                                   # (H, 4H)
    wih1 = wih1_ref[...]                                   # (H, 4H)
    whh1 = whh1_ref[...]                                   # (H, 4H)
    wout = wout_ref[...]                                   # (1, H)
    b0 = jnp.broadcast_to(b0_ref[...], (B, 4 * H))
    b1 = jnp.broadcast_to(b1_ref[...], (B, 4 * H))
    col_ids = lax.broadcasted_iota(jnp.int32, (B, S), 1)   # (B, S)

    def gates_to_hc(gates, c_prev):
        # One full-width (B, 4H) sigmoid + one tanh on the g slice
        # (2 EUP passes per cell instead of 4 quarter-width ones).
        sig = jax.nn.sigmoid(gates)
        i = sig[:, 0 * H:1 * H]
        f = sig[:, 1 * H:2 * H]
        o = sig[:, 3 * H:4 * H]
        g = jnp.tanh(gates[:, 2 * H:3 * H])
        c_new = f * c_prev + i * g
        h_new = o * jnp.tanh(c_new)
        return h_new, c_new

    def body(t, carry):
        h0p, c0p, h1p, c1p, y_acc = carry

        # Layer-1 recurrent partial: depends only on the previous iteration,
        # so its MXU push and bias add overlap layer-0's matmul + gates.
        g1_part = jnp.dot(h1p, whh1, preferred_element_type=jnp.float32) + b1

        # Layer 0: rank-1 input term computed in-kernel (2 VPU ops, off the
        # serial chain); only the (B, H) @ (H, 4H) recurrent matmul remains.
        xw0_t = x_ref[t] * wih0 + b0                       # (B,1)*(1,4H)+(B,4H)
        g0 = xw0_t + jnp.dot(h0p, whh0, preferred_element_type=jnp.float32)
        h0n, c0n = gates_to_hc(g0, c0p)

        # Layer 1 completion: short K=H matmul on the h0n-dependent path.
        g1 = g1_part + jnp.dot(h0n, wih1, preferred_element_type=jnp.float32)
        h1n, c1n = gates_to_hc(g1, c1p)

        # Output projection, off the recurrence chain: accumulate column t of
        # the lane-dense (B, S) result carried in vregs (no per-step stores).
        y_t = jnp.sum(h1n * wout, axis=-1, keepdims=True)  # (B, 1)
        y_acc = jnp.where(col_ids == t, y_t, y_acc)

        return (h0n, c0n, h1n, c1n, y_acc)

    init = (h0_ref[0], c0_ref[0], h0_ref[1], c0_ref[1],
            jnp.zeros((B, S), jnp.float32))
    final = lax.fori_loop(0, S, body, init, unroll=True)

    # Single lane-dense store after the loop (epilogue: output bias add).
    out_ref[...] = final[4] + bout_ref[...]


def generator_forward(x, hidden, params, *, seq_length, batch_size, hidden_dim):
    """Mirror of Generator.forward(x, hidden): returns (B, S, 1)."""
    B, S, H = batch_size, seq_length, hidden_dim
    h0, c0 = hidden  # each (num_layers=2, B, H)

    # x.view(batch, seq, 1) -> time-major (S, B, 1) (tiny; only wrapper op).
    x_tm = jnp.transpose(x.reshape(B, S, 1), (1, 0, 2)).astype(jnp.float32)

    kernel = functools.partial(
        _generator_kernel, seq_len=S, hidden_dim=H, batch=B)

    vmem = pl.BlockSpec(memory_space=pltpu.MemorySpace.VMEM)

    y_bs = pl.pallas_call(
        kernel,
        out_shape=jax.ShapeDtypeStruct((B, S), jnp.float32),
        in_specs=[vmem] * 11,
        out_specs=vmem,
    )(
        x_tm,
        params["wih0_t"], params["whh0_t"], params["b0"],
        params["wih1_t"], params["whh1_t"], params["b1"],
        params["wout"], params["bout"],
        h0.astype(jnp.float32), c0.astype(jnp.float32),
    )

    # (B, S) -> (B, S, 1): contiguous bitcast reshape, no extra kernel.
    return y_bs.reshape(B, S, 1)


def make_params(key, hidden_dim, n_features=1):
    """Deterministic synthetic parameters with PyTorch LSTM/Linear shapes."""
    H = hidden_dim
    ks = jax.random.split(key, 11)
    bound = 1.0 / jnp.sqrt(jnp.float32(H))
    u = lambda k, shape: jax.random.uniform(
        k, shape, jnp.float32, minval=-bound, maxval=bound)

    # PyTorch shapes: weight_ih_l0 (4H, n_features), weight_hh_l0 (4H, H), ...
    w_ih0 = u(ks[0], (4 * H, n_features))
    w_hh0 = u(ks[1], (4 * H, H))
    b_ih0 = u(ks[2], (4 * H,))
    b_hh0 = u(ks[3], (4 * H,))
    w_ih1 = u(ks[4], (4 * H, H))
    w_hh1 = u(ks[5], (4 * H, H))
    b_ih1 = u(ks[6], (4 * H,))
    b_hh1 = u(ks[7], (4 * H,))
    w_out = u(ks[8], (1, H))
    b_out = u(ks[9], (1,))

    return {
        "wih0_t": w_ih0.T,                      # (1, 4H)
        "whh0_t": w_hh0.T,                      # (H, 4H)
        "b0": (b_ih0 + b_hh0).reshape(1, 4 * H),
        "wih1_t": w_ih1.T,                      # (H, 4H)
        "whh1_t": w_hh1.T,                      # (H, 4H)
        "b1": (b_ih1 + b_hh1).reshape(1, 4 * H),
        "wout": w_out,                          # (1, H)
        "bout": b_out.reshape(1, 1),            # (1, 1)
    }


def _reference_forward(x, hidden, params, *, seq_length, batch_size, hidden_dim):
    """Pure-JAX reference (lax.scan, un-fused weights) for correctness checking."""
    B, S, H = batch_size, seq_length, hidden_dim
    h0, c0 = hidden
    x_tm = jnp.transpose(x.reshape(B, S, 1), (1, 0, 2)).astype(jnp.float32)

    def cell(x_t, h, c, wih, whh, b):
        g = x_t @ wih + h @ whh + b
        i = jax.nn.sigmoid(g[:, 0 * H:1 * H])
        f = jax.nn.sigmoid(g[:, 1 * H:2 * H])
        gg = jnp.tanh(g[:, 2 * H:3 * H])
        o = jax.nn.sigmoid(g[:, 3 * H:4 * H])
        c_new = f * c + i * gg
        return o * jnp.tanh(c_new), c_new

    def step(carry, x_t):
        (ha, ca, hb, cb) = carry
        ha, ca = cell(x_t, ha, ca, params["wih0_t"], params["whh0_t"], params["b0"])
        hb, cb = cell(ha, hb, cb, params["wih1_t"], params["whh1_t"], params["b1"])
        y_t = hb @ params["wout"].T + params["bout"]
        return (ha, ca, hb, cb), y_t

    init = (h0[0], c0[0], h0[1], c0[1])
    _, y_tm = lax.scan(step, init, x_tm)
    return jnp.transpose(y_tm, (1, 0, 2))


if __name__ == "__main__":
    # Small shapes consistent with the module's forward.
    batch_size = 2
    seq_length = 8
    hidden_dim = 32
    n_features = 1
    num_layers = 2

    key = jax.random.PRNGKey(0)
    k_x, k_p = jax.random.split(key)

    params = make_params(k_p, hidden_dim, n_features)

    # Input: forward does x.view(batch, seq, 1); supply (B, S, 1).
    x = jax.random.normal(k_x, (batch_size, seq_length, 1), jnp.float32)

    # init_hidden(): zeros of shape (num_layers, batch, hidden).
    h0 = jnp.zeros((num_layers, batch_size, hidden_dim), jnp.float32)
    c0 = jnp.zeros((num_layers, batch_size, hidden_dim), jnp.float32)

    y = generator_forward(
        x, (h0, c0), params,
        seq_length=seq_length, batch_size=batch_size, hidden_dim=hidden_dim)
    y = jax.block_until_ready(y)

    y_ref = _reference_forward(
        x, (h0, c0), params,
        seq_length=seq_length, batch_size=batch_size, hidden_dim=hidden_dim)

    assert y.shape == (batch_size, seq_length, 1)
    assert jnp.allclose(y, y_ref, atol=1e-5, rtol=1e-5)

    print("KERNEL_OK")
</pallas_src>

<mosaic_0001>
module attributes {stable_mosaic.version = 11 : i64} {
  func.func @_generator_kernel(%arg0: memref<8x2x1xf32, #tpu.memory_space<vmem>>, %arg1: memref<1x128xf32, #tpu.memory_space<vmem>>, %arg2: memref<32x128xf32, #tpu.memory_space<vmem>>, %arg3: memref<1x128xf32, #tpu.memory_space<vmem>>, %arg4: memref<32x128xf32, #tpu.memory_space<vmem>>, %arg5: memref<32x128xf32, #tpu.memory_space<vmem>>, %arg6: memref<1x128xf32, #tpu.memory_space<vmem>>, %arg7: memref<1x32xf32, #tpu.memory_space<vmem>>, %arg8: memref<1x1xf32, #tpu.memory_space<vmem>>, %arg9: memref<2x2x32xf32, #tpu.memory_space<vmem>>, %arg10: memref<2x2x32xf32, #tpu.memory_space<vmem>>, %arg11: memref<2x8xf32, #tpu.memory_space<vmem>>) attributes {dimension_semantics = [], scalar_prefetch = 0 : i64, scratch_operands = 0 : i64, tpu.core_type = #tpu.core_type<tc>} {
    %c0 = arith.constant 0 : index
    %c0_0 = arith.constant 0 : index
    %0 = vector.load %arg1[%c0, %c0_0] : memref<1x128xf32, #tpu.memory_space<vmem>>, vector<1x128xf32>
    %c0_1 = arith.constant 0 : index
    %c0_2 = arith.constant 0 : index
    %1 = vector.load %arg2[%c0_1, %c0_2] : memref<32x128xf32, #tpu.memory_space<vmem>>, vector<32x128xf32>
    %c0_3 = arith.constant 0 : index
    %c0_4 = arith.constant 0 : index
    %2 = vector.load %arg4[%c0_3, %c0_4] : memref<32x128xf32, #tpu.memory_space<vmem>>, vector<32x128xf32>
    %c0_5 = arith.constant 0 : index
    %c0_6 = arith.constant 0 : index
    %3 = vector.load %arg5[%c0_5, %c0_6] : memref<32x128xf32, #tpu.memory_space<vmem>>, vector<32x128xf32>
    %c0_7 = arith.constant 0 : index
    %c0_8 = arith.constant 0 : index
    %4 = vector.load %arg7[%c0_7, %c0_8] : memref<1x32xf32, #tpu.memory_space<vmem>>, vector<1x32xf32>
    %c0_9 = arith.constant 0 : index
    %c0_10 = arith.constant 0 : index
    %5 = vector.load %arg3[%c0_9, %c0_10] : memref<1x128xf32, #tpu.memory_space<vmem>>, vector<1x128xf32>
    %6 = vector.shape_cast %5 : vector<1x128xf32> to vector<1x128xf32>
    %7 = vector.broadcast %6 : vector<1x128xf32> to vector<2x128xf32>
    %c0_11 = arith.constant 0 : index
    %c0_12 = arith.constant 0 : index
    %8 = vector.load %arg6[%c0_11, %c0_12] : memref<1x128xf32, #tpu.memory_space<vmem>>, vector<1x128xf32>
    %9 = vector.shape_cast %8 : vector<1x128xf32> to vector<1x128xf32>
    %10 = vector.broadcast %9 : vector<1x128xf32> to vector<2x128xf32>
    %11 = tpu.iota {dimensions = array<i32: 1>} : vector<2x8xi32>
    %c0_13 = arith.constant 0 : index
    %c0_14 = arith.constant 0 : index
    %c0_15 = arith.constant 0 : index
    %12 = vector.load %arg9[%c0_13, %c0_14, %c0_15] : memref<2x2x32xf32, #tpu.memory_space<vmem>>, vector<1x2x32xf32>
    %13 = vector.shape_cast %12 : vector<1x2x32xf32> to vector<2x32xf32>
    %c0_16 = arith.constant 0 : index
    %c0_17 = arith.constant 0 : index
    %c0_18 = arith.constant 0 : index
    %14 = vector.load %arg10[%c0_16, %c0_17, %c0_18] : memref<2x2x32xf32, #tpu.memory_space<vmem>>, vector<1x2x32xf32>
    %15 = vector.shape_cast %14 : vector<1x2x32xf32> to vector<2x32xf32>
    %c1 = arith.constant 1 : index
    %c0_19 = arith.constant 0 : index
    %c0_20 = arith.constant 0 : index
    %16 = vector.load %arg9[%c1, %c0_19, %c0_20] : memref<2x2x32xf32, #tpu.memory_space<vmem>>, vector<1x2x32xf32>
    %17 = vector.shape_cast %16 : vector<1x2x32xf32> to vector<2x32xf32>
    %c1_21 = arith.constant 1 : index
    %c0_22 = arith.constant 0 : index
    %c0_23 = arith.constant 0 : index
    %18 = vector.load %arg10[%c1_21, %c0_22, %c0_23] : memref<2x2x32xf32, #tpu.memory_space<vmem>>, vector<1x2x32xf32>
    %19 = vector.shape_cast %18 : vector<1x2x32xf32> to vector<2x32xf32>
    %cst = arith.constant 0.000000e+00 : f32
    %20 = vector.broadcast %cst : f32 to vector<2x8xf32>
    %c0_i32 = arith.constant 0 : i32
    %cst_24 = arith.constant dense<0.000000e+00> : vector<2x128xf32>
    %21 = tpu.matmul %17, %3, %cst_24 {dimension_numbers = #tpu.dot_dimension_numbers<[1], [0], [0], [1], [0, 0, 1, 1], [], []>} : vector<2x32xf32>, vector<32x128xf32>, vector<2x128xf32> -> vector<2x128xf32>
    %22 = arith.addf %21, %10 : vector<2x128xf32>
    %23 = arith.index_cast %c0_i32 : i32 to index
    %c0_25 = arith.constant 0 : index
    %c0_26 = arith.constant 0 : index
    %24 = vector.load %arg0[%23, %c0_25, %c0_26] : memref<8x2x1xf32, #tpu.memory_space<vmem>>, vector<1x2x1xf32>
    %25 = vector.shape_cast %24 : vector<1x2x1xf32> to vector<2x1xf32>
    %26 = vector.broadcast %25 : vector<2x1xf32> to vector<2x128xf32>
    %27 = vector.broadcast %0 : vector<1x128xf32> to vector<2x128xf32>
    %28 = arith.mulf %26, %27 : vector<2x128xf32>
    %29 = arith.addf %28, %7 : vector<2x128xf32>
    %cst_27 = arith.constant dense<0.000000e+00> : vector<2x128xf32>
    %30 = tpu.matmul %13, %1, %cst_27 {dimension_numbers = #tpu.dot_dimension_numbers<[1], [0], [0], [1], [0, 0, 1, 1], [], []>} : vector<2x32xf32>, vector<32x128xf32>, vector<2x128xf32> -> vector<2x128xf32>
    %31 = arith.addf %29, %30 : vector<2x128xf32>
    %32 = arith.negf %31 : vector<2x128xf32>
    %33 = math.exp %32 : vector<2x128xf32>
    %cst_28 = arith.constant 1.000000e+00 : f32
    %34 = vector.broadcast %cst_28 : f32 to vector<2x128xf32>
    %35 = arith.addf %34, %33 : vector<2x128xf32>
    %36 = arith.divf %34, %35 : vector<2x128xf32>
    %37 = vector.extract_strided_slice %36 {offsets = [0, 0], sizes = [2, 32], strides = [1, 1]} : vector<2x128xf32> to vector<2x32xf32>
    %38 = vector.extract_strided_slice %36 {offsets = [0, 32], sizes = [2, 32], strides = [1, 1]} : vector<2x128xf32> to vector<2x32xf32>
    %39 = vector.extract_strided_slice %36 {offsets = [0, 96], sizes = [2, 32], strides = [1, 1]} : vector<2x128xf32> to vector<2x32xf32>
    %40 = vector.extract_strided_slice %31 {offsets = [0, 64], sizes = [2, 32], strides = [1, 1]} : vector<2x128xf32> to vector<2x32xf32>
    %41 = math.tanh %40 : vector<2x32xf32>
    %42 = arith.mulf %38, %15 : vector<2x32xf32>
    %43 = arith.mulf %37, %41 : vector<2x32xf32>
    %44 = arith.addf %42, %43 : vector<2x32xf32>
    %45 = math.tanh %44 : vector<2x32xf32>
    %46 = arith.mulf %39, %45 : vector<2x32xf32>
    %cst_29 = arith.constant dense<0.000000e+00> : vector<2x128xf32>
    %47 = tpu.matmul %46, %2, %cst_29 {dimension_numbers = #tpu.dot_dimension_numbers<[1], [0], [0], [1], [0, 0, 1, 1], [], []>} : vector<2x32xf32>, vector<32x128xf32>, vector<2x128xf32> -> vector<2x128xf32>
    %48 = arith.addf %22, %47 : vector<2x128xf32>
    %49 = arith.negf %48 : vector<2x128xf32>
    %50 = math.exp %49 : vector<2x128xf32>
    %cst_30 = arith.constant 1.000000e+00 : f32
    %51 = vector.broadcast %cst_30 : f32 to vector<2x128xf32>
    %52 = arith.addf %51, %50 : vector<2x128xf32>
    %53 = arith.divf %51, %52 : vector<2x128xf32>
    %54 = vector.extract_strided_slice %53 {offsets = [0, 0], sizes = [2, 32], strides = [1, 1]} : vector<2x128xf32> to vector<2x32xf32>
    %55 = vector.extract_strided_slice %53 {offsets = [0, 32], sizes = [2, 32], strides = [1, 1]} : vector<2x128xf32> to vector<2x32xf32>
    %56 = vector.extract_strided_slice %53 {offsets = [0, 96], sizes = [2, 32], strides = [1, 1]} : vector<2x128xf32> to vector<2x32xf32>
    %57 = vector.extract_strided_slice %48 {offsets = [0, 64], sizes = [2, 32], strides = [1, 1]} : vector<2x128xf32> to vector<2x32xf32>
    %58 = math.tanh %57 : vector<2x32xf32>
    %59 = arith.mulf %55, %19 : vector<2x32xf32>
    %60 = arith.mulf %54, %58 : vector<2x32xf32>
    %61 = arith.addf %59, %60 : vector<2x32xf32>
    %62 = math.tanh %61 : vector<2x32xf32>
    %63 = arith.mulf %56, %62 : vector<2x32xf32>
    %64 = vector.broadcast %4 : vector<1x32xf32> to vector<2x32xf32>
    %65 = arith.mulf %63, %64 : vector<2x32xf32>
    %cst_31 = arith.constant dense<0.000000e+00> : vector<2xf32>
    %66 = vector.multi_reduction <add>, %65, %cst_31 [1] : vector<2x32xf32> to vector<2xf32>
    %67 = vector.shape_cast %66 : vector<2xf32> to vector<2x1xf32>
    %68 = vector.broadcast %c0_i32 : i32 to vector<2x8xi32>
    %69 = arith.cmpi eq, %11, %68 : vector<2x8xi32>
    %70 = vector.shape_cast %67 : vector<2x1xf32> to vector<2x1xf32>
    %71 = vector.broadcast %70 : vector<2x1xf32> to vector<2x8xf32>
    %72 = arith.select %69, %71, %20 : vector<2x8xi1>, vector<2x8xf32>
    %c1_i32 = arith.constant 1 : i32
    %cst_32 = arith.constant dense<0.000000e+00> : vector<2x128xf32>
    %73 = tpu.matmul %63, %3, %cst_32 {dimension_numbers = #tpu.dot_dimension_numbers<[1], [0], [0], [1], [0, 0, 1, 1], [], []>} : vector<2x32xf32>, vector<32x128xf32>, vector<2x128xf32> -> vector<2x128xf32>
    %74 = arith.addf %73, %10 : vector<2x128xf32>
    %75 = arith.index_cast %c1_i32 : i32 to index
    %c0_33 = arith.constant 0 : index
    %c0_34 = arith.constant 0 : index
    %76 = vector.load %arg0[%75, %c0_33, %c0_34] : memref<8x2x1xf32, #tpu.memory_space<vmem>>, vector<1x2x1xf32>
    %77 = vector.shape_cast %76 : vector<1x2x1xf32> to vector<2x1xf32>
    %78 = vector.broadcast %77 : vector<2x1xf32> to vector<2x128xf32>
    %79 = vector.broadcast %0 : vector<1x128xf32> to vector<2x128xf32>
    %80 = arith.mulf %78, %79 : vector<2x128xf32>
    %81 = arith.addf %80, %7 : vector<2x128xf32>
    %cst_35 = arith.constant dense<0.000000e+00> : vector<2x128xf32>
    %82 = tpu.matmul %46, %1, %cst_35 {dimension_numbers = #tpu.dot_dimension_numbers<[1], [0], [0], [1], [0, 0, 1, 1], [], []>} : vector<2x32xf32>, vector<32x128xf32>, vector<2x128xf32> -> vector<2x128xf32>
    %83 = arith.addf %81, %82 : vector<2x128xf32>
    %84 = arith.negf %83 : vector<2x128xf32>
    %85 = math.exp %84 : vector<2x128xf32>
    %cst_36 = arith.constant 1.000000e+00 : f32
    %86 = vector.broadcast %cst_36 : f32 to vector<2x128xf32>
    %87 = arith.addf %86, %85 : vector<2x128xf32>
    %88 = arith.divf %86, %87 : vector<2x128xf32>
    %89 = vector.extract_strided_slice %88 {offsets = [0, 0], sizes = [2, 32], strides = [1, 1]} : vector<2x128xf32> to vector<2x32xf32>
    %90 = vector.extract_strided_slice %88 {offsets = [0, 32], sizes = [2, 32], strides = [1, 1]} : vector<2x128xf32> to vector<2x32xf32>
    %91 = vector.extract_strided_slice %88 {offsets = [0, 96], sizes = [2, 32], strides = [1, 1]} : vector<2x128xf32> to vector<2x32xf32>
    %92 = vector.extract_strided_slice %83 {offsets = [0, 64], sizes = [2, 32], strides = [1, 1]} : vector<2x128xf32> to vector<2x32xf32>
    %93 = math.tanh %92 : vector<2x32xf32>
    %94 = arith.mulf %90, %44 : vector<2x32xf32>
    %95 = arith.mulf %89, %93 : vector<2x32xf32>
    %96 = arith.addf %94, %95 : vector<2x32xf32>
    %97 = math.tanh %96 : vector<2x32xf32>
    %98 = arith.mulf %91, %97 : vector<2x32xf32>
    %cst_37 = arith.constant dense<0.000000e+00> : vector<2x128xf32>
    %99 = tpu.matmul %98, %2, %cst_37 {dimension_numbers = #tpu.dot_dimension_numbers<[1], [0], [0], [1], [0, 0, 1, 1], [], []>} : vector<2x32xf32>, vector<32x128xf32>, vector<2x128xf32> -> vector<2x128xf32>
    %100 = arith.addf %74, %99 : vector<2x128xf32>
    %101 = arith.negf %100 : vector<2x128xf32>
    %102 = math.exp %101 : vector<2x128xf32>
    %cst_38 = arith.constant 1.000000e+00 : f32
    %103 = vector.broadcast %cst_38 : f32 to vector<2x128xf32>
    %104 = arith.addf %103, %102 : vector<2x128xf32>
    %105 = arith.divf %103, %104 : vector<2x128xf32>
    %106 = vector.extract_strided_slice %105 {offsets = [0, 0], sizes = [2, 32], strides = [1, 1]} : vector<2x128xf32> to vector<2x32xf32>
    %107 = vector.extract_strided_slice %105 {offsets = [0, 32], sizes = [2, 32], strides = [1, 1]} : vector<2x128xf32> to vector<2x32xf32>
    %108 = vector.extract_strided_slice %105 {offsets = [0, 96], sizes = [2, 32], strides = [1, 1]} : vector<2x128xf32> to vector<2x32xf32>
    %109 = vector.extract_strided_slice %100 {offsets = [0, 64], sizes = [2, 32], strides = [1, 1]} : vector<2x128xf32> to vector<2x32xf32>
    %110 = math.tanh %109 : vector<2x32xf32>
    %111 = arith.mulf %107, %61 : vector<2x32xf32>
    %112 = arith.mulf %106, %110 : vector<2x32xf32>
    %113 = arith.addf %111, %112 : vector<2x32xf32>
    %114 = math.tanh %113 : vector<2x32xf32>
    %115 = arith.mulf %108, %114 : vector<2x32xf32>
    %116 = vector.broadcast %4 : vector<1x32xf32> to vector<2x32xf32>
    %117 = arith.mulf %115, %116 : vector<2x32xf32>
    %cst_39 = arith.constant dense<0.000000e+00> : vector<2xf32>
    %118 = vector.multi_reduction <add>, %117, %cst_39 [1] : vector<2x32xf32> to vector<2xf32>
    %119 = vector.shape_cast %118 : vector<2xf32> to vector<2x1xf32>
    %120 = vector.broadcast %c1_i32 : i32 to vector<2x8xi32>
    %121 = arith.cmpi eq, %11, %120 : vector<2x8xi32>
    %122 = vector.shape_cast %119 : vector<2x1xf32> to vector<2x1xf32>
    %123 = vector.broadcast %122 : vector<2x1xf32> to vector<2x8xf32>
    %124 = arith.select %121, %123, %72 : vector<2x8xi1>, vector<2x8xf32>
    %c2_i32 = arith.constant 2 : i32
    %cst_40 = arith.constant dense<0.000000e+00> : vector<2x128xf32>
    %125 = tpu.matmul %115, %3, %cst_40 {dimension_numbers = #tpu.dot_dimension_numbers<[1], [0], [0], [1], [0, 0, 1, 1], [], []>} : vector<2x32xf32>, vector<32x128xf32>, vector<2x128xf32> -> vector<2x128xf32>
    %126 = arith.addf %125, %10 : vector<2x128xf32>
    %127 = arith.index_cast %c2_i32 : i32 to index
    %c0_41 = arith.constant 0 : index
    %c0_42 = arith.constant 0 : index
    %128 = vector.load %arg0[%127, %c0_41, %c0_42] : memref<8x2x1xf32, #tpu.memory_space<vmem>>, vector<1x2x1xf32>
    %129 = vector.shape_cast %128 : vector<1x2x1xf32> to vector<2x1xf32>
    %130 = vector.broadcast %129 : vector<2x1xf32> to vector<2x128xf32>
    %131 = vector.broadcast %0 : vector<1x128xf32> to vector<2x128xf32>
    %132 = arith.mulf %130, %131 : vector<2x128xf32>
    %133 = arith.addf %132, %7 : vector<2x128xf32>
    %cst_43 = arith.constant dense<0.000000e+00> : vector<2x128xf32>
    %134 = tpu.matmul %98, %1, %cst_43 {dimension_numbers = #tpu.dot_dimension_numbers<[1], [0], [0], [1], [0, 0, 1, 1], [], []>} : vector<2x32xf32>, vector<32x128xf32>, vector<2x128xf32> -> vector<2x128xf32>
    %135 = arith.addf %133, %134 : vector<2x128xf32>
    %136 = arith.negf %135 : vector<2x128xf32>
    %137 = math.exp %136 : vector<2x128xf32>
    %cst_44 = arith.constant 1.000000e+00 : f32
    %138 = vector.broadcast %cst_44 : f32 to vector<2x128xf32>
    %139 = arith.addf %138, %137 : vector<2x128xf32>
    %140 = arith.divf %138, %139 : vector<2x128xf32>
    %141 = vector.extract_strided_slice %140 {offsets = [0, 0], sizes = [2, 32], strides = [1, 1]} : vector<2x128xf32> to vector<2x32xf32>
    %142 = vector.extract_strided_slice %140 {offsets = [0, 32], sizes = [2, 32], strides = [1, 1]} : vector<2x128xf32> to vector<2x32xf32>
    %143 = vector.extract_strided_slice %140 {offsets = [0, 96], sizes = [2, 32], strides = [1, 1]} : vector<2x128xf32> to vector<2x32xf32>
    %144 = vector.extract_strided_slice %135 {offsets = [0, 64], sizes = [2, 32], strides = [1, 1]} : vector<2x128xf32> to vector<2x32xf32>
    %145 = math.tanh %144 : vector<2x32xf32>
    %146 = arith.mulf %142, %96 : vector<2x32xf32>
    %147 = arith.mulf %141, %145 : vector<2x32xf32>
    %148 = arith.addf %146, %147 : vector<2x32xf32>
    %149 = math.tanh %148 : vector<2x32xf32>
    %150 = arith.mulf %143, %149 : vector<2x32xf32>
    %cst_45 = arith.constant dense<0.000000e+00> : vector<2x128xf32>
    %151 = tpu.matmul %150, %2, %cst_45 {dimension_numbers = #tpu.dot_dimension_numbers<[1], [0], [0], [1], [0, 0, 1, 1], [], []>} : vector<2x32xf32>, vector<32x128xf32>, vector<2x128xf32> -> vector<2x128xf32>
    %152 = arith.addf %126, %151 : vector<2x128xf32>
    %153 = arith.negf %152 : vector<2x128xf32>
    %154 = math.exp %153 : vector<2x128xf32>
    %cst_46 = arith.constant 1.000000e+00 : f32
    %155 = vector.broadcast %cst_46 : f32 to vector<2x128xf32>
    %156 = arith.addf %155, %154 : vector<2x128xf32>
    %157 = arith.divf %155, %156 : vector<2x128xf32>
    %158 = vector.extract_strided_slice %157 {offsets = [0, 0], sizes = [2, 32], strides = [1, 1]} : vector<2x128xf32> to vector<2x32xf32>
    %159 = vector.extract_strided_slice %157 {offsets = [0, 32], sizes = [2, 32], strides = [1, 1]} : vector<2x128xf32> to vector<2x32xf32>
    %160 = vector.extract_strided_slice %157 {offsets = [0, 96], sizes = [2, 32], strides = [1, 1]} : vector<2x128xf32> to vector<2x32xf32>
    %161 = vector.extract_strided_slice %152 {offsets = [0, 64], sizes = [2, 32], strides = [1, 1]} : vector<2x128xf32> to vector<2x32xf32>
    %162 = math.tanh %161 : vector<2x32xf32>
    %163 = arith.mulf %159, %113 : vector<2x32xf32>
    %164 = arith.mulf %158, %162 : vector<2x32xf32>
    %165 = arith.addf %163, %164 : vector<2x32xf32>
    %166 = math.tanh %165 : vector<2x32xf32>
    %167 = arith.mulf %160, %166 : vector<2x32xf32>
    %168 = vector.broadcast %4 : vector<1x32xf32> to vector<2x32xf32>
    %169 = arith.mulf %167, %168 : vector<2x32xf32>
    %cst_47 = arith.constant dense<0.000000e+00> : vector<2xf32>
    %170 = vector.multi_reduction <add>, %169, %cst_47 [1] : vector<2x32xf32> to vector<2xf32>
    %171 = vector.shape_cast %170 : vector<2xf32> to vector<2x1xf32>
    %172 = vector.broadcast %c2_i32 : i32 to vector<2x8xi32>
    %173 = arith.cmpi eq, %11, %172 : vector<2x8xi32>
    %174 = vector.shape_cast %171 : vector<2x1xf32> to vector<2x1xf32>
    %175 = vector.broadcast %174 : vector<2x1xf32> to vector<2x8xf32>
    %176 = arith.select %173, %175, %124 : vector<2x8xi1>, vector<2x8xf32>
    %c3_i32 = arith.constant 3 : i32
    %cst_48 = arith.constant dense<0.000000e+00> : vector<2x128xf32>
    %177 = tpu.matmul %167, %3, %cst_48 {dimension_numbers = #tpu.dot_dimension_numbers<[1], [0], [0], [1], [0, 0, 1, 1], [], []>} : vector<2x32xf32>, vector<32x128xf32>, vector<2x128xf32> -> vector<2x128xf32>
    %178 = arith.addf %177, %10 : vector<2x128xf32>
    %179 = arith.index_cast %c3_i32 : i32 to index
    %c0_49 = arith.constant 0 : index
    %c0_50 = arith.constant 0 : index
    %180 = vector.load %arg0[%179, %c0_49, %c0_50] : memref<8x2x1xf32, #tpu.memory_space<vmem>>, vector<1x2x1xf32>
    %181 = vector.shape_cast %180 : vector<1x2x1xf32> to vector<2x1xf32>
    %182 = vector.broadcast %181 : vector<2x1xf32> to vector<2x128xf32>
    %183 = vector.broadcast %0 : vector<1x128xf32> to vector<2x128xf32>
    %184 = arith.mulf %182, %183 : vector<2x128xf32>
    %185 = arith.addf %184, %7 : vector<2x128xf32>
    %cst_51 = arith.constant dense<0.000000e+00> : vector<2x128xf32>
    %186 = tpu.matmul %150, %1, %cst_51 {dimension_numbers = #tpu.dot_dimension_numbers<[1], [0], [0], [1], [0, 0, 1, 1], [], []>} : vector<2x32xf32>, vector<32x128xf32>, vector<2x128xf32> -> vector<2x128xf32>
    %187 = arith.addf %185, %186 : vector<2x128xf32>
    %188 = arith.negf %187 : vector<2x128xf32>
    %189 = math.exp %188 : vector<2x128xf32>
    %cst_52 = arith.constant 1.000000e+00 : f32
    %190 = vector.broadcast %cst_52 : f32 to vector<2x128xf32>
    %191 = arith.addf %190, %189 : vector<2x128xf32>
    %192 = arith.divf %190, %191 : vector<2x128xf32>
    %193 = vector.extract_strided_slice %192 {offsets = [0, 0], sizes = [2, 32], strides = [1, 1]} : vector<2x128xf32> to vector<2x32xf32>
    %194 = vector.extract_strided_slice %192 {offsets = [0, 32], sizes = [2, 32], strides = [1, 1]} : vector<2x128xf32> to vector<2x32xf32>
    %195 = vector.extract_strided_slice %192 {offsets = [0, 96], sizes = [2, 32], strides = [1, 1]} : vector<2x128xf32> to vector<2x32xf32>
    %196 = vector.extract_strided_slice %187 {offsets = [0, 64], sizes = [2, 32], strides = [1, 1]} : vector<2x128xf32> to vector<2x32xf32>
    %197 = math.tanh %196 : vector<2x32xf32>
    %198 = arith.mulf %194, %148 : vector<2x32xf32>
    %199 = arith.mulf %193, %197 : vector<2x32xf32>
    %200 = arith.addf %198, %199 : vector<2x32xf32>
    %201 = math.tanh %200 : vector<2x32xf32>
    %202 = arith.mulf %195, %201 : vector<2x32xf32>
    %cst_53 = arith.constant dense<0.000000e+00> : vector<2x128xf32>
    %203 = tpu.matmul %202, %2, %cst_53 {dimension_numbers = #tpu.dot_dimension_numbers<[1], [0], [0], [1], [0, 0, 1, 1], [], []>} : vector<2x32xf32>, vector<32x128xf32>, vector<2x128xf32> -> vector<2x128xf32>
    %204 = arith.addf %178, %203 : vector<2x128xf32>
    %205 = arith.negf %204 : vector<2x128xf32>
    %206 = math.exp %205 : vector<2x128xf32>
    %cst_54 = arith.constant 1.000000e+00 : f32
    %207 = vector.broadcast %cst_54 : f32 to vector<2x128xf32>
    %208 = arith.addf %207, %206 : vector<2x128xf32>
    %209 = arith.divf %207, %208 : vector<2x128xf32>
    %210 = vector.extract_strided_slice %209 {offsets = [0, 0], sizes = [2, 32], strides = [1, 1]} : vector<2x128xf32> to vector<2x32xf32>
    %211 = vector.extract_strided_slice %209 {offsets = [0, 32], sizes = [2, 32], strides = [1, 1]} : vector<2x128xf32> to vector<2x32xf32>
    %212 = vector.extract_strided_slice %209 {offsets = [0, 96], sizes = [2, 32], strides = [1, 1]} : vector<2x128xf32> to vector<2x32xf32>
    %213 = vector.extract_strided_slice %204 {offsets = [0, 64], sizes = [2, 32], strides = [1, 1]} : vector<2x128xf32> to vector<2x32xf32>
    %214 = math.tanh %213 : vector<2x32xf32>
    %215 = arith.mulf %211, %165 : vector<2x32xf32>
    %216 = arith.mulf %210, %214 : vector<2x32xf32>
    %217 = arith.addf %215, %216 : vector<2x32xf32>
    %218 = math.tanh %217 : vector<2x32xf32>
    %219 = arith.mulf %212, %218 : vector<2x32xf32>
    %220 = vector.broadcast %4 : vector<1x32xf32> to vector<2x32xf32>
    %221 = arith.mulf %219, %220 : vector<2x32xf32>
    %cst_55 = arith.constant dense<0.000000e+00> : vector<2xf32>
    %222 = vector.multi_reduction <add>, %221, %cst_55 [1] : vector<2x32xf32> to vector<2xf32>
    %223 = vector.shape_cast %222 : vector<2xf32> to vector<2x1xf32>
    %224 = vector.broadcast %c3_i32 : i32 to vector<2x8xi32>
    %225 = arith.cmpi eq, %11, %224 : vector<2x8xi32>
    %226 = vector.shape_cast %223 : vector<2x1xf32> to vector<2x1xf32>
    %227 = vector.broadcast %226 : vector<2x1xf32> to vector<2x8xf32>
    %228 = arith.select %225, %227, %176 : vector<2x8xi1>, vector<2x8xf32>
    %c4_i32 = arith.constant 4 : i32
    %cst_56 = arith.constant dense<0.000000e+00> : vector<2x128xf32>
    %229 = tpu.matmul %219, %3, %cst_56 {dimension_numbers = #tpu.dot_dimension_numbers<[1], [0], [0], [1], [0, 0, 1, 1], [], []>} : vector<2x32xf32>, vector<32x128xf32>, vector<2x128xf32> -> vector<2x128xf32>
    %230 = arith.addf %229, %10 : vector<2x128xf32>
    %231 = arith.index_cast %c4_i32 : i32 to index
    %c0_57 = arith.constant 0 : index
    %c0_58 = arith.constant 0 : index
    %232 = vector.load %arg0[%231, %c0_57, %c0_58] : memref<8x2x1xf32, #tpu.memory_space<vmem>>, vector<1x2x1xf32>
    %233 = vector.shape_cast %232 : vector<1x2x1xf32> to vector<2x1xf32>
    %234 = vector.broadcast %233 : vector<2x1xf32> to vector<2x128xf32>
    %235 = vector.broadcast %0 : vector<1x128xf32> to vector<2x128xf32>
    %236 = arith.mulf %234, %235 : vector<2x128xf32>
    %237 = arith.addf %236, %7 : vector<2x128xf32>
    %cst_59 = arith.constant dense<0.000000e+00> : vector<2x128xf32>
    %238 = tpu.matmul %202, %1, %cst_59 {dimension_numbers = #tpu.dot_dimension_numbers<[1], [0], [0], [1], [0, 0, 1, 1], [], []>} : vector<2x32xf32>, vector<32x128xf32>, vector<2x128xf32> -> vector<2x128xf32>
    %239 = arith.addf %237, %238 : vector<2x128xf32>
    %240 = arith.negf %239 : vector<2x128xf32>
    %241 = math.exp %240 : vector<2x128xf32>
    %cst_60 = arith.constant 1.000000e+00 : f32
    %242 = vector.broadcast %cst_60 : f32 to vector<2x128xf32>
    %243 = arith.addf %242, %241 : vector<2x128xf32>
    %244 = arith.divf %242, %243 : vector<2x128xf32>
    %245 = vector.extract_strided_slice %244 {offsets = [0, 0], sizes = [2, 32], strides = [1, 1]} : vector<2x128xf32> to vector<2x32xf32>
    %246 = vector.extract_strided_slice %244 {offsets = [0, 32], sizes = [2, 32], strides = [1, 1]} : vector<2x128xf32> to vector<2x32xf32>
    %247 = vector.extract_strided_slice %244 {offsets = [0, 96], sizes = [2, 32], strides = [1, 1]} : vector<2x128xf32> to vector<2x32xf32>
    %248 = vector.extract_strided_slice %239 {offsets = [0, 64], sizes = [2, 32], strides = [1, 1]} : vector<2x128xf32> to vector<2x32xf32>
    %249 = math.tanh %248 : vector<2x32xf32>
    %250 = arith.mulf %246, %200 : vector<2x32xf32>
    %251 = arith.mulf %245, %249 : vector<2x32xf32>
    %252 = arith.addf %250, %251 : vector<2x32xf32>
    %253 = math.tanh %252 : vector<2x32xf32>
    %254 = arith.mulf %247, %253 : vector<2x32xf32>
    %cst_61 = arith.constant dense<0.000000e+00> : vector<2x128xf32>
    %255 = tpu.matmul %254, %2, %cst_61 {dimension_numbers = #tpu.dot_dimension_numbers<[1], [0], [0], [1], [0, 0, 1, 1], [], []>} : vector<2x32xf32>, vector<32x128xf32>, vector<2x128xf32> -> vector<2x128xf32>
    %256 = arith.addf %230, %255 : vector<2x128xf32>
    %257 = arith.negf %256 : vector<2x128xf32>
    %258 = math.exp %257 : vector<2x128xf32>
    %cst_62 = arith.constant 1.000000e+00 : f32
    %259 = vector.broadcast %cst_62 : f32 to vector<2x128xf32>
    %260 = arith.addf %259, %258 : vector<2x128xf32>
    %261 = arith.divf %259, %260 : vector<2x128xf32>
    %262 = vector.extract_strided_slice %261 {offsets = [0, 0], sizes = [2, 32], strides = [1, 1]} : vector<2x128xf32> to vector<2x32xf32>
    %263 = vector.extract_strided_slice %261 {offsets = [0, 32], sizes = [2, 32], strides = [1, 1]} : vector<2x128xf32> to vector<2x32xf32>
    %264 = vector.extract_strided_slice %261 {offsets = [0, 96], sizes = [2, 32], strides = [1, 1]} : vector<2x128xf32> to vector<2x32xf32>
    %265 = vector.extract_strided_slice %256 {offsets = [0, 64], sizes = [2, 32], strides = [1, 1]} : vector<2x128xf32> to vector<2x32xf32>
    %266 = math.tanh %265 : vector<2x32xf32>
    %267 = arith.mulf %263, %217 : vector<2x32xf32>
    %268 = arith.mulf %262, %266 : vector<2x32xf32>
    %269 = arith.addf %267, %268 : vector<2x32xf32>
    %270 = math.tanh %269 : vector<2x32xf32>
    %271 = arith.mulf %264, %270 : vector<2x32xf32>
    %272 = vector.broadcast %4 : vector<1x32xf32> to vector<2x32xf32>
    %273 = arith.mulf %271, %272 : vector<2x32xf32>
    %cst_63 = arith.constant dense<0.000000e+00> : vector<2xf32>
    %274 = vector.multi_reduction <add>, %273, %cst_63 [1] : vector<2x32xf32> to vector<2xf32>
    %275 = vector.shape_cast %274 : vector<2xf32> to vector<2x1xf32>
    %276 = vector.broadcast %c4_i32 : i32 to vector<2x8xi32>
    %277 = arith.cmpi eq, %11, %276 : vector<2x8xi32>
    %278 = vector.shape_cast %275 : vector<2x1xf32> to vector<2x1xf32>
    %279 = vector.broadcast %278 : vector<2x1xf32> to vector<2x8xf32>
    %280 = arith.select %277, %279, %228 : vector<2x8xi1>, vector<2x8xf32>
    %c5_i32 = arith.constant 5 : i32
    %cst_64 = arith.constant dense<0.000000e+00> : vector<2x128xf32>
    %281 = tpu.matmul %271, %3, %cst_64 {dimension_numbers = #tpu.dot_dimension_numbers<[1], [0], [0], [1], [0, 0, 1, 1], [], []>} : vector<2x32xf32>, vector<32x128xf32>, vector<2x128xf32> -> vector<2x128xf32>
    %282 = arith.addf %281, %10 : vector<2x128xf32>
    %283 = arith.index_cast %c5_i32 : i32 to index
    %c0_65 = arith.constant 0 : index
    %c0_66 = arith.constant 0 : index
    %284 = vector.load %arg0[%283, %c0_65, %c0_66] : memref<8x2x1xf32, #tpu.memory_space<vmem>>, vector<1x2x1xf32>
    %285 = vector.shape_cast %284 : vector<1x2x1xf32> to vector<2x1xf32>
    %286 = vector.broadcast %285 : vector<2x1xf32> to vector<2x128xf32>
    %287 = vector.broadcast %0 : vector<1x128xf32> to vector<2x128xf32>
    %288 = arith.mulf %286, %287 : vector<2x128xf32>
    %289 = arith.addf %288, %7 : vector<2x128xf32>
    %cst_67 = arith.constant dense<0.000000e+00> : vector<2x128xf32>
    %290 = tpu.matmul %254, %1, %cst_67 {dimension_numbers = #tpu.dot_dimension_numbers<[1], [0], [0], [1], [0, 0, 1, 1], [], []>} : vector<2x32xf32>, vector<32x128xf32>, vector<2x128xf32> -> vector<2x128xf32>
    %291 = arith.addf %289, %290 : vector<2x128xf32>
    %292 = arith.negf %291 : vector<2x128xf32>
    %293 = math.exp %292 : vector<2x128xf32>
    %cst_68 = arith.constant 1.000000e+00 : f32
    %294 = vector.broadcast %cst_68 : f32 to vector<2x128xf32>
    %295 = arith.addf %294, %293 : vector<2x128xf32>
    %296 = arith.divf %294, %295 : vector<2x128xf32>
    %297 = vector.extract_strided_slice %296 {offsets = [0, 0], sizes = [2, 32], strides = [1, 1]} : vector<2x128xf32> to vector<2x32xf32>
    %298 = vector.extract_strided_slice %296 {offsets = [0, 32], sizes = [2, 32], strides = [1, 1]} : vector<2x128xf32> to vector<2x32xf32>
    %299 = vector.extract_strided_slice %296 {offsets = [0, 96], sizes = [2, 32], strides = [1, 1]} : vector<2x128xf32> to vector<2x32xf32>
    %300 = vector.extract_strided_slice %291 {offsets = [0, 64], sizes = [2, 32], strides = [1, 1]} : vector<2x128xf32> to vector<2x32xf32>
    %301 = math.tanh %300 : vector<2x32xf32>
    %302 = arith.mulf %298, %252 : vector<2x32xf32>
    %303 = arith.mulf %297, %301 : vector<2x32xf32>
    %304 = arith.addf %302, %303 : vector<2x32xf32>
    %305 = math.tanh %304 : vector<2x32xf32>
    %306 = arith.mulf %299, %305 : vector<2x32xf32>
    %cst_69 = arith.constant dense<0.000000e+00> : vector<2x128xf32>
    %307 = tpu.matmul %306, %2, %cst_69 {dimension_numbers = #tpu.dot_dimension_numbers<[1], [0], [0], [1], [0, 0, 1, 1], [], []>} : vector<2x32xf32>, vector<32x128xf32>, vector<2x128xf32> -> vector<2x128xf32>
    %308 = arith.addf %282, %307 : vector<2x128xf32>
    %309 = arith.negf %308 : vector<2x128xf32>
    %310 = math.exp %309 : vector<2x128xf32>
    %cst_70 = arith.constant 1.000000e+00 : f32
    %311 = vector.broadcast %cst_70 : f32 to vector<2x128xf32>
    %312 = arith.addf %311, %310 : vector<2x128xf32>
    %313 = arith.divf %311, %312 : vector<2x128xf32>
    %314 = vector.extract_strided_slice %313 {offsets = [0, 0], sizes = [2, 32], strides = [1, 1]} : vector<2x128xf32> to vector<2x32xf32>
    %315 = vector.extract_strided_slice %313 {offsets = [0, 32], sizes = [2, 32], strides = [1, 1]} : vector<2x128xf32> to vector<2x32xf32>
    %316 = vector.extract_strided_slice %313 {offsets = [0, 96], sizes = [2, 32], strides = [1, 1]} : vector<2x128xf32> to vector<2x32xf32>
    %317 = vector.extract_strided_slice %308 {offsets = [0, 64], sizes = [2, 32], strides = [1, 1]} : vector<2x128xf32> to vector<2x32xf32>
    %318 = math.tanh %317 : vector<2x32xf32>
    %319 = arith.mulf %315, %269 : vector<2x32xf32>
    %320 = arith.mulf %314, %318 : vector<2x32xf32>
    %321 = arith.addf %319, %320 : vector<2x32xf32>
    %322 = math.tanh %321 : vector<2x32xf32>
    %323 = arith.mulf %316, %322 : vector<2x32xf32>
    %324 = vector.broadcast %4 : vector<1x32xf32> to vector<2x32xf32>
    %325 = arith.mulf %323, %324 : vector<2x32xf32>
    %cst_71 = arith.constant dense<0.000000e+00> : vector<2xf32>
    %326 = vector.multi_reduction <add>, %325, %cst_71 [1] : vector<2x32xf32> to vector<2xf32>
    %327 = vector.shape_cast %326 : vector<2xf32> to vector<2x1xf32>
    %328 = vector.broadcast %c5_i32 : i32 to vector<2x8xi32>
    %329 = arith.cmpi eq, %11, %328 : vector<2x8xi32>
    %330 = vector.shape_cast %327 : vector<2x1xf32> to vector<2x1xf32>
    %331 = vector.broadcast %330 : vector<2x1xf32> to vector<2x8xf32>
    %332 = arith.select %329, %331, %280 : vector<2x8xi1>, vector<2x8xf32>
    %c6_i32 = arith.constant 6 : i32
    %cst_72 = arith.constant dense<0.000000e+00> : vector<2x128xf32>
    %333 = tpu.matmul %323, %3, %cst_72 {dimension_numbers = #tpu.dot_dimension_numbers<[1], [0], [0], [1], [0, 0, 1, 1], [], []>} : vector<2x32xf32>, vector<32x128xf32>, vector<2x128xf32> -> vector<2x128xf32>
    %334 = arith.addf %333, %10 : vector<2x128xf32>
    %335 = arith.index_cast %c6_i32 : i32 to index
    %c0_73 = arith.constant 0 : index
    %c0_74 = arith.constant 0 : index
    %336 = vector.load %arg0[%335, %c0_73, %c0_74] : memref<8x2x1xf32, #tpu.memory_space<vmem>>, vector<1x2x1xf32>
    %337 = vector.shape_cast %336 : vector<1x2x1xf32> to vector<2x1xf32>
    %338 = vector.broadcast %337 : vector<2x1xf32> to vector<2x128xf32>
    %339 = vector.broadcast %0 : vector<1x128xf32> to vector<2x128xf32>
    %340 = arith.mulf %338, %339 : vector<2x128xf32>
    %341 = arith.addf %340, %7 : vector<2x128xf32>
    %cst_75 = arith.constant dense<0.000000e+00> : vector<2x128xf32>
    %342 = tpu.matmul %306, %1, %cst_75 {dimension_numbers = #tpu.dot_dimension_numbers<[1], [0], [0], [1], [0, 0, 1, 1], [], []>} : vector<2x32xf32>, vector<32x128xf32>, vector<2x128xf32> -> vector<2x128xf32>
    %343 = arith.addf %341, %342 : vector<2x128xf32>
    %344 = arith.negf %343 : vector<2x128xf32>
    %345 = math.exp %344 : vector<2x128xf32>
    %cst_76 = arith.constant 1.000000e+00 : f32
    %346 = vector.broadcast %cst_76 : f32 to vector<2x128xf32>
    %347 = arith.addf %346, %345 : vector<2x128xf32>
    %348 = arith.divf %346, %347 : vector<2x128xf32>
    %349 = vector.extract_strided_slice %348 {offsets = [0, 0], sizes = [2, 32], strides = [1, 1]} : vector<2x128xf32> to vector<2x32xf32>
    %350 = vector.extract_strided_slice %348 {offsets = [0, 32], sizes = [2, 32], strides = [1, 1]} : vector<2x128xf32> to vector<2x32xf32>
    %351 = vector.extract_strided_slice %348 {offsets = [0, 96], sizes = [2, 32], strides = [1, 1]} : vector<2x128xf32> to vector<2x32xf32>
    %352 = vector.extract_strided_slice %343 {offsets = [0, 64], sizes = [2, 32], strides = [1, 1]} : vector<2x128xf32> to vector<2x32xf32>
    %353 = math.tanh %352 : vector<2x32xf32>
    %354 = arith.mulf %350, %304 : vector<2x32xf32>
    %355 = arith.mulf %349, %353 : vector<2x32xf32>
    %356 = arith.addf %354, %355 : vector<2x32xf32>
    %357 = math.tanh %356 : vector<2x32xf32>
    %358 = arith.mulf %351, %357 : vector<2x32xf32>
    %cst_77 = arith.constant dense<0.000000e+00> : vector<2x128xf32>
    %359 = tpu.matmul %358, %2, %cst_77 {dimension_numbers = #tpu.dot_dimension_numbers<[1], [0], [0], [1], [0, 0, 1, 1], [], []>} : vector<2x32xf32>, vector<32x128xf32>, vector<2x128xf32> -> vector<2x128xf32>
    %360 = arith.addf %334, %359 : vector<2x128xf32>
    %361 = arith.negf %360 : vector<2x128xf32>
    %362 = math.exp %361 : vector<2x128xf32>
    %cst_78 = arith.constant 1.000000e+00 : f32
    %363 = vector.broadcast %cst_78 : f32 to vector<2x128xf32>
    %364 = arith.addf %363, %362 : vector<2x128xf32>
    %365 = arith.divf %363, %364 : vector<2x128xf32>
    %366 = vector.extract_strided_slice %365 {offsets = [0, 0], sizes = [2, 32], strides = [1, 1]} : vector<2x128xf32> to vector<2x32xf32>
    %367 = vector.extract_strided_slice %365 {offsets = [0, 32], sizes = [2, 32], strides = [1, 1]} : vector<2x128xf32> to vector<2x32xf32>
    %368 = vector.extract_strided_slice %365 {offsets = [0, 96], sizes = [2, 32], strides = [1, 1]} : vector<2x128xf32> to vector<2x32xf32>
    %369 = vector.extract_strided_slice %360 {offsets = [0, 64], sizes = [2, 32], strides = [1, 1]} : vector<2x128xf32> to vector<2x32xf32>
    %370 = math.tanh %369 : vector<2x32xf32>
    %371 = arith.mulf %367, %321 : vector<2x32xf32>
    %372 = arith.mulf %366, %370 : vector<2x32xf32>
    %373 = arith.addf %371, %372 : vector<2x32xf32>
    %374 = math.tanh %373 : vector<2x32xf32>
    %375 = arith.mulf %368, %374 : vector<2x32xf32>
    %376 = vector.broadcast %4 : vector<1x32xf32> to vector<2x32xf32>
    %377 = arith.mulf %375, %376 : vector<2x32xf32>
    %cst_79 = arith.constant dense<0.000000e+00> : vector<2xf32>
    %378 = vector.multi_reduction <add>, %377, %cst_79 [1] : vector<2x32xf32> to vector<2xf32>
    %379 = vector.shape_cast %378 : vector<2xf32> to vector<2x1xf32>
    %380 = vector.broadcast %c6_i32 : i32 to vector<2x8xi32>
    %381 = arith.cmpi eq, %11, %380 : vector<2x8xi32>
    %382 = vector.shape_cast %379 : vector<2x1xf32> to vector<2x1xf32>
    %383 = vector.broadcast %382 : vector<2x1xf32> to vector<2x8xf32>
    %384 = arith.select %381, %383, %332 : vector<2x8xi1>, vector<2x8xf32>
    %c7_i32 = arith.constant 7 : i32
    %cst_80 = arith.constant dense<0.000000e+00> : vector<2x128xf32>
    %385 = tpu.matmul %375, %3, %cst_80 {dimension_numbers = #tpu.dot_dimension_numbers<[1], [0], [0], [1], [0, 0, 1, 1], [], []>} : vector<2x32xf32>, vector<32x128xf32>, vector<2x128xf32> -> vector<2x128xf32>
    %386 = arith.addf %385, %10 : vector<2x128xf32>
    %387 = arith.index_cast %c7_i32 : i32 to index
    %c0_81 = arith.constant 0 : index
    %c0_82 = arith.constant 0 : index
    %388 = vector.load %arg0[%387, %c0_81, %c0_82] : memref<8x2x1xf32, #tpu.memory_space<vmem>>, vector<1x2x1xf32>
    %389 = vector.shape_cast %388 : vector<1x2x1xf32> to vector<2x1xf32>
    %390 = vector.broadcast %389 : vector<2x1xf32> to vector<2x128xf32>
    %391 = vector.broadcast %0 : vector<1x128xf32> to vector<2x128xf32>
    %392 = arith.mulf %390, %391 : vector<2x128xf32>
    %393 = arith.addf %392, %7 : vector<2x128xf32>
    %cst_83 = arith.constant dense<0.000000e+00> : vector<2x128xf32>
    %394 = tpu.matmul %358, %1, %cst_83 {dimension_numbers = #tpu.dot_dimension_numbers<[1], [0], [0], [1], [0, 0, 1, 1], [], []>} : vector<2x32xf32>, vector<32x128xf32>, vector<2x128xf32> -> vector<2x128xf32>
    %395 = arith.addf %393, %394 : vector<2x128xf32>
    %396 = arith.negf %395 : vector<2x128xf32>
    %397 = math.exp %396 : vector<2x128xf32>
    %cst_84 = arith.constant 1.000000e+00 : f32
    %398 = vector.broadcast %cst_84 : f32 to vector<2x128xf32>
    %399 = arith.addf %398, %397 : vector<2x128xf32>
    %400 = arith.divf %398, %399 : vector<2x128xf32>
    %401 = vector.extract_strided_slice %400 {offsets = [0, 0], sizes = [2, 32], strides = [1, 1]} : vector<2x128xf32> to vector<2x32xf32>
    %402 = vector.extract_strided_slice %400 {offsets = [0, 32], sizes = [2, 32], strides = [1, 1]} : vector<2x128xf32> to vector<2x32xf32>
    %403 = vector.extract_strided_slice %400 {offsets = [0, 96], sizes = [2, 32], strides = [1, 1]} : vector<2x128xf32> to vector<2x32xf32>
    %404 = vector.extract_strided_slice %395 {offsets = [0, 64], sizes = [2, 32], strides = [1, 1]} : vector<2x128xf32> to vector<2x32xf32>
    %405 = math.tanh %404 : vector<2x32xf32>
    %406 = arith.mulf %402, %356 : vector<2x32xf32>
    %407 = arith.mulf %401, %405 : vector<2x32xf32>
    %408 = arith.addf %406, %407 : vector<2x32xf32>
    %409 = math.tanh %408 : vector<2x32xf32>
    %410 = arith.mulf %403, %409 : vector<2x32xf32>
    %cst_85 = arith.constant dense<0.000000e+00> : vector<2x128xf32>
    %411 = tpu.matmul %410, %2, %cst_85 {dimension_numbers = #tpu.dot_dimension_numbers<[1], [0], [0], [1], [0, 0, 1, 1], [], []>} : vector<2x32xf32>, vector<32x128xf32>, vector<2x128xf32> -> vector<2x128xf32>
    %412 = arith.addf %386, %411 : vector<2x128xf32>
    %413 = arith.negf %412 : vector<2x128xf32>
    %414 = math.exp %413 : vector<2x128xf32>
    %cst_86 = arith.constant 1.000000e+00 : f32
    %415 = vector.broadcast %cst_86 : f32 to vector<2x128xf32>
    %416 = arith.addf %415, %414 : vector<2x128xf32>
    %417 = arith.divf %415, %416 : vector<2x128xf32>
    %418 = vector.extract_strided_slice %417 {offsets = [0, 0], sizes = [2, 32], strides = [1, 1]} : vector<2x128xf32> to vector<2x32xf32>
    %419 = vector.extract_strided_slice %417 {offsets = [0, 32], sizes = [2, 32], strides = [1, 1]} : vector<2x128xf32> to vector<2x32xf32>
    %420 = vector.extract_strided_slice %417 {offsets = [0, 96], sizes = [2, 32], strides = [1, 1]} : vector<2x128xf32> to vector<2x32xf32>
    %421 = vector.extract_strided_slice %412 {offsets = [0, 64], sizes = [2, 32], strides = [1, 1]} : vector<2x128xf32> to vector<2x32xf32>
    %422 = math.tanh %421 : vector<2x32xf32>
    %423 = arith.mulf %419, %373 : vector<2x32xf32>
    %424 = arith.mulf %418, %422 : vector<2x32xf32>
    %425 = arith.addf %423, %424 : vector<2x32xf32>
    %426 = math.tanh %425 : vector<2x32xf32>
    %427 = arith.mulf %420, %426 : vector<2x32xf32>
    %428 = vector.broadcast %4 : vector<1x32xf32> to vector<2x32xf32>
    %429 = arith.mulf %427, %428 : vector<2x32xf32>
    %cst_87 = arith.constant dense<0.000000e+00> : vector<2xf32>
    %430 = vector.multi_reduction <add>, %429, %cst_87 [1] : vector<2x32xf32> to vector<2xf32>
    %431 = vector.shape_cast %430 : vector<2xf32> to vector<2x1xf32>
    %432 = vector.broadcast %c7_i32 : i32 to vector<2x8xi32>
    %433 = arith.cmpi eq, %11, %432 : vector<2x8xi32>
    %434 = vector.shape_cast %431 : vector<2x1xf32> to vector<2x1xf32>
    %435 = vector.broadcast %434 : vector<2x1xf32> to vector<2x8xf32>
    %436 = arith.select %433, %435, %384 : vector<2x8xi1>, vector<2x8xf32>
    %c8_i32 = arith.constant 8 : i32
    %c0_88 = arith.constant 0 : index
    %c0_89 = arith.constant 0 : index
    %437 = vector.load %arg8[%c0_88, %c0_89] : memref<1x1xf32, #tpu.memory_space<vmem>>, vector<1x1xf32>
    %438 = vector.broadcast %437 : vector<1x1xf32> to vector<2x8xf32>
    %439 = arith.addf %436, %438 : vector<2x8xf32>
    %c0_90 = arith.constant 0 : index
    %c0_91 = arith.constant 0 : index
    %440 = vector.load %arg11[%c0_90, %c0_91] : memref<2x8xf32, #tpu.memory_space<vmem>>, vector<2x8xf32>
    tpu.vector_store %arg11[%c0_90, %c0_91], %439 {strides = array<i32>} : memref<2x8xf32, #tpu.memory_space<vmem>>, vector<2x8xf32>,
    return
  }
}

</mosaic_0001>

<llo_original>
// kernel: tpu_custom_call.1
$region0: #{tpu_custom_call.1}
  #allocation0 [shape = 'u32[]', space=smem, size = 0x4, offset = 0x4, fixed_abs, tag = 'smem constant byte address 0x4 - core index']
  #allocation1 [shape = 'u32[144,128]{1,0:T(1,128)}', space=vmem, size = 0x12000, scoped, tag = 'internal scratch']
  #allocation2 [shape = 'f32[1,1]{1,0:T(1,128)S(1)}', space=vmem, size = 0x200, scoped, tag = 'scoped memory for tpu_custom_call.1']
  %s0 = inlined_call_operand.vmem [shape: f32[8,2,1], index: 0, kind: input, shape index: {}]
  %s1 = inlined_call_operand.hbm [shape: f32[1,128], index: 1, kind: input, shape index: {}]
  %s2 = inlined_call_operand.hbm [shape: f32[32,128], index: 2, kind: input, shape index: {}]
  %s3 = inlined_call_operand.hbm [shape: f32[1,128], index: 3, kind: input, shape index: {}]
  %s4 = inlined_call_operand.vmem [shape: f32[32,128], index: 4, kind: input, shape index: {}]
  %s5 = inlined_call_operand.hbm [shape: f32[32,128], index: 5, kind: input, shape index: {}]
  %s6 = inlined_call_operand.vmem [shape: f32[1,128], index: 6, kind: input, shape index: {}]
  %s7 = inlined_call_operand.vmem [shape: f32[1,32], index: 7, kind: input, shape index: {}]
  %s8 = inlined_call_operand.<no memory space> [shape: f32[1,1], index: 8, kind: input, shape index: {}]
  %s9 = inlined_call_operand.vmem [shape: f32[2,2,32], index: 9, kind: input, shape index: {}]
  %s10 = inlined_call_operand.vmem [shape: f32[2,2,32], index: 10, kind: input, shape index: {}]
  %s11 = inlined_call_operand.hbm [shape: f32[2,8], index: 11, kind: output, shape index: {}]
  %s12 = sld [smem:[#allocation0]]
  $region70: #{tpu_custom_call.1} parent=0
    _
  %s14 = ssub.s32 1, %s12
  %s15 = scalar_select 0, %s14, %s12
  %v16 = vstv %s8
  %17 = vst [vmem:[#allocation2] sm:$0x1] %v16
  $region1: #{tpu_custom_call.1} parent=0
    #allocation3 [shape = 'u8[512]{0}', space=vmem, size = 0x400, scoped, tag = 'input window, operand 1, single buffered']
    #allocation4 [shape = 's32[1]{0}', space=sflag, size = 0x4, scoped, tag = 'scoped memory for tpu_custom_call.1']
    #allocation5 [shape = 's32[1]{0}', space=sflag, size = 0x4, scoped, tag = 'scoped memory for tpu_custom_call.1']
    #allocation6 [shape = 'u8[16384]{0}', space=vmem, size = 0x4000, scoped, tag = 'input window, operand 2, single buffered']
    #allocation7 [shape = 's32[1]{0}', space=sflag, size = 0x4, scoped, tag = 'scoped memory for tpu_custom_call.1']
    #allocation8 [shape = 'u8[512]{0}', space=vmem, size = 0x400, scoped, tag = 'input window, operand 3, single buffered']
    #allocation9 [shape = 'u8[16384]{0}', space=vmem, size = 0x4000, scoped, tag = 'input window, operand 5, single buffered']
    #allocation10 [shape = 's32[1]{0}', space=sflag, size = 0x4, scoped, tag = 'scoped memory for tpu_custom_call.1']
    #allocation11 [shape = 'u8[1024]{0}', space=vmem, size = 0x400, scoped, tag = 'output window, operand 0, single buffered']
    %18 = vsyncpa [#allocation4], 0
    %19 = vsyncpa [#allocation7], 0
    %20 = vsyncpa [#allocation10], 0
    %21 = vsyncpa [#allocation5], 0
    // Predicated region
    $region2: #{tpu_custom_call.1} parent=1 // pred_check
      _
    $region3: #{tpu_custom_call.1} parent=1 // pred_check_branch
      %23 = sbr.rel (0) target = $region5
    $region4: #{tpu_custom_call.1} parent=1 // pred_region
      _
    $region5: #{tpu_custom_call.1} parent=1 // pred_fallthru
      _
    // Predicated region
    $region6: #{tpu_custom_call.1} parent=1 // pred_check
      _
    $region7: #{tpu_custom_call.1} parent=1 // pred_check_branch
      %25 = sbr.rel (0) target = $region9
    $region8: #{tpu_custom_call.1} parent=1 // pred_region
      %s27 = ssub.s32 16, 16
      %28 = vsyncadd [#allocation4], %s27
      %s30 = sshll.u32 [#allocation3], 4
      %s31 = int_to_ptr.vmem [resolvable:$true] %s30
      %33 = dma.hbm_to_vmem [thread:$0]  %s1, 16, %s31, [#allocation4]
    $region9: #{tpu_custom_call.1} parent=1 // pred_fallthru
      _
    // Predicated region
    $region10: #{tpu_custom_call.1} parent=1 // pred_check
      _
    $region11: #{tpu_custom_call.1} parent=1 // pred_check_branch
      %35 = sbr.rel (0) target = $region13
    $region12: #{tpu_custom_call.1} parent=1 // pred_region
      %s37 = ssub.s32 512, 512
      %38 = vsyncadd [#allocation7], %s37
      %s39 = sshll.u32 [#allocation6], 4
      %s40 = int_to_ptr.vmem [resolvable:$true] %s39
      %45 = dma.hbm_to_vmem [thread:$0]  %s2, 512, %s40, [#allocation7], 128, 128, 8
    $region13: #{tpu_custom_call.1} parent=1 // pred_fallthru
      _
    // Predicated region
    $region14: #{tpu_custom_call.1} parent=1 // pred_check
      _
    $region15: #{tpu_custom_call.1} parent=1 // pred_check_branch
      %47 = sbr.rel (0) target = $region17
    $region16: #{tpu_custom_call.1} parent=1 // pred_region
      %s49 = ssub.s32 16, 16
      %50 = vsyncadd [#allocation7], %s49
      %s52 = sshll.u32 [#allocation8], 4
      %s53 = int_to_ptr.vmem [resolvable:$true] %s52
      %55 = dma.hbm_to_vmem [thread:$0]  %s3, 16, %s53, [#allocation7]
    $region17: #{tpu_custom_call.1} parent=1 // pred_fallthru
      _
    // Predicated region
    $region18: #{tpu_custom_call.1} parent=1 // pred_check
      _
    $region19: #{tpu_custom_call.1} parent=1 // pred_check_branch
      %57 = sbr.rel (0) target = $region21
    $region20: #{tpu_custom_call.1} parent=1 // pred_region
      _
    $region21: #{tpu_custom_call.1} parent=1 // pred_fallthru
      _
    // Predicated region
    $region22: #{tpu_custom_call.1} parent=1 // pred_check
      _
    $region23: #{tpu_custom_call.1} parent=1 // pred_check_branch
      %59 = sbr.rel (0) target = $region25
    $region24: #{tpu_custom_call.1} parent=1 // pred_region
      %s61 = ssub.s32 512, 512
      %62 = vsyncadd [#allocation10], %s61
      %s63 = sshll.u32 [#allocation9], 4
      %s64 = int_to_ptr.vmem [resolvable:$true] %s63
      %69 = dma.hbm_to_vmem [thread:$0]  %s5, 512, %s64, [#allocation10], 128, 128, 8
    $region25: #{tpu_custom_call.1} parent=1 // pred_fallthru
      _
    // Predicated region
    $region26: #{tpu_custom_call.1} parent=1 // pred_check
      _
    $region27: #{tpu_custom_call.1} parent=1 // pred_check_branch
      %71 = sbr.rel (0) target = $region29
    $region28: #{tpu_custom_call.1} parent=1 // pred_region
      _
    $region29: #{tpu_custom_call.1} parent=1 // pred_fallthru
      _
    // Predicated region
    $region30: #{tpu_custom_call.1} parent=1 // pred_check
      _
    $region31: #{tpu_custom_call.1} parent=1 // pred_check_branch
      %73 = sbr.rel (0) target = $region33
    $region32: #{tpu_custom_call.1} parent=1 // pred_region
      _
    $region33: #{tpu_custom_call.1} parent=1 // pred_fallthru
      _
    // Predicated region
    $region34: #{tpu_custom_call.1} parent=1 // pred_check
      _
    $region35: #{tpu_custom_call.1} parent=1 // pred_check_branch
      %75 = sbr.rel (0) target = $region37
    $region36: #{tpu_custom_call.1} parent=1 // pred_region
      _
    $region37: #{tpu_custom_call.1} parent=1 // pred_fallthru
      _
    // Predicated region
    $region38: #{tpu_custom_call.1} parent=1 // pred_check
      _
    $region39: #{tpu_custom_call.1} parent=1 // pred_check_branch
      %77 = sbr.rel (0) target = $region41
    $region40: #{tpu_custom_call.1} parent=1 // pred_region
      _
    $region41: #{tpu_custom_call.1} parent=1 // pred_fallthru
      _
    // Predicated region
    $region42: #{tpu_custom_call.1} parent=1 // pred_check
      _
    $region43: #{tpu_custom_call.1} parent=1 // pred_check_branch
      %79 = sbr.rel (0) target = $region45
    $region44: #{tpu_custom_call.1} parent=1 // pred_region
      _
    $region45: #{tpu_custom_call.1} parent=1 // pred_fallthru
      _
    // Predicated region
    $region46: #{tpu_custom_call.1} parent=1 // pred_check
      _
    $region47: #{tpu_custom_call.1} parent=1 // pred_check_branch
      %81 = sbr.rel (0) target = $region49
    $region48: #{tpu_custom_call.1} parent=1 // pred_region
      %82 = dma.done [#allocation4], 16
    $region49: #{tpu_custom_call.1} parent=1 // pred_fallthru
      _
    // Predicated region
    $region50: #{tpu_custom_call.1} parent=1 // pred_check
      _
    $region51: #{tpu_custom_call.1} parent=1 // pred_check_branch
      %84 = sbr.rel (0) target = $region53
    $region52: #{tpu_custom_call.1} parent=1 // pred_region
      %85 = dma.done [#allocation7], 512
    $region53: #{tpu_custom_call.1} parent=1 // pred_fallthru
      _
    // Predicated region
    $region54: #{tpu_custom_call.1} parent=1 // pred_check
      _
    $region55: #{tpu_custom_call.1} parent=1 // pred_check_branch
      %87 = sbr.rel (0) target = $region57
    $region56: #{tpu_custom_call.1} parent=1 // pred_region
      %88 = dma.done [#allocation7], 16
    $region57: #{tpu_custom_call.1} parent=1 // pred_fallthru
      _
    // Predicated region
    $region58: #{tpu_custom_call.1} parent=1 // pred_check
      _
    $region59: #{tpu_custom_call.1} parent=1 // pred_check_branch
      %90 = sbr.rel (0) target = $region61
    $region60: #{tpu_custom_call.1} parent=1 // pred_region
      %91 = dma.done [#allocation10], 512
    $region61: #{tpu_custom_call.1} parent=1 // pred_fallthru
      _
    %v92 = vld [vmem:[#allocation3] sm:$0x1]
    %v93 = vld [vmem:[#allocation6] sm:$0xff]
    %v94 = vld [vmem:[#allocation6 + $0x8] sm:$0xff]
    %v95 = vld [vmem:[#allocation6 + $0x10] sm:$0xff]
    %v96 = vld [vmem:[#allocation6 + $0x18] sm:$0xff]
    %v97 = vld [vmem:[%s4] sm:$0xff]
    %v98 = vld [vmem:[%s4 + $0x8] sm:$0xff]
    %v99 = vld [vmem:[%s4 + $0x10] sm:$0xff]
    %v100 = vld [vmem:[%s4 + $0x18] sm:$0xff]
    %v101 = vld [vmem:[#allocation9] sm:$0xff]
    %v102 = vld [vmem:[#allocation9 + $0x8] sm:$0xff]
    %v103 = vld [vmem:[#allocation9 + $0x10] sm:$0xff]
    %v104 = vld [vmem:[#allocation9 + $0x18] sm:$0xff]
    %v105 = vld [vmem:[%s7] sm:$0x1]
    %v106 = vld [vmem:[#allocation8] sm:$0x1]
    %v108 = vlaneseq
    %v109 = vshrl.u32 %v108, 7
    %v110 = vsub.s32 0, %v109
    %v111 = vrot.slane %v106, %v110
    %v113 = vld [vmem:[%s6] sm:$0x1]
    %v115 = vlaneseq
    %v116 = vshrl.u32 %v115, 7
    %v117 = vsub.s32 0, %v116
    %v118 = vrot.slane %v113, %v117
    %v120 = vlaneseq
    %v121 = vand.u32 %v120, 127
    %v122 = vld [vmem:[%s9] sm:$0x3]
    %v123 = vld [vmem:[%s10] sm:$0x3]
    %s124 = scalar_lea.vmem %s9, 2
    %v125 = vld [vmem:[%s124] sm:$0x3]
    %s126 = scalar_lea.vmem %s10, 2
    %v127 = vld [vmem:[%s126] sm:$0x3]
    %vm128 = vcmask 261120
    %v130 = vsel %vm128, %v125, 0
    %132 = vmatprep.subr.mxu0 0.0
    %133 = vmatpush1.msra.mxu0 %v101
    %134 = vmatprep.subr.mxu0 0.0
    %135 = vmatpush1.msra.mxu0 %v102
    %136 = vmatprep.subr.mxu0 0.0
    %137 = vmatpush1.msra.mxu0 %v103
    %138 = vmatprep.subr.mxu0 0.0
    %139 = vmatpush1.msra.mxu0 %v104
    %140 = vmatprep.subr.mxu0 0.0
    %141 = vmatpush1.msra.mxu0 0.0
    %142 = vmatprep.subr.mxu0 0.0
    %143 = vmatpush1.msra.mxu0 0.0
    %144 = vmatprep.subr.mxu0 0.0
    %145 = vmatpush1.msra.mxu0 0.0
    %146 = vmatprep.subr.mxu0 0.0
    %147 = vmatpush1.msra.mxu0 0.0
    %148 = vmatprep.subr.mxu0 0.0
    %149 = vmatpush1.msra.mxu0 0.0
    %150 = vmatprep.subr.mxu0 0.0
    %151 = vmatpush1.msra.mxu0 0.0
    %152 = vmatprep.subr.mxu0 0.0
    %153 = vmatpush1.msra.mxu0 0.0
    %154 = vmatprep.subr.mxu0 0.0
    %155 = vmatpush1.msra.mxu0 0.0
    %156 = vmatprep.subr.mxu0 0.0
    %157 = vmatpush1.msra.mxu0 0.0
    %158 = vmatprep.subr.mxu0 0.0
    %159 = vmatpush1.msra.mxu0 0.0
    %160 = vmatprep.subr.mxu0 0.0
    %161 = vmatpush1.msra.mxu0 0.0
    %162 = vmatprep.subr.mxu0 0.0
    %163 = vmatpush1.msra.mxu0 0.0
    %164 = vmatprep.subr.mxu0 0.0
    %165 = vmatpush1.msra.mxu0 0.0
    %166 = vmatprep.subr.mxu0 0.0
    %167 = vmatpush1.msra.mxu0 0.0
    %168 = vmatprep.subr.mxu0 0.0
    %169 = vmatpush1.msra.mxu0 0.0
    %170 = vmatprep.subr.mxu0 0.0
    %171 = vmatpush1.msra.mxu0 0.0
    %172 = vmatprep.subr.mxu0 0.0
    %173 = vmatpush1.msra.mxu0 0.0
    %174 = vmatprep.subr.mxu0 0.0
    %175 = vmatpush1.msra.mxu0 0.0
    %176 = vmatprep.subr.mxu0 0.0
    %177 = vmatpush1.msra.mxu0 0.0
    %178 = vmatprep.subr.mxu0 0.0
    %179 = vmatpush1.msra.mxu0 0.0
    %180 = vmatprep.subr.mxu0 0.0
    %181 = vmatpush1.msra.mxu0 0.0
    %182 = vmatprep.subr.mxu0 0.0
    %183 = vmatpush1.msra.mxu0 0.0
    %184 = vmatprep.subr.mxu0 0.0
    %185 = vmatpush1.msra.mxu0 0.0
    %186 = vmatprep.subr.mxu0 0.0
    %187 = vmatpush1.msra.mxu0 0.0
    %188 = vmatprep.subr.mxu0 0.0
    %189 = vmatpush1.msra.mxu0 0.0
    %190 = vmatprep.subr.mxu0 0.0
    %191 = vmatpush1.msra.mxu0 0.0
    %192 = vmatprep.subr.mxu0 0.0
    %193 = vmatpush1.msra.mxu0 0.0
    %194 = vmatprep.subr.mxu0 0.0
    %195 = vmatpush1.msra.mxu0 0.0
    %196 = vmatprep.mubr.f32.mxu0 0.0
    %197 = vmatmul.mubr.f32.gmra.mrb[0].mxu0 %v130
    %v198 = vpop.f32.mrb[0].mxu0
    %v199 = vadd.f32 %v118, %v198
    %v200 = vpop.f32.mrb[0].mxu0
    %201 = vdwg.mxu0
    %v202 = vld [vmem:[%s0] sm:$0x3]
    %204 = vset.pattern.permute.xlu0 0
    %205 = vperm.xlu0 %204, %v202
    %v206 = vpop.permute.xlu0 %205
    %v209 = vlaneseq
    %v210 = vshrl.u32 %v209, 7
    %v211 = vsub.s32 0, %v210
    %v212 = vrot.slane %v92, %v211
    %v214 = vmul.f32 %v206, %v212
    %v215 = vadd.f32 %v214, %v111
    %v217 = vsel %vm128, %v122, 0
    %219 = vmatprep.subr.mxu0 0.0
    %220 = vmatpush1.msra.mxu0 %v93
    %221 = vmatprep.subr.mxu0 0.0
    %222 = vmatpush1.msra.mxu0 %v94
    %223 = vmatprep.subr.mxu0 0.0
    %224 = vmatpush1.msra.mxu0 %v95
    %225 = vmatprep.subr.mxu0 0.0
    %226 = vmatpush1.msra.mxu0 %v96
    %227 = vmatprep.subr.mxu0 0.0
    %228 = vmatpush1.msra.mxu0 0.0
    %229 = vmatprep.subr.mxu0 0.0
    %230 = vmatpush1.msra.mxu0 0.0
    %231 = vmatprep.subr.mxu0 0.0
    %232 = vmatpush1.msra.mxu0 0.0
    %233 = vmatprep.subr.mxu0 0.0
    %234 = vmatpush1.msra.mxu0 0.0
    %235 = vmatprep.subr.mxu0 0.0
    %236 = vmatpush1.msra.mxu0 0.0
    %237 = vmatprep.subr.mxu0 0.0
    %238 = vmatpush1.msra.mxu0 0.0
    %239 = vmatprep.subr.mxu0 0.0
    %240 = vmatpush1.msra.mxu0 0.0
    %241 = vmatprep.subr.mxu0 0.0
    %242 = vmatpush1.msra.mxu0 0.0
    %243 = vmatprep.subr.mxu0 0.0
    %244 = vmatpush1.msra.mxu0 0.0
    %245 = vmatprep.subr.mxu0 0.0
    %246 = vmatpush1.msra.mxu0 0.0
    %247 = vmatprep.subr.mxu0 0.0
    %248 = vmatpush1.msra.mxu0 0.0
    %249 = vmatprep.subr.mxu0 0.0
    %250 = vmatpush1.msra.mxu0 0.0
    %251 = vmatprep.subr.mxu0 0.0
    %252 = vmatpush1.msra.mxu0 0.0
    %253 = vmatprep.subr.mxu0 0.0
    %254 = vmatpush1.msra.mxu0 0.0
    %255 = vmatprep.subr.mxu0 0.0
    %256 = vmatpush1.msra.mxu0 0.0
    %257 = vmatprep.subr.mxu0 0.0
    %258 = vmatpush1.msra.mxu0 0.0
    %259 = vmatprep.subr.mxu0 0.0
    %260 = vmatpush1.msra.mxu0 0.0
    %261 = vmatprep.subr.mxu0 0.0
    %262 = vmatpush1.msra.mxu0 0.0
    %263 = vmatprep.subr.mxu0 0.0
    %264 = vmatpush1.msra.mxu0 0.0
    %265 = vmatprep.subr.mxu0 0.0
    %266 = vmatpush1.msra.mxu0 0.0
    %267 = vmatprep.subr.mxu0 0.0
    %268 = vmatpush1.msra.mxu0 0.0
    %269 = vmatprep.subr.mxu0 0.0
    %270 = vmatpush1.msra.mxu0 0.0
    %271 = vmatprep.subr.mxu0 0.0
    %272 = vmatpush1.msra.mxu0 0.0
    %273 = vmatprep.subr.mxu0 0.0
    %274 = vmatpush1.msra.mxu0 0.0
    %275 = vmatprep.subr.mxu0 0.0
    %276 = vmatpush1.msra.mxu0 0.0
    %277 = vmatprep.subr.mxu0 0.0
    %278 = vmatpush1.msra.mxu0 0.0
    %279 = vmatprep.subr.mxu0 0.0
    %280 = vmatpush1.msra.mxu0 0.0
    %281 = vmatprep.subr.mxu0 0.0
    %282 = vmatpush1.msra.mxu0 0.0
    %283 = vmatprep.mubr.f32.mxu0 0.0
    %284 = vmatmul.mubr.f32.gmra.mrb[0].mxu0 %v217
    %v285 = vpop.f32.mrb[0].mxu0
    %v286 = vadd.f32 0.0, %v285
    %v287 = vpop.f32.mrb[0].mxu0
    %288 = vdwg.mxu0
    %v289 = vadd.f32 %v215, %v286
    %v290 = vxor.u32 %v289, 2147483648
    %v291 = vmul.f32 %v290, 1.442695
    %v292 = vpow.pop %v291
    %v293 = vadd.f32 %v292, 1.0
    %v294 = vrcp.pop %v293
    %v295 = vmul.f32 1.0, %v294
    %v296 = vtanh.pop %v289
    %298 = vrot.lane.b32.xlu0 %v123, 32
    %v299 = vpop.permute.xlu0 %298
    %v301 = vmul.f32 %v295, %v299
    %303 = vrot.lane.b32.xlu0 %v296, 64
    %v304 = vpop.permute.xlu0 %303
    %v306 = vmul.f32 %v295, %v304
    %308 = vrot.lane.b32.xlu0 %v306, 32
    %v309 = vpop.permute.xlu0 %308
    %v311 = vadd.f32 %v301, %v309
    %v312 = vtanh.pop %v311
    %314 = vrot.lane.b32.xlu0 %v312, 64
    %v315 = vpop.permute.xlu0 %314
    %v317 = vmul.f32 %v295, %v315
    %319 = vrot.lane.b32.xlu0 %v317, 32
    %v320 = vpop.permute.xlu0 %319
    %v321 = vsel %vm128, %v320, 0
    %323 = vmatprep.subr.mxu0 0.0
    %324 = vmatpush1.msra.mxu0 %v97
    %325 = vmatprep.subr.mxu0 0.0
    %326 = vmatpush1.msra.mxu0 %v98
    %327 = vmatprep.subr.mxu0 0.0
    %328 = vmatpush1.msra.mxu0 %v99
    %329 = vmatprep.subr.mxu0 0.0
    %330 = vmatpush1.msra.mxu0 %v100
    %331 = vmatprep.subr.mxu0 0.0
    %332 = vmatpush1.msra.mxu0 0.0
    %333 = vmatprep.subr.mxu0 0.0
    %334 = vmatpush1.msra.mxu0 0.0
    %335 = vmatprep.subr.mxu0 0.0
    %336 = vmatpush1.msra.mxu0 0.0
    %337 = vmatprep.subr.mxu0 0.0
    %338 = vmatpush1.msra.mxu0 0.0
    %339 = vmatprep.subr.mxu0 0.0
    %340 = vmatpush1.msra.mxu0 0.0
    %341 = vmatprep.subr.mxu0 0.0
    %342 = vmatpush1.msra.mxu0 0.0
    %343 = vmatprep.subr.mxu0 0.0
    %344 = vmatpush1.msra.mxu0 0.0
    %345 = vmatprep.subr.mxu0 0.0
    %346 = vmatpush1.msra.mxu0 0.0
    %347 = vmatprep.subr.mxu0 0.0
    %348 = vmatpush1.msra.mxu0 0.0
    %349 = vmatprep.subr.mxu0 0.0
    %350 = vmatpush1.msra.mxu0 0.0
    %351 = vmatprep.subr.mxu0 0.0
    %352 = vmatpush1.msra.mxu0 0.0
    %353 = vmatprep.subr.mxu0 0.0
    %354 = vmatpush1.msra.mxu0 0.0
    %355 = vmatprep.subr.mxu0 0.0
    %356 = vmatpush1.msra.mxu0 0.0
    %357 = vmatprep.subr.mxu0 0.0
    %358 = vmatpush1.msra.mxu0 0.0
    %359 = vmatprep.subr.mxu0 0.0
    %360 = vmatpush1.msra.mxu0 0.0
    %361 = vmatprep.subr.mxu0 0.0
    %362 = vmatpush1.msra.mxu0 0.0
    %363 = vmatprep.subr.mxu0 0.0
    %364 = vmatpush1.msra.mxu0 0.0
    %365 = vmatprep.subr.mxu0 0.0
    %366 = vmatpush1.msra.mxu0 0.0
    %367 = vmatprep.subr.mxu0 0.0
    %368 = vmatpush1.msra.mxu0 0.0
    %369 = vmatprep.subr.mxu0 0.0
    %370 = vmatpush1.msra.mxu0 0.0
    %371 = vmatprep.subr.mxu0 0.0
    %372 = vmatpush1.msra.mxu0 0.0
    %373 = vmatprep.subr.mxu0 0.0
    %374 = vmatpush1.msra.mxu0 0.0
    %375 = vmatprep.subr.mxu0 0.0
    %376 = vmatpush1.msra.mxu0 0.0
    %377 = vmatprep.subr.mxu0 0.0
    %378 = vmatpush1.msra.mxu0 0.0
    %379 = vmatprep.subr.mxu0 0.0
    %380 = vmatpush1.msra.mxu0 0.0
    %381 = vmatprep.subr.mxu0 0.0
    %382 = vmatpush1.msra.mxu0 0.0
    %383 = vmatprep.subr.mxu0 0.0
    %384 = vmatpush1.msra.mxu0 0.0
    %385 = vmatprep.subr.mxu0 0.0
    %386 = vmatpush1.msra.mxu0 0.0
    %387 = vmatprep.mubr.f32.mxu0 0.0
    %388 = vmatmul.mubr.f32.gmra.mrb[0].mxu0 %v321
    %v389 = vpop.f32.mrb[0].mxu0
    %v390 = vadd.f32 0.0, %v389
    %v391 = vpop.f32.mrb[0].mxu0
    %392 = vdwg.mxu0
    %v393 = vadd.f32 %v199, %v390
    %v394 = vxor.u32 %v393, 2147483648
    %v395 = vmul.f32 %v394, 1.442695
    %v396 = vpow.pop %v395
    %v397 = vadd.f32 %v396, 1.0
    %v398 = vrcp.pop %v397
    %v399 = vmul.f32 1.0, %v398
    %v400 = vtanh.pop %v393
    %402 = vrot.lane.b32.xlu0 %v127, 32
    %v403 = vpop.permute.xlu0 %402
    %v405 = vmul.f32 %v399, %v403
    %407 = vrot.lane.b32.xlu0 %v400, 64
    %v408 = vpop.permute.xlu0 %407
    %v410 = vmul.f32 %v399, %v408
    %412 = vrot.lane.b32.xlu0 %v410, 32
    %v413 = vpop.permute.xlu0 %412
    %v415 = vadd.f32 %v405, %v413
    %v416 = vtanh.pop %v415
    %418 = vrot.lane.b32.xlu0 %v416, 64
    %v419 = vpop.permute.xlu0 %418
    %v421 = vmul.f32 %v399, %v419
    %v423 = vlaneseq
    %v424 = vshrl.u32 %v423, 7
    %v425 = vsub.s32 0, %v424
    %v426 = vrot.slane %v105, %v425
    %427 = vrot.lane.b32.xlu0 %v426, 96
    %v428 = vpop.permute.xlu0 %427
    %v430 = vmul.f32 %v421, %v428
    %432 = vrot.lane.b32.xlu0 %v430, 32
    %v433 = vpop.permute.xlu0 %432
    %vm435 = vcmask 254976
    %v436 = vsel %vm435, %v433, 0.0
    %437 = vadd.xlane.f32.xlu0 %v436
    %v438 = vpop.xlane.xlu0 %437
    %vm439 = vcmp.eq.s32.totalorder %v121, 0
    %v440 = vsel %vm439, %v438, 0.0
    %442 = vrot.lane.b32.xlu0 %v421, 32
    %v443 = vpop.permute.xlu0 %442
    %v444 = vsel %vm128, %v443, 0
    %446 = vmatprep.subr.mxu0 0.0
    %447 = vmatpush1.msra.mxu0 %v101
    %448 = vmatprep.subr.mxu0 0.0
    %449 = vmatpush1.msra.mxu0 %v102
    %450 = vmatprep.subr.mxu0 0.0
    %451 = vmatpush1.msra.mxu0 %v103
    %452 = vmatprep.subr.mxu0 0.0
    %453 = vmatpush1.msra.mxu0 %v104
    %454 = vmatprep.subr.mxu0 0.0
    %455 = vmatpush1.msra.mxu0 0.0
    %456 = vmatprep.subr.mxu0 0.0
    %457 = vmatpush1.msra.mxu0 0.0
    %458 = vmatprep.subr.mxu0 0.0
    %459 = vmatpush1.msra.mxu0 0.0
    %460 = vmatprep.subr.mxu0 0.0
    %461 = vmatpush1.msra.mxu0 0.0
    %462 = vmatprep.subr.mxu0 0.0
    %463 = vmatpush1.msra.mxu0 0.0
    %464 = vmatprep.subr.mxu0 0.0
    %465 = vmatpush1.msra.mxu0 0.0
    %466 = vmatprep.subr.mxu0 0.0
    %467 = vmatpush1.msra.mxu0 0.0
    %468 = vmatprep.subr.mxu0 0.0
    %469 = vmatpush1.msra.mxu0 0.0
    %470 = vmatprep.subr.mxu0 0.0
    %471 = vmatpush1.msra.mxu0 0.0
    %472 = vmatprep.subr.mxu0 0.0
    %473 = vmatpush1.msra.mxu0 0.0
    %474 = vmatprep.subr.mxu0 0.0
    %475 = vmatpush1.msra.mxu0 0.0
    %476 = vmatprep.subr.mxu0 0.0
    %477 = vmatpush1.msra.mxu0 0.0
    %478 = vmatprep.subr.mxu0 0.0
    %479 = vmatpush1.msra.mxu0 0.0
    %480 = vmatprep.subr.mxu0 0.0
    %481 = vmatpush1.msra.mxu0 0.0
    %482 = vmatprep.subr.mxu0 0.0
    %483 = vmatpush1.msra.mxu0 0.0
    %484 = vmatprep.subr.mxu0 0.0
    %485 = vmatpush1.msra.mxu0 0.0
    %486 = vmatprep.subr.mxu0 0.0
    %487 = vmatpush1.msra.mxu0 0.0
    %488 = vmatprep.subr.mxu0 0.0
    %489 = vmatpush1.msra.mxu0 0.0
    %490 = vmatprep.subr.mxu0 0.0
    %491 = vmatpush1.msra.mxu0 0.0
    %492 = vmatprep.subr.mxu0 0.0
    %493 = vmatpush1.msra.mxu0 0.0
    %494 = vmatprep.subr.mxu0 0.0
    %495 = vmatpush1.msra.mxu0 0.0
    %496 = vmatprep.subr.mxu0 0.0
    %497 = vmatpush1.msra.mxu0 0.0
    %498 = vmatprep.subr.mxu0 0.0
    %499 = vmatpush1.msra.mxu0 0.0
    %500 = vmatprep.subr.mxu0 0.0
    %501 = vmatpush1.msra.mxu0 0.0
    %502 = vmatprep.subr.mxu0 0.0
    %503 = vmatpush1.msra.mxu0 0.0
    %504 = vmatprep.subr.mxu0 0.0
    %505 = vmatpush1.msra.mxu0 0.0
    %506 = vmatprep.subr.mxu0 0.0
    %507 = vmatpush1.msra.mxu0 0.0
    %508 = vmatprep.subr.mxu0 0.0
    %509 = vmatpush1.msra.mxu0 0.0
    %510 = vmatprep.mubr.f32.mxu0 0.0
    %511 = vmatmul.mubr.f32.gmra.mrb[0].mxu0 %v444
    %v512 = vpop.f32.mrb[0].mxu0
    %v513 = vadd.f32 %v118, %v512
    %v514 = vpop.f32.mrb[0].mxu0
    %515 = vdwg.mxu0
    %s516 = scalar_lea.vmem %s0, 2
    %v517 = vld [vmem:[%s516] sm:$0x3]
    %519 = vset.pattern.permute.xlu0 0
    %520 = vperm.xlu0 %519, %v517
    %v521 = vpop.permute.xlu0 %520
    %v523 = vmul.f32 %v521, %v212
    %v524 = vadd.f32 %v523, %v111
    %525 = vmatprep.subr.mxu0 0.0
    %526 = vmatpush1.msra.mxu0 %v93
    %527 = vmatprep.subr.mxu0 0.0
    %528 = vmatpush1.msra.mxu0 %v94
    %529 = vmatprep.subr.mxu0 0.0
    %530 = vmatpush1.msra.mxu0 %v95
    %531 = vmatprep.subr.mxu0 0.0
    %532 = vmatpush1.msra.mxu0 %v96
    %533 = vmatprep.subr.mxu0 0.0
    %534 = vmatpush1.msra.mxu0 0.0
    %535 = vmatprep.subr.mxu0 0.0
    %536 = vmatpush1.msra.mxu0 0.0
    %537 = vmatprep.subr.mxu0 0.0
    %538 = vmatpush1.msra.mxu0 0.0
    %539 = vmatprep.subr.mxu0 0.0
    %540 = vmatpush1.msra.mxu0 0.0
    %541 = vmatprep.subr.mxu0 0.0
    %542 = vmatpush1.msra.mxu0 0.0
    %543 = vmatprep.subr.mxu0 0.0
    %544 = vmatpush1.msra.mxu0 0.0
    %545 = vmatprep.subr.mxu0 0.0
    %546 = vmatpush1.msra.mxu0 0.0
    %547 = vmatprep.subr.mxu0 0.0
    %548 = vmatpush1.msra.mxu0 0.0
    %549 = vmatprep.subr.mxu0 0.0
    %550 = vmatpush1.msra.mxu0 0.0
    %551 = vmatprep.subr.mxu0 0.0
    %552 = vmatpush1.msra.mxu0 0.0
    %553 = vmatprep.subr.mxu0 0.0
    %554 = vmatpush1.msra.mxu0 0.0
    %555 = vmatprep.subr.mxu0 0.0
    %556 = vmatpush1.msra.mxu0 0.0
    %557 = vmatprep.subr.mxu0 0.0
    %558 = vmatpush1.msra.mxu0 0.0
    %559 = vmatprep.subr.mxu0 0.0
    %560 = vmatpush1.msra.mxu0 0.0
    %561 = vmatprep.subr.mxu0 0.0
    %562 = vmatpush1.msra.mxu0 0.0
    %563 = vmatprep.subr.mxu0 0.0
    %564 = vmatpush1.msra.mxu0 0.0
    %565 = vmatprep.subr.mxu0 0.0
    %566 = vmatpush1.msra.mxu0 0.0
    %567 = vmatprep.subr.mxu0 0.0
    %568 = vmatpush1.msra.mxu0 0.0
    %569 = vmatprep.subr.mxu0 0.0
    %570 = vmatpush1.msra.mxu0 0.0
    %571 = vmatprep.subr.mxu0 0.0
    %572 = vmatpush1.msra.mxu0 0.0
    %573 = vmatprep.subr.mxu0 0.0
    %574 = vmatpush1.msra.mxu0 0.0
    %575 = vmatprep.subr.mxu0 0.0
    %576 = vmatpush1.msra.mxu0 0.0
    %577 = vmatprep.subr.mxu0 0.0
    %578 = vmatpush1.msra.mxu0 0.0
    %579 = vmatprep.subr.mxu0 0.0
    %580 = vmatpush1.msra.mxu0 0.0
    %581 = vmatprep.subr.mxu0 0.0
    %582 = vmatpush1.msra.mxu0 0.0
    %583 = vmatprep.subr.mxu0 0.0
    %584 = vmatpush1.msra.mxu0 0.0
    %585 = vmatprep.subr.mxu0 0.0
    %586 = vmatpush1.msra.mxu0 0.0
    %587 = vmatprep.subr.mxu0 0.0
    %588 = vmatpush1.msra.mxu0 0.0
    %589 = vmatprep.mubr.f32.mxu0 0.0
    %590 = vmatmul.mubr.f32.gmra.mrb[0].mxu0 %v321
    %v591 = vpop.f32.mrb[0].mxu0
    %v592 = vadd.f32 0.0, %v591
    %v593 = vpop.f32.mrb[0].mxu0
    %594 = vdwg.mxu0
    %v595 = vadd.f32 %v524, %v592
    %v596 = vxor.u32 %v595, 2147483648
    %v597 = vmul.f32 %v596, 1.442695
    %v598 = vpow.pop %v597
    %v599 = vadd.f32 %v598, 1.0
    %v600 = vrcp.pop %v599
    %v601 = vmul.f32 1.0, %v600
    %v602 = vtanh.pop %v595
    %v603 = vmul.f32 %v601, %v311
    %605 = vrot.lane.b32.xlu0 %v602, 64
    %v606 = vpop.permute.xlu0 %605
    %v608 = vmul.f32 %v601, %v606
    %610 = vrot.lane.b32.xlu0 %v608, 32
    %v611 = vpop.permute.xlu0 %610
    %v613 = vadd.f32 %v603, %v611
    %v614 = vtanh.pop %v613
    %616 = vrot.lane.b32.xlu0 %v614, 64
    %v617 = vpop.permute.xlu0 %616
    %v619 = vmul.f32 %v601, %v617
    %621 = vrot.lane.b32.xlu0 %v619, 32
    %v622 = vpop.permute.xlu0 %621
    %v623 = vsel %vm128, %v622, 0
    %625 = vmatprep.subr.mxu0 0.0
    %626 = vmatpush1.msra.mxu0 %v97
    %627 = vmatprep.subr.mxu0 0.0
    %628 = vmatpush1.msra.mxu0 %v98
    %629 = vmatprep.subr.mxu0 0.0
    %630 = vmatpush1.msra.mxu0 %v99
    %631 = vmatprep.subr.mxu0 0.0
    %632 = vmatpush1.msra.mxu0 %v100
    %633 = vmatprep.subr.mxu0 0.0
    %634 = vmatpush1.msra.mxu0 0.0
    %635 = vmatprep.subr.mxu0 0.0
    %636 = vmatpush1.msra.mxu0 0.0
    %637 = vmatprep.subr.mxu0 0.0
    %638 = vmatpush1.msra.mxu0 0.0
    %639 = vmatprep.subr.mxu0 0.0
    %640 = vmatpush1.msra.mxu0 0.0
    %641 = vmatprep.subr.mxu0 0.0
    %642 = vmatpush1.msra.mxu0 0.0
    %643 = vmatprep.subr.mxu0 0.0
    %644 = vmatpush1.msra.mxu0 0.0
    %645 = vmatprep.subr.mxu0 0.0
    %646 = vmatpush1.msra.mxu0 0.0
    %647 = vmatprep.subr.mxu0 0.0
    %648 = vmatpush1.msra.mxu0 0.0
    %649 = vmatprep.subr.mxu0 0.0
    %650 = vmatpush1.msra.mxu0 0.0
    %651 = vmatprep.subr.mxu0 0.0
    %652 = vmatpush1.msra.mxu0 0.0
    %653 = vmatprep.subr.mxu0 0.0
    %654 = vmatpush1.msra.mxu0 0.0
    %655 = vmatprep.subr.mxu0 0.0
    %656 = vmatpush1.msra.mxu0 0.0
    %657 = vmatprep.subr.mxu0 0.0
    %658 = vmatpush1.msra.mxu0 0.0
    %659 = vmatprep.subr.mxu0 0.0
    %660 = vmatpush1.msra.mxu0 0.0
    %661 = vmatprep.subr.mxu0 0.0
    %662 = vmatpush1.msra.mxu0 0.0
    %663 = vmatprep.subr.mxu0 0.0
    %664 = vmatpush1.msra.mxu0 0.0
    %665 = vmatprep.subr.mxu0 0.0
    %666 = vmatpush1.msra.mxu0 0.0
    %667 = vmatprep.subr.mxu0 0.0
    %668 = vmatpush1.msra.mxu0 0.0
    %669 = vmatprep.subr.mxu0 0.0
    %670 = vmatpush1.msra.mxu0 0.0
    %671 = vmatprep.subr.mxu0 0.0
    %672 = vmatpush1.msra.mxu0 0.0
    %673 = vmatprep.subr.mxu0 0.0
    %674 = vmatpush1.msra.mxu0 0.0
    %675 = vmatprep.subr.mxu0 0.0
    %676 = vmatpush1.msra.mxu0 0.0
    %677 = vmatprep.subr.mxu0 0.0
    %678 = vmatpush1.msra.mxu0 0.0
    %679 = vmatprep.subr.mxu0 0.0
    %680 = vmatpush1.msra.mxu0 0.0
    %681 = vmatprep.subr.mxu0 0.0
    %682 = vmatpush1.msra.mxu0 0.0
    %683 = vmatprep.subr.mxu0 0.0
    %684 = vmatpush1.msra.mxu0 0.0
    %685 = vmatprep.subr.mxu0 0.0
    %686 = vmatpush1.msra.mxu0 0.0
    %687 = vmatprep.subr.mxu0 0.0
    %688 = vmatpush1.msra.mxu0 0.0
    %689 = vmatprep.mubr.f32.mxu0 0.0
    %690 = vmatmul.mubr.f32.gmra.mrb[0].mxu0 %v623
    %v691 = vpop.f32.mrb[0].mxu0
    %v692 = vadd.f32 0.0, %v691
    %v693 = vpop.f32.mrb[0].mxu0
    %694 = vdwg.mxu0
    %v695 = vadd.f32 %v513, %v692
    %v696 = vxor.u32 %v695, 2147483648
    %v697 = vmul.f32 %v696, 1.442695
    %v698 = vpow.pop %v697
    %v699 = vadd.f32 %v698, 1.0
    %v700 = vrcp.pop %v699
    %v701 = vmul.f32 1.0, %v700
    %v702 = vtanh.pop %v695
    %v703 = vmul.f32 %v701, %v415
    %705 = vrot.lane.b32.xlu0 %v702, 64
    %v706 = vpop.permute.xlu0 %705
    %v708 = vmul.f32 %v701, %v706
    %710 = vrot.lane.b32.xlu0 %v708, 32
    %v711 = vpop.permute.xlu0 %710
    %v713 = vadd.f32 %v703, %v711
    %v714 = vtanh.pop %v713
    %716 = vrot.lane.b32.xlu0 %v714, 64
    %v717 = vpop.permute.xlu0 %716
    %v719 = vmul.f32 %v701, %v717
    %v720 = vmul.f32 %v719, %v428
    %722 = vrot.lane.b32.xlu0 %v720, 32
    %v723 = vpop.permute.xlu0 %722
    %v725 = vsel %vm435, %v723, 0.0
    %726 = vadd.xlane.f32.xlu0 %v725
    %v727 = vpop.xlane.xlu0 %726
    %vm728 = vcmp.eq.s32.totalorder %v121, 1
    %v729 = vsel %vm728, %v727, %v440
    %731 = vrot.lane.b32.xlu0 %v719, 32
    %v732 = vpop.permute.xlu0 %731
    %v733 = vsel %vm128, %v732, 0
    %735 = vmatprep.subr.mxu0 0.0
    %736 = vmatpush1.msra.mxu0 %v101
    %737 = vmatprep.subr.mxu0 0.0
    %738 = vmatpush1.msra.mxu0 %v102
    %739 = vmatprep.subr.mxu0 0.0
    %740 = vmatpush1.msra.mxu0 %v103
    %741 = vmatprep.subr.mxu0 0.0
    %742 = vmatpush1.msra.mxu0 %v104
    %743 = vmatprep.subr.mxu0 0.0
    %744 = vmatpush1.msra.mxu0 0.0
    %745 = vmatprep.subr.mxu0 0.0
    %746 = vmatpush1.msra.mxu0 0.0
    %747 = vmatprep.subr.mxu0 0.0
    %748 = vmatpush1.msra.mxu0 0.0
    %749 = vmatprep.subr.mxu0 0.0
    %750 = vmatpush1.msra.mxu0 0.0
    %751 = vmatprep.subr.mxu0 0.0
    %752 = vmatpush1.msra.mxu0 0.0
    %753 = vmatprep.subr.mxu0 0.0
    %754 = vmatpush1.msra.mxu0 0.0
    %755 = vmatprep.subr.mxu0 0.0
    %756 = vmatpush1.msra.mxu0 0.0
    %757 = vmatprep.subr.mxu0 0.0
    %758 = vmatpush1.msra.mxu0 0.0
    %759 = vmatprep.subr.mxu0 0.0
    %760 = vmatpush1.msra.mxu0 0.0
    %761 = vmatprep.subr.mxu0 0.0
    %762 = vmatpush1.msra.mxu0 0.0
    %763 = vmatprep.subr.mxu0 0.0
    %764 = vmatpush1.msra.mxu0 0.0
    %765 = vmatprep.subr.mxu0 0.0
    %766 = vmatpush1.msra.mxu0 0.0
    %767 = vmatprep.subr.mxu0 0.0
    %768 = vmatpush1.msra.mxu0 0.0
    %769 = vmatprep.subr.mxu0 0.0
    %770 = vmatpush1.msra.mxu0 0.0
    %771 = vmatprep.subr.mxu0 0.0
    %772 = vmatpush1.msra.mxu0 0.0
    %773 = vmatprep.subr.mxu0 0.0
    %774 = vmatpush1.msra.mxu0 0.0
    %775 = vmatprep.subr.mxu0 0.0
    %776 = vmatpush1.msra.mxu0 0.0
    %777 = vmatprep.subr.mxu0 0.0
    %778 = vmatpush1.msra.mxu0 0.0
    %779 = vmatprep.subr.mxu0 0.0
    %780 = vmatpush1.msra.mxu0 0.0
    %781 = vmatprep.subr.mxu0 0.0
    %782 = vmatpush1.msra.mxu0 0.0
    %783 = vmatprep.subr.mxu0 0.0
    %784 = vmatpush1.msra.mxu0 0.0
    %785 = vmatprep.subr.mxu0 0.0
    %786 = vmatpush1.msra.mxu0 0.0
    %787 = vmatprep.subr.mxu0 0.0
    %788 = vmatpush1.msra.mxu0 0.0
    %789 = vmatprep.subr.mxu0 0.0
    %790 = vmatpush1.msra.mxu0 0.0
    %791 = vmatprep.subr.mxu0 0.0
    %792 = vmatpush1.msra.mxu0 0.0
    %793 = vmatprep.subr.mxu0 0.0
    %794 = vmatpush1.msra.mxu0 0.0
    %795 = vmatprep.subr.mxu0 0.0
    %796 = vmatpush1.msra.mxu0 0.0
    %797 = vmatprep.subr.mxu0 0.0
    %798 = vmatpush1.msra.mxu0 0.0
    %799 = vmatprep.mubr.f32.mxu0 0.0
    %800 = vmatmul.mubr.f32.gmra.mrb[0].mxu0 %v733
    %v801 = vpop.f32.mrb[0].mxu0
    %v802 = vadd.f32 %v118, %v801
    %v803 = vpop.f32.mrb[0].mxu0
    %804 = vdwg.mxu0
    %s805 = scalar_lea.vmem %s0, 4
    %v806 = vld [vmem:[%s805] sm:$0x3]
    %808 = vset.pattern.permute.xlu0 0
    %809 = vperm.xlu0 %808, %v806
    %v810 = vpop.permute.xlu0 %809
    %v812 = vmul.f32 %v810, %v212
    %v813 = vadd.f32 %v812, %v111
    %814 = vmatprep.subr.mxu0 0.0
    %815 = vmatpush1.msra.mxu0 %v93
    %816 = vmatprep.subr.mxu0 0.0
    %817 = vmatpush1.msra.mxu0 %v94
    %818 = vmatprep.subr.mxu0 0.0
    %819 = vmatpush1.msra.mxu0 %v95
    %820 = vmatprep.subr.mxu0 0.0
    %821 = vmatpush1.msra.mxu0 %v96
    %822 = vmatprep.subr.mxu0 0.0
    %823 = vmatpush1.msra.mxu0 0.0
    %824 = vmatprep.subr.mxu0 0.0
    %825 = vmatpush1.msra.mxu0 0.0
    %826 = vmatprep.subr.mxu0 0.0
    %827 = vmatpush1.msra.mxu0 0.0
    %828 = vmatprep.subr.mxu0 0.0
    %829 = vmatpush1.msra.mxu0 0.0
    %830 = vmatprep.subr.mxu0 0.0
    %831 = vmatpush1.msra.mxu0 0.0
    %832 = vmatprep.subr.mxu0 0.0
    %833 = vmatpush1.msra.mxu0 0.0
    %834 = vmatprep.subr.mxu0 0.0
    %835 = vmatpush1.msra.mxu0 0.0
    %836 = vmatprep.subr.mxu0 0.0
    %837 = vmatpush1.msra.mxu0 0.0
    %838 = vmatprep.subr.mxu0 0.0
    %839 = vmatpush1.msra.mxu0 0.0
    %840 = vmatprep.subr.mxu0 0.0
    %841 = vmatpush1.msra.mxu0 0.0
    %842 = vmatprep.subr.mxu0 0.0
    %843 = vmatpush1.msra.mxu0 0.0
    %844 = vmatprep.subr.mxu0 0.0
    %845 = vmatpush1.msra.mxu0 0.0
    %846 = vmatprep.subr.mxu0 0.0
    %847 = vmatpush1.msra.mxu0 0.0
    %848 = vmatprep.subr.mxu0 0.0
    %849 = vmatpush1.msra.mxu0 0.0
    %850 = vmatprep.subr.mxu0 0.0
    %851 = vmatpush1.msra.mxu0 0.0
    %852 = vmatprep.subr.mxu0 0.0
    %853 = vmatpush1.msra.mxu0 0.0
    %854 = vmatprep.subr.mxu0 0.0
    %855 = vmatpush1.msra.mxu0 0.0
    %856 = vmatprep.subr.mxu0 0.0
    %857 = vmatpush1.msra.mxu0 0.0
    %858 = vmatprep.subr.mxu0 0.0
    %859 = vmatpush1.msra.mxu0 0.0
    %860 = vmatprep.subr.mxu0 0.0
    %861 = vmatpush1.msra.mxu0 0.0
    %862 = vmatprep.subr.mxu0 0.0
    %863 = vmatpush1.msra.mxu0 0.0
    %864 = vmatprep.subr.mxu0 0.0
    %865 = vmatpush1.msra.mxu0 0.0
    %866 = vmatprep.subr.mxu0 0.0
    %867 = vmatpush1.msra.mxu0 0.0
    %868 = vmatprep.subr.mxu0 0.0
    %869 = vmatpush1.msra.mxu0 0.0
    %870 = vmatprep.subr.mxu0 0.0
    %871 = vmatpush1.msra.mxu0 0.0
    %872 = vmatprep.subr.mxu0 0.0
    %873 = vmatpush1.msra.mxu0 0.0
    %874 = vmatprep.subr.mxu0 0.0
    %875 = vmatpush1.msra.mxu0 0.0
    %876 = vmatprep.subr.mxu0 0.0
    %877 = vmatpush1.msra.mxu0 0.0
    %878 = vmatprep.mubr.f32.mxu0 0.0
    %879 = vmatmul.mubr.f32.gmra.mrb[0].mxu0 %v623
    %v880 = vpop.f32.mrb[0].mxu0
    %v881 = vadd.f32 0.0, %v880
    %v882 = vpop.f32.mrb[0].mxu0
    %883 = vdwg.mxu0
    %v884 = vadd.f32 %v813, %v881
    %v885 = vxor.u32 %v884, 2147483648
    %v886 = vmul.f32 %v885, 1.442695
    %v887 = vpow.pop %v886
    %v888 = vadd.f32 %v887, 1.0
    %v889 = vrcp.pop %v888
    %v890 = vmul.f32 1.0, %v889
    %v891 = vtanh.pop %v884
    %v892 = vmul.f32 %v890, %v613
    %894 = vrot.lane.b32.xlu0 %v891, 64
    %v895 = vpop.permute.xlu0 %894
    %v897 = vmul.f32 %v890, %v895
    %899 = vrot.lane.b32.xlu0 %v897, 32
    %v900 = vpop.permute.xlu0 %899
    %v902 = vadd.f32 %v892, %v900
    %v903 = vtanh.pop %v902
    %905 = vrot.lane.b32.xlu0 %v903, 64
    %v906 = vpop.permute.xlu0 %905
    %v908 = vmul.f32 %v890, %v906
    %910 = vrot.lane.b32.xlu0 %v908, 32
    %v911 = vpop.permute.xlu0 %910
    %v912 = vsel %vm128, %v911, 0
    %914 = vmatprep.subr.mxu0 0.0
    %915 = vmatpush1.msra.mxu0 %v97
    %916 = vmatprep.subr.mxu0 0.0
    %917 = vmatpush1.msra.mxu0 %v98
    %918 = vmatprep.subr.mxu0 0.0
    %919 = vmatpush1.msra.mxu0 %v99
    %920 = vmatprep.subr.mxu0 0.0
    %921 = vmatpush1.msra.mxu0 %v100
    %922 = vmatprep.subr.mxu0 0.0
    %923 = vmatpush1.msra.mxu0 0.0
    %924 = vmatprep.subr.mxu0 0.0
    %925 = vmatpush1.msra.mxu0 0.0
    %926 = vmatprep.subr.mxu0 0.0
    %927 = vmatpush1.msra.mxu0 0.0
    %928 = vmatprep.subr.mxu0 0.0
    %929 = vmatpush1.msra.mxu0 0.0
    %930 = vmatprep.subr.mxu0 0.0
    %931 = vmatpush1.msra.mxu0 0.0
    %932 = vmatprep.subr.mxu0 0.0
    %933 = vmatpush1.msra.mxu0 0.0
    %934 = vmatprep.subr.mxu0 0.0
    %935 = vmatpush1.msra.mxu0 0.0
    %936 = vmatprep.subr.mxu0 0.0
    %937 = vmatpush1.msra.mxu0 0.0
    %938 = vmatprep.subr.mxu0 0.0
    %939 = vmatpush1.msra.mxu0 0.0
    %940 = vmatprep.subr.mxu0 0.0
    %941 = vmatpush1.msra.mxu0 0.0
    %942 = vmatprep.subr.mxu0 0.0
    %943 = vmatpush1.msra.mxu0 0.0
    %944 = vmatprep.subr.mxu0 0.0
    %945 = vmatpush1.msra.mxu0 0.0
    %946 = vmatprep.subr.mxu0 0.0
    %947 = vmatpush1.msra.mxu0 0.0
    %948 = vmatprep.subr.mxu0 0.0
    %949 = vmatpush1.msra.mxu0 0.0
    %950 = vmatprep.subr.mxu0 0.0
    %951 = vmatpush1.msra.mxu0 0.0
    %952 = vmatprep.subr.mxu0 0.0
    %953 = vmatpush1.msra.mxu0 0.0
    %954 = vmatprep.subr.mxu0 0.0
    %955 = vmatpush1.msra.mxu0 0.0
    %956 = vmatprep.subr.mxu0 0.0
    %957 = vmatpush1.msra.mxu0 0.0
    %958 = vmatprep.subr.mxu0 0.0
    %959 = vmatpush1.msra.mxu0 0.0
    %960 = vmatprep.subr.mxu0 0.0
    %961 = vmatpush1.msra.mxu0 0.0
    %962 = vmatprep.subr.mxu0 0.0
    %963 = vmatpush1.msra.mxu0 0.0
    %964 = vmatprep.subr.mxu0 0.0
    %965 = vmatpush1.msra.mxu0 0.0
    %966 = vmatprep.subr.mxu0 0.0
    %967 = vmatpush1.msra.mxu0 0.0
    %968 = vmatprep.subr.mxu0 0.0
    %969 = vmatpush1.msra.mxu0 0.0
    %970 = vmatprep.subr.mxu0 0.0
    %971 = vmatpush1.msra.mxu0 0.0
    %972 = vmatprep.subr.mxu0 0.0
    %973 = vmatpush1.msra.mxu0 0.0
    %974 = vmatprep.subr.mxu0 0.0
    %975 = vmatpush1.msra.mxu0 0.0
    %976 = vmatprep.subr.mxu0 0.0
    %977 = vmatpush1.msra.mxu0 0.0
    %978 = vmatprep.mubr.f32.mxu0 0.0
    %979 = vmatmul.mubr.f32.gmra.mrb[0].mxu0 %v912
    %v980 = vpop.f32.mrb[0].mxu0
    %v981 = vadd.f32 0.0, %v980
    %v982 = vpop.f32.mrb[0].mxu0
    %983 = vdwg.mxu0
    %v984 = vadd.f32 %v802, %v981
    %v985 = vxor.u32 %v984, 2147483648
    %v986 = vmul.f32 %v985, 1.442695
    %v987 = vpow.pop %v986
    %v988 = vadd.f32 %v987, 1.0
    %v989 = vrcp.pop %v988
    %v990 = vmul.f32 1.0, %v989
    %v991 = vtanh.pop %v984
    %v992 = vmul.f32 %v990, %v713
    %994 = vrot.lane.b32.xlu0 %v991, 64
    %v995 = vpop.permute.xlu0 %994
    %v997 = vmul.f32 %v990, %v995
    %999 = vrot.lane.b32.xlu0 %v997, 32
    %v1000 = vpop.permute.xlu0 %999
    %v1002 = vadd.f32 %v992, %v1000
    %v1003 = vtanh.pop %v1002
    %1005 = vrot.lane.b32.xlu0 %v1003, 64
    %v1006 = vpop.permute.xlu0 %1005
    %v1008 = vmul.f32 %v990, %v1006
    %v1009 = vmul.f32 %v1008, %v428
    %1011 = vrot.lane.b32.xlu0 %v1009, 32
    %v1012 = vpop.permute.xlu0 %1011
    %v1014 = vsel %vm435, %v1012, 0.0
    %1015 = vadd.xlane.f32.xlu0 %v1014
    %v1016 = vpop.xlane.xlu0 %1015
    %vm1017 = vcmp.eq.s32.totalorder %v121, 2
    %v1018 = vsel %vm1017, %v1016, %v729
    %1020 = vrot.lane.b32.xlu0 %v1008, 32
    %v1021 = vpop.permute.xlu0 %1020
    %v1022 = vsel %vm128, %v1021, 0
    %1024 = vmatprep.subr.mxu0 0.0
    %1025 = vmatpush1.msra.mxu0 %v101
    %1026 = vmatprep.subr.mxu0 0.0
    %1027 = vmatpush1.msra.mxu0 %v102
    %1028 = vmatprep.subr.mxu0 0.0
    %1029 = vmatpush1.msra.mxu0 %v103
    %1030 = vmatprep.subr.mxu0 0.0
    %1031 = vmatpush1.msra.mxu0 %v104
    %1032 = vmatprep.subr.mxu0 0.0
    %1033 = vmatpush1.msra.mxu0 0.0
    %1034 = vmatprep.subr.mxu0 0.0
    %1035 = vmatpush1.msra.mxu0 0.0
    %1036 = vmatprep.subr.mxu0 0.0
    %1037 = vmatpush1.msra.mxu0 0.0
    %1038 = vmatprep.subr.mxu0 0.0
    %1039 = vmatpush1.msra.mxu0 0.0
    %1040 = vmatprep.subr.mxu0 0.0
    %1041 = vmatpush1.msra.mxu0 0.0
    %1042 = vmatprep.subr.mxu0 0.0
    %1043 = vmatpush1.msra.mxu0 0.0
    %1044 = vmatprep.subr.mxu0 0.0
    %1045 = vmatpush1.msra.mxu0 0.0
    %1046 = vmatprep.subr.mxu0 0.0
    %1047 = vmatpush1.msra.mxu0 0.0
    %1048 = vmatprep.subr.mxu0 0.0
    %1049 = vmatpush1.msra.mxu0 0.0
    %1050 = vmatprep.subr.mxu0 0.0
    %1051 = vmatpush1.msra.mxu0 0.0
    %1052 = vmatprep.subr.mxu0 0.0
    %1053 = vmatpush1.msra.mxu0 0.0
    %1054 = vmatprep.subr.mxu0 0.0
    %1055 = vmatpush1.msra.mxu0 0.0
    %1056 = vmatprep.subr.mxu0 0.0
    %1057 = vmatpush1.msra.mxu0 0.0
    %1058 = vmatprep.subr.mxu0 0.0
    %1059 = vmatpush1.msra.mxu0 0.0
    %1060 = vmatprep.subr.mxu0 0.0
    %1061 = vmatpush1.msra.mxu0 0.0
    %1062 = vmatprep.subr.mxu0 0.0
    %1063 = vmatpush1.msra.mxu0 0.0
    %1064 = vmatprep.subr.mxu0 0.0
    %1065 = vmatpush1.msra.mxu0 0.0
    %1066 = vmatprep.subr.mxu0 0.0
    %1067 = vmatpush1.msra.mxu0 0.0
    %1068 = vmatprep.subr.mxu0 0.0
    %1069 = vmatpush1.msra.mxu0 0.0
    %1070 = vmatprep.subr.mxu0 0.0
    %1071 = vmatpush1.msra.mxu0 0.0
    %1072 = vmatprep.subr.mxu0 0.0
    %1073 = vmatpush1.msra.mxu0 0.0
    %1074 = vmatprep.subr.mxu0 0.0
    %1075 = vmatpush1.msra.mxu0 0.0
    %1076 = vmatprep.subr.mxu0 0.0
    %1077 = vmatpush1.msra.mxu0 0.0
    %1078 = vmatprep.subr.mxu0 0.0
    %1079 = vmatpush1.msra.mxu0 0.0
    %1080 = vmatprep.subr.mxu0 0.0
    %1081 = vmatpush1.msra.mxu0 0.0
    %1082 = vmatprep.subr.mxu0 0.0
    %1083 = vmatpush1.msra.mxu0 0.0
    %1084 = vmatprep.subr.mxu0 0.0
    %1085 = vmatpush1.msra.mxu0 0.0
    %1086 = vmatprep.subr.mxu0 0.0
    %1087 = vmatpush1.msra.mxu0 0.0
    %1088 = vmatprep.mubr.f32.mxu0 0.0
    %1089 = vmatmul.mubr.f32.gmra.mrb[0].mxu0 %v1022
    %v1090 = vpop.f32.mrb[0].mxu0
    %v1091 = vadd.f32 %v118, %v1090
    %v1092 = vpop.f32.mrb[0].mxu0
    %1093 = vdwg.mxu0
    %s1094 = scalar_lea.vmem %s0, 6
    %v1095 = vld [vmem:[%s1094] sm:$0x3]
    %1097 = vset.pattern.permute.xlu0 0
    %1098 = vperm.xlu0 %1097, %v1095
    %v1099 = vpop.permute.xlu0 %1098
    %v1101 = vmul.f32 %v1099, %v212
    %v1102 = vadd.f32 %v1101, %v111
    %1103 = vmatprep.subr.mxu0 0.0
    %1104 = vmatpush1.msra.mxu0 %v93
    %1105 = vmatprep.subr.mxu0 0.0
    %1106 = vmatpush1.msra.mxu0 %v94
    %1107 = vmatprep.subr.mxu0 0.0
    %1108 = vmatpush1.msra.mxu0 %v95
    %1109 = vmatprep.subr.mxu0 0.0
    %1110 = vmatpush1.msra.mxu0 %v96
    %1111 = vmatprep.subr.mxu0 0.0
    %1112 = vmatpush1.msra.mxu0 0.0
    %1113 = vmatprep.subr.mxu0 0.0
    %1114 = vmatpush1.msra.mxu0 0.0
    %1115 = vmatprep.subr.mxu0 0.0
    %1116 = vmatpush1.msra.mxu0 0.0
    %1117 = vmatprep.subr.mxu0 0.0
    %1118 = vmatpush1.msra.mxu0 0.0
    %1119 = vmatprep.subr.mxu0 0.0
    %1120 = vmatpush1.msra.mxu0 0.0
    %1121 = vmatprep.subr.mxu0 0.0
    %1122 = vmatpush1.msra.mxu0 0.0
    %1123 = vmatprep.subr.mxu0 0.0
    %1124 = vmatpush1.msra.mxu0 0.0
    %1125 = vmatprep.subr.mxu0 0.0
    %1126 = vmatpush1.msra.mxu0 0.0
    %1127 = vmatprep.subr.mxu0 0.0
    %1128 = vmatpush1.msra.mxu0 0.0
    %1129 = vmatprep.subr.mxu0 0.0
    %1130 = vmatpush1.msra.mxu0 0.0
    %1131 = vmatprep.subr.mxu0 0.0
    %1132 = vmatpush1.msra.mxu0 0.0
    %1133 = vmatprep.subr.mxu0 0.0
    %1134 = vmatpush1.msra.mxu0 0.0
    %1135 = vmatprep.subr.mxu0 0.0
    %1136 = vmatpush1.msra.mxu0 0.0
    %1137 = vmatprep.subr.mxu0 0.0
    %1138 = vmatpush1.msra.mxu0 0.0
    %1139 = vmatprep.subr.mxu0 0.0
    %1140 = vmatpush1.msra.mxu0 0.0
    %1141 = vmatprep.subr.mxu0 0.0
    %1142 = vmatpush1.msra.mxu0 0.0
    %1143 = vmatprep.subr.mxu0 0.0
    %1144 = vmatpush1.msra.mxu0 0.0
    %1145 = vmatprep.subr.mxu0 0.0
    %1146 = vmatpush1.msra.mxu0 0.0
    %1147 = vmatprep.subr.mxu0 0.0
    %1148 = vmatpush1.msra.mxu0 0.0
    %1149 = vmatprep.subr.mxu0 0.0
    %1150 = vmatpush1.msra.mxu0 0.0
    %1151 = vmatprep.subr.mxu0 0.0
    %1152 = vmatpush1.msra.mxu0 0.0
    %1153 = vmatprep.subr.mxu0 0.0
    %1154 = vmatpush1.msra.mxu0 0.0
    %1155 = vmatprep.subr.mxu0 0.0
    %1156 = vmatpush1.msra.mxu0 0.0
    %1157 = vmatprep.subr.mxu0 0.0
    %1158 = vmatpush1.msra.mxu0 0.0
    %1159 = vmatprep.subr.mxu0 0.0
    %1160 = vmatpush1.msra.mxu0 0.0
    %1161 = vmatprep.subr.mxu0 0.0
    %1162 = vmatpush1.msra.mxu0 0.0
    %1163 = vmatprep.subr.mxu0 0.0
    %1164 = vmatpush1.msra.mxu0 0.0
    %1165 = vmatprep.subr.mxu0 0.0
    %1166 = vmatpush1.msra.mxu0 0.0
    %1167 = vmatprep.mubr.f32.mxu0 0.0
    %1168 = vmatmul.mubr.f32.gmra.mrb[0].mxu0 %v912
    %v1169 = vpop.f32.mrb[0].mxu0
    %v1170 = vadd.f32 0.0, %v1169
    %v1171 = vpop.f32.mrb[0].mxu0
    %1172 = vdwg.mxu0
    %v1173 = vadd.f32 %v1102, %v1170
    %v1174 = vxor.u32 %v1173, 2147483648
    %v1175 = vmul.f32 %v1174, 1.442695
    %v1176 = vpow.pop %v1175
    %v1177 = vadd.f32 %v1176, 1.0
    %v1178 = vrcp.pop %v1177
    %v1179 = vmul.f32 1.0, %v1178
    %v1180 = vtanh.pop %v1173
    %v1181 = vmul.f32 %v1179, %v902
    %1183 = vrot.lane.b32.xlu0 %v1180, 64
    %v1184 = vpop.permute.xlu0 %1183
    %v1186 = vmul.f32 %v1179, %v1184
    %1188 = vrot.lane.b32.xlu0 %v1186, 32
    %v1189 = vpop.permute.xlu0 %1188
    %v1191 = vadd.f32 %v1181, %v1189
    %v1192 = vtanh.pop %v1191
    %1194 = vrot.lane.b32.xlu0 %v1192, 64
    %v1195 = vpop.permute.xlu0 %1194
    %v1197 = vmul.f32 %v1179, %v1195
    %1199 = vrot.lane.b32.xlu0 %v1197, 32
    %v1200 = vpop.permute.xlu0 %1199
    %v1201 = vsel %vm128, %v1200, 0
    %1203 = vmatprep.subr.mxu0 0.0
    %1204 = vmatpush1.msra.mxu0 %v97
    %1205 = vmatprep.subr.mxu0 0.0
    %1206 = vmatpush1.msra.mxu0 %v98
    %1207 = vmatprep.subr.mxu0 0.0
    %1208 = vmatpush1.msra.mxu0 %v99
    %1209 = vmatprep.subr.mxu0 0.0
    %1210 = vmatpush1.msra.mxu0 %v100
    %1211 = vmatprep.subr.mxu0 0.0
    %1212 = vmatpush1.msra.mxu0 0.0
    %1213 = vmatprep.subr.mxu0 0.0
    %1214 = vmatpush1.msra.mxu0 0.0
    %1215 = vmatprep.subr.mxu0 0.0
    %1216 = vmatpush1.msra.mxu0 0.0
    %1217 = vmatprep.subr.mxu0 0.0
    %1218 = vmatpush1.msra.mxu0 0.0
    %1219 = vmatprep.subr.mxu0 0.0
    %1220 = vmatpush1.msra.mxu0 0.0
    %1221 = vmatprep.subr.mxu0 0.0
    %1222 = vmatpush1.msra.mxu0 0.0
    %1223 = vmatprep.subr.mxu0 0.0
    %1224 = vmatpush1.msra.mxu0 0.0
    %1225 = vmatprep.subr.mxu0 0.0
    %1226 = vmatpush1.msra.mxu0 0.0
    %1227 = vmatprep.subr.mxu0 0.0
    %1228 = vmatpush1.msra.mxu0 0.0
    %1229 = vmatprep.subr.mxu0 0.0
    %1230 = vmatpush1.msra.mxu0 0.0
    %1231 = vmatprep.subr.mxu0 0.0
    %1232 = vmatpush1.msra.mxu0 0.0
    %1233 = vmatprep.subr.mxu0 0.0
    %1234 = vmatpush1.msra.mxu0 0.0
    %1235 = vmatprep.subr.mxu0 0.0
    %1236 = vmatpush1.msra.mxu0 0.0
    %1237 = vmatprep.subr.mxu0 0.0
    %1238 = vmatpush1.msra.mxu0 0.0
    %1239 = vmatprep.subr.mxu0 0.0
    %1240 = vmatpush1.msra.mxu0 0.0
    %1241 = vmatprep.subr.mxu0 0.0
    %1242 = vmatpush1.msra.mxu0 0.0
    %1243 = vmatprep.subr.mxu0 0.0
    %1244 = vmatpush1.msra.mxu0 0.0
    %1245 = vmatprep.subr.mxu0 0.0
    %1246 = vmatpush1.msra.mxu0 0.0
    %1247 = vmatprep.subr.mxu0 0.0
    %1248 = vmatpush1.msra.mxu0 0.0
    %1249 = vmatprep.subr.mxu0 0.0
    %1250 = vmatpush1.msra.mxu0 0.0
    %1251 = vmatprep.subr.mxu0 0.0
    %1252 = vmatpush1.msra.mxu0 0.0
    %1253 = vmatprep.subr.mxu0 0.0
    %1254 = vmatpush1.msra.mxu0 0.0
    %1255 = vmatprep.subr.mxu0 0.0
    %1256 = vmatpush1.msra.mxu0 0.0
    %1257 = vmatprep.subr.mxu0 0.0
    %1258 = vmatpush1.msra.mxu0 0.0
    %1259 = vmatprep.subr.mxu0 0.0
    %1260 = vmatpush1.msra.mxu0 0.0
    %1261 = vmatprep.subr.mxu0 0.0
    %1262 = vmatpush1.msra.mxu0 0.0
    %1263 = vmatprep.subr.mxu0 0.0
    %1264 = vmatpush1.msra.mxu0 0.0
    %1265 = vmatprep.subr.mxu0 0.0
    %1266 = vmatpush1.msra.mxu0 0.0
    %1267 = vmatprep.mubr.f32.mxu0 0.0
    %1268 = vmatmul.mubr.f32.gmra.mrb[0].mxu0 %v1201
    %v1269 = vpop.f32.mrb[0].mxu0
    %v1270 = vadd.f32 0.0, %v1269
    %v1271 = vpop.f32.mrb[0].mxu0
    %1272 = vdwg.mxu0
    %v1273 = vadd.f32 %v1091, %v1270
    %v1274 = vxor.u32 %v1273, 2147483648
    %v1275 = vmul.f32 %v1274, 1.442695
    %v1276 = vpow.pop %v1275
    %v1277 = vadd.f32 %v1276, 1.0
    %v1278 = vrcp.pop %v1277
    %v1279 = vmul.f32 1.0, %v1278
    %v1280 = vtanh.pop %v1273
    %v1281 = vmul.f32 %v1279, %v1002
    %1283 = vrot.lane.b32.xlu0 %v1280, 64
    %v1284 = vpop.permute.xlu0 %1283
    %v1286 = vmul.f32 %v1279, %v1284
    %1288 = vrot.lane.b32.xlu0 %v1286, 32
    %v1289 = vpop.permute.xlu0 %1288
    %v1291 = vadd.f32 %v1281, %v1289
    %v1292 = vtanh.pop %v1291
    %1294 = vrot.lane.b32.xlu0 %v1292, 64
    %v1295 = vpop.permute.xlu0 %1294
    %v1297 = vmul.f32 %v1279, %v1295
    %v1298 = vmul.f32 %v1297, %v428
    %1300 = vrot.lane.b32.xlu0 %v1298, 32
    %v1301 = vpop.permute.xlu0 %1300
    %v1303 = vsel %vm435, %v1301, 0.0
    %1304 = vadd.xlane.f32.xlu0 %v1303
    %v1305 = vpop.xlane.xlu0 %1304
    %vm1306 = vcmp.eq.s32.totalorder %v121, 3
    %v1307 = vsel %vm1306, %v1305, %v1018
    %1309 = vrot.lane.b32.xlu0 %v1297, 32
    %v1310 = vpop.permute.xlu0 %1309
    %v1311 = vsel %vm128, %v1310, 0
    %1313 = vmatprep.subr.mxu0 0.0
    %1314 = vmatpush1.msra.mxu0 %v101
    %1315 = vmatprep.subr.mxu0 0.0
    %1316 = vmatpush1.msra.mxu0 %v102
    %1317 = vmatprep.subr.mxu0 0.0
    %1318 = vmatpush1.msra.mxu0 %v103
    %1319 = vmatprep.subr.mxu0 0.0
    %1320 = vmatpush1.msra.mxu0 %v104
    %1321 = vmatprep.subr.mxu0 0.0
    %1322 = vmatpush1.msra.mxu0 0.0
    %1323 = vmatprep.subr.mxu0 0.0
    %1324 = vmatpush1.msra.mxu0 0.0
    %1325 = vmatprep.subr.mxu0 0.0
    %1326 = vmatpush1.msra.mxu0 0.0
    %1327 = vmatprep.subr.mxu0 0.0
    %1328 = vmatpush1.msra.mxu0 0.0
    %1329 = vmatprep.subr.mxu0 0.0
    %1330 = vmatpush1.msra.mxu0 0.0
    %1331 = vmatprep.subr.mxu0 0.0
    %1332 = vmatpush1.msra.mxu0 0.0
    %1333 = vmatprep.subr.mxu0 0.0
    %1334 = vmatpush1.msra.mxu0 0.0
    %1335 = vmatprep.subr.mxu0 0.0
    %1336 = vmatpush1.msra.mxu0 0.0
    %1337 = vmatprep.subr.mxu0 0.0
    %1338 = vmatpush1.msra.mxu0 0.0
    %1339 = vmatprep.subr.mxu0 0.0
    %1340 = vmatpush1.msra.mxu0 0.0
    %1341 = vmatprep.subr.mxu0 0.0
    %1342 = vmatpush1.msra.mxu0 0.0
    %1343 = vmatprep.subr.mxu0 0.0
    %1344 = vmatpush1.msra.mxu0 0.0
    %1345 = vmatprep.subr.mxu0 0.0
    %1346 = vmatpush1.msra.mxu0 0.0
    %1347 = vmatprep.subr.mxu0 0.0
    %1348 = vmatpush1.msra.mxu0 0.0
    %1349 = vmatprep.subr.mxu0 0.0
    %1350 = vmatpush1.msra.mxu0 0.0
    %1351 = vmatprep.subr.mxu0 0.0
    %1352 = vmatpush1.msra.mxu0 0.0
    %1353 = vmatprep.subr.mxu0 0.0
    %1354 = vmatpush1.msra.mxu0 0.0
    %1355 = vmatprep.subr.mxu0 0.0
    %1356 = vmatpush1.msra.mxu0 0.0
    %1357 = vmatprep.subr.mxu0 0.0
    %1358 = vmatpush1.msra.mxu0 0.0
    %1359 = vmatprep.subr.mxu0 0.0
    %1360 = vmatpush1.msra.mxu0 0.0
    %1361 = vmatprep.subr.mxu0 0.0
    %1362 = vmatpush1.msra.mxu0 0.0
    %1363 = vmatprep.subr.mxu0 0.0
    %1364 = vmatpush1.msra.mxu0 0.0
    %1365 = vmatprep.subr.mxu0 0.0
    %1366 = vmatpush1.msra.mxu0 0.0
    %1367 = vmatprep.subr.mxu0 0.0
    %1368 = vmatpush1.msra.mxu0 0.0
    %1369 = vmatprep.subr.mxu0 0.0
    %1370 = vmatpush1.msra.mxu0 0.0
    %1371 = vmatprep.subr.mxu0 0.0
    %1372 = vmatpush1.msra.mxu0 0.0
    %1373 = vmatprep.subr.mxu0 0.0
    %1374 = vmatpush1.msra.mxu0 0.0
    %1375 = vmatprep.subr.mxu0 0.0
    %1376 = vmatpush1.msra.mxu0 0.0
    %1377 = vmatprep.mubr.f32.mxu0 0.0
    %1378 = vmatmul.mubr.f32.gmra.mrb[0].mxu0 %v1311
    %v1379 = vpop.f32.mrb[0].mxu0
    %v1380 = vadd.f32 %v118, %v1379
    %v1381 = vpop.f32.mrb[0].mxu0
    %1382 = vdwg.mxu0
    %s1383 = scalar_lea.vmem %s0, 8
    %v1384 = vld [vmem:[%s1383] sm:$0x3]
    %1386 = vset.pattern.permute.xlu0 0
    %1387 = vperm.xlu0 %1386, %v1384
    %v1388 = vpop.permute.xlu0 %1387
    %v1390 = vmul.f32 %v1388, %v212
    %v1391 = vadd.f32 %v1390, %v111
    %1392 = vmatprep.subr.mxu0 0.0
    %1393 = vmatpush1.msra.mxu0 %v93
    %1394 = vmatprep.subr.mxu0 0.0
    %1395 = vmatpush1.msra.mxu0 %v94
    %1396 = vmatprep.subr.mxu0 0.0
    %1397 = vmatpush1.msra.mxu0 %v95
    %1398 = vmatprep.subr.mxu0 0.0
    %1399 = vmatpush1.msra.mxu0 %v96
    %1400 = vmatprep.subr.mxu0 0.0
    %1401 = vmatpush1.msra.mxu0 0.0
    %1402 = vmatprep.subr.mxu0 0.0
    %1403 = vmatpush1.msra.mxu0 0.0
    %1404 = vmatprep.subr.mxu0 0.0
    %1405 = vmatpush1.msra.mxu0 0.0
    %1406 = vmatprep.subr.mxu0 0.0
    %1407 = vmatpush1.msra.mxu0 0.0
    %1408 = vmatprep.subr.mxu0 0.0
    %1409 = vmatpush1.msra.mxu0 0.0
    %1410 = vmatprep.subr.mxu0 0.0
    %1411 = vmatpush1.msra.mxu0 0.0
    %1412 = vmatprep.subr.mxu0 0.0
    %1413 = vmatpush1.msra.mxu0 0.0
    %1414 = vmatprep.subr.mxu0 0.0
    %1415 = vmatpush1.msra.mxu0 0.0
    %1416 = vmatprep.subr.mxu0 0.0
    %1417 = vmatpush1.msra.mxu0 0.0
    %1418 = vmatprep.subr.mxu0 0.0
    %1419 = vmatpush1.msra.mxu0 0.0
    %1420 = vmatprep.subr.mxu0 0.0
    %1421 = vmatpush1.msra.mxu0 0.0
    %1422 = vmatprep.subr.mxu0 0.0
    %1423 = vmatpush1.msra.mxu0 0.0
    %1424 = vmatprep.subr.mxu0 0.0
    %1425 = vmatpush1.msra.mxu0 0.0
    %1426 = vmatprep.subr.mxu0 0.0
    %1427 = vmatpush1.msra.mxu0 0.0
    %1428 = vmatprep.subr.mxu0 0.0
    %1429 = vmatpush1.msra.mxu0 0.0
    %1430 = vmatprep.subr.mxu0 0.0
    %1431 = vmatpush1.msra.mxu0 0.0
    %1432 = vmatprep.subr.mxu0 0.0
    %1433 = vmatpush1.msra.mxu0 0.0
    %1434 = vmatprep.subr.mxu0 0.0
    %1435 = vmatpush1.msra.mxu0 0.0
    %1436 = vmatprep.subr.mxu0 0.0
    %1437 = vmatpush1.msra.mxu0 0.0
    %1438 = vmatprep.subr.mxu0 0.0
    %1439 = vmatpush1.msra.mxu0 0.0
    %1440 = vmatprep.subr.mxu0 0.0
    %1441 = vmatpush1.msra.mxu0 0.0
    %1442 = vmatprep.subr.mxu0 0.0
    %1443 = vmatpush1.msra.mxu0 0.0
    %1444 = vmatprep.subr.mxu0 0.0
    %1445 = vmatpush1.msra.mxu0 0.0
    %1446 = vmatprep.subr.mxu0 0.0
    %1447 = vmatpush1.msra.mxu0 0.0
    %1448 = vmatprep.subr.mxu0 0.0
    %1449 = vmatpush1.msra.mxu0 0.0
    %1450 = vmatprep.subr.mxu0 0.0
    %1451 = vmatpush1.msra.mxu0 0.0
    %1452 = vmatprep.subr.mxu0 0.0
    %1453 = vmatpush1.msra.mxu0 0.0
    %1454 = vmatprep.subr.mxu0 0.0
    %1455 = vmatpush1.msra.mxu0 0.0
    %1456 = vmatprep.mubr.f32.mxu0 0.0
    %1457 = vmatmul.mubr.f32.gmra.mrb[0].mxu0 %v1201
    %v1458 = vpop.f32.mrb[0].mxu0
    %v1459 = vadd.f32 0.0, %v1458
    %v1460 = vpop.f32.mrb[0].mxu0
    %1461 = vdwg.mxu0
    %v1462 = vadd.f32 %v1391, %v1459
    %v1463 = vxor.u32 %v1462, 2147483648
    %v1464 = vmul.f32 %v1463, 1.442695
    %v1465 = vpow.pop %v1464
    %v1466 = vadd.f32 %v1465, 1.0
    %v1467 = vrcp.pop %v1466
    %v1468 = vmul.f32 1.0, %v1467
    %v1469 = vtanh.pop %v1462
    %v1470 = vmul.f32 %v1468, %v1191
    %1472 = vrot.lane.b32.xlu0 %v1469, 64
    %v1473 = vpop.permute.xlu0 %1472
    %v1475 = vmul.f32 %v1468, %v1473
    %1477 = vrot.lane.b32.xlu0 %v1475, 32
    %v1478 = vpop.permute.xlu0 %1477
    %v1480 = vadd.f32 %v1470, %v1478
    %v1481 = vtanh.pop %v1480
    %1483 = vrot.lane.b32.xlu0 %v1481, 64
    %v1484 = vpop.permute.xlu0 %1483
    %v1486 = vmul.f32 %v1468, %v1484
    %1488 = vrot.lane.b32.xlu0 %v1486, 32
    %v1489 = vpop.permute.xlu0 %1488
    %v1490 = vsel %vm128, %v1489, 0
    %1492 = vmatprep.subr.mxu0 0.0
    %1493 = vmatpush1.msra.mxu0 %v97
    %1494 = vmatprep.subr.mxu0 0.0
    %1495 = vmatpush1.msra.mxu0 %v98
    %1496 = vmatprep.subr.mxu0 0.0
    %1497 = vmatpush1.msra.mxu0 %v99
    %1498 = vmatprep.subr.mxu0 0.0
    %1499 = vmatpush1.msra.mxu0 %v100
    %1500 = vmatprep.subr.mxu0 0.0
    %1501 = vmatpush1.msra.mxu0 0.0
    %1502 = vmatprep.subr.mxu0 0.0
    %1503 = vmatpush1.msra.mxu0 0.0
    %1504 = vmatprep.subr.mxu0 0.0
    %1505 = vmatpush1.msra.mxu0 0.0
    %1506 = vmatprep.subr.mxu0 0.0
    %1507 = vmatpush1.msra.mxu0 0.0
    %1508 = vmatprep.subr.mxu0 0.0
    %1509 = vmatpush1.msra.mxu0 0.0
    %1510 = vmatprep.subr.mxu0 0.0
    %1511 = vmatpush1.msra.mxu0 0.0
    %1512 = vmatprep.subr.mxu0 0.0
    %1513 = vmatpush1.msra.mxu0 0.0
    %1514 = vmatprep.subr.mxu0 0.0
    %1515 = vmatpush1.msra.mxu0 0.0
    %1516 = vmatprep.subr.mxu0 0.0
    %1517 = vmatpush1.msra.mxu0 0.0
    %1518 = vmatprep.subr.mxu0 0.0
    %1519 = vmatpush1.msra.mxu0 0.0
    %1520 = vmatprep.subr.mxu0 0.0
    %1521 = vmatpush1.msra.mxu0 0.0
    %1522 = vmatprep.subr.mxu0 0.0
    %1523 = vmatpush1.msra.mxu0 0.0
    %1524 = vmatprep.subr.mxu0 0.0
    %1525 = vmatpush1.msra.mxu0 0.0
    %1526 = vmatprep.subr.mxu0 0.0
    %1527 = vmatpush1.msra.mxu0 0.0
    %1528 = vmatprep.subr.mxu0 0.0
    %1529 = vmatpush1.msra.mxu0 0.0
    %1530 = vmatprep.subr.mxu0 0.0
    %1531 = vmatpush1.msra.mxu0 0.0
    %1532 = vmatprep.subr.mxu0 0.0
    %1533 = vmatpush1.msra.mxu0 0.0
    %1534 = vmatprep.subr.mxu0 0.0
    %1535 = vmatpush1.msra.mxu0 0.0
    %1536 = vmatprep.subr.mxu0 0.0
    %1537 = vmatpush1.msra.mxu0 0.0
    %1538 = vmatprep.subr.mxu0 0.0
    %1539 = vmatpush1.msra.mxu0 0.0
    %1540 = vmatprep.subr.mxu0 0.0
    %1541 = vmatpush1.msra.mxu0 0.0
    %1542 = vmatprep.subr.mxu0 0.0
    %1543 = vmatpush1.msra.mxu0 0.0
    %1544 = vmatprep.subr.mxu0 0.0
    %1545 = vmatpush1.msra.mxu0 0.0
    %1546 = vmatprep.subr.mxu0 0.0
    %1547 = vmatpush1.msra.mxu0 0.0
    %1548 = vmatprep.subr.mxu0 0.0
    %1549 = vmatpush1.msra.mxu0 0.0
    %1550 = vmatprep.subr.mxu0 0.0
    %1551 = vmatpush1.msra.mxu0 0.0
    %1552 = vmatprep.subr.mxu0 0.0
    %1553 = vmatpush1.msra.mxu0 0.0
    %1554 = vmatprep.subr.mxu0 0.0
    %1555 = vmatpush1.msra.mxu0 0.0
    %1556 = vmatprep.mubr.f32.mxu0 0.0
    %1557 = vmatmul.mubr.f32.gmra.mrb[0].mxu0 %v1490
    %v1558 = vpop.f32.mrb[0].mxu0
    %v1559 = vadd.f32 0.0, %v1558
    %v1560 = vpop.f32.mrb[0].mxu0
    %1561 = vdwg.mxu0
    %v1562 = vadd.f32 %v1380, %v1559
    %v1563 = vxor.u32 %v1562, 2147483648
    %v1564 = vmul.f32 %v1563, 1.442695
    %v1565 = vpow.pop %v1564
    %v1566 = vadd.f32 %v1565, 1.0
    %v1567 = vrcp.pop %v1566
    %v1568 = vmul.f32 1.0, %v1567
    %v1569 = vtanh.pop %v1562
    %v1570 = vmul.f32 %v1568, %v1291
    %1572 = vrot.lane.b32.xlu0 %v1569, 64
    %v1573 = vpop.permute.xlu0 %1572
    %v1575 = vmul.f32 %v1568, %v1573
    %1577 = vrot.lane.b32.xlu0 %v1575, 32
    %v1578 = vpop.permute.xlu0 %1577
    %v1580 = vadd.f32 %v1570, %v1578
    %v1581 = vtanh.pop %v1580
    %1583 = vrot.lane.b32.xlu0 %v1581, 64
    %v1584 = vpop.permute.xlu0 %1583
    %v1586 = vmul.f32 %v1568, %v1584
    %v1587 = vmul.f32 %v1586, %v428
    %1589 = vrot.lane.b32.xlu0 %v1587, 32
    %v1590 = vpop.permute.xlu0 %1589
    %v1592 = vsel %vm435, %v1590, 0.0
    %1593 = vadd.xlane.f32.xlu0 %v1592
    %v1594 = vpop.xlane.xlu0 %1593
    %vm1595 = vcmp.eq.s32.totalorder %v121, 4
    %v1596 = vsel %vm1595, %v1594, %v1307
    %1598 = vrot.lane.b32.xlu0 %v1586, 32
    %v1599 = vpop.permute.xlu0 %1598
    %v1600 = vsel %vm128, %v1599, 0
    %1602 = vmatprep.subr.mxu0 0.0
    %1603 = vmatpush1.msra.mxu0 %v101
    %1604 = vmatprep.subr.mxu0 0.0
    %1605 = vmatpush1.msra.mxu0 %v102
    %1606 = vmatprep.subr.mxu0 0.0
    %1607 = vmatpush1.msra.mxu0 %v103
    %1608 = vmatprep.subr.mxu0 0.0
    %1609 = vmatpush1.msra.mxu0 %v104
    %1610 = vmatprep.subr.mxu0 0.0
    %1611 = vmatpush1.msra.mxu0 0.0
    %1612 = vmatprep.subr.mxu0 0.0
    %1613 = vmatpush1.msra.mxu0 0.0
    %1614 = vmatprep.subr.mxu0 0.0
    %1615 = vmatpush1.msra.mxu0 0.0
    %1616 = vmatprep.subr.mxu0 0.0
    %1617 = vmatpush1.msra.mxu0 0.0
    %1618 = vmatprep.subr.mxu0 0.0
    %1619 = vmatpush1.msra.mxu0 0.0
    %1620 = vmatprep.subr.mxu0 0.0
    %1621 = vmatpush1.msra.mxu0 0.0
    %1622 = vmatprep.subr.mxu0 0.0
    %1623 = vmatpush1.msra.mxu0 0.0
    %1624 = vmatprep.subr.mxu0 0.0
    %1625 = vmatpush1.msra.mxu0 0.0
    %1626 = vmatprep.subr.mxu0 0.0
    %1627 = vmatpush1.msra.mxu0 0.0
    %1628 = vmatprep.subr.mxu0 0.0
    %1629 = vmatpush1.msra.mxu0 0.0
    %1630 = vmatprep.subr.mxu0 0.0
    %1631 = vmatpush1.msra.mxu0 0.0
    %1632 = vmatprep.subr.mxu0 0.0
    %1633 = vmatpush1.msra.mxu0 0.0
    %1634 = vmatprep.subr.mxu0 0.0
    %1635 = vmatpush1.msra.mxu0 0.0
    %1636 = vmatprep.subr.mxu0 0.0
    %1637 = vmatpush1.msra.mxu0 0.0
    %1638 = vmatprep.subr.mxu0 0.0
    %1639 = vmatpush1.msra.mxu0 0.0
    %1640 = vmatprep.subr.mxu0 0.0
    %1641 = vmatpush1.msra.mxu0 0.0
    %1642 = vmatprep.subr.mxu0 0.0
    %1643 = vmatpush1.msra.mxu0 0.0
    %1644 = vmatprep.subr.mxu0 0.0
    %1645 = vmatpush1.msra.mxu0 0.0
    %1646 = vmatprep.subr.mxu0 0.0
    %1647 = vmatpush1.msra.mxu0 0.0
    %1648 = vmatprep.subr.mxu0 0.0
    %1649 = vmatpush1.msra.mxu0 0.0
    %1650 = vmatprep.subr.mxu0 0.0
    %1651 = vmatpush1.msra.mxu0 0.0
    %1652 = vmatprep.subr.mxu0 0.0
    %1653 = vmatpush1.msra.mxu0 0.0
    %1654 = vmatprep.subr.mxu0 0.0
    %1655 = vmatpush1.msra.mxu0 0.0
    %1656 = vmatprep.subr.mxu0 0.0
    %1657 = vmatpush1.msra.mxu0 0.0
    %1658 = vmatprep.subr.mxu0 0.0
    %1659 = vmatpush1.msra.mxu0 0.0
    %1660 = vmatprep.subr.mxu0 0.0
    %1661 = vmatpush1.msra.mxu0 0.0
    %1662 = vmatprep.subr.mxu0 0.0
    %1663 = vmatpush1.msra.mxu0 0.0
    %1664 = vmatprep.subr.mxu0 0.0
    %1665 = vmatpush1.msra.mxu0 0.0
    %1666 = vmatprep.mubr.f32.mxu0 0.0
    %1667 = vmatmul.mubr.f32.gmra.mrb[0].mxu0 %v1600
    %v1668 = vpop.f32.mrb[0].mxu0
    %v1669 = vadd.f32 %v118, %v1668
    %v1670 = vpop.f32.mrb[0].mxu0
    %1671 = vdwg.mxu0
    %s1672 = scalar_lea.vmem %s0, 10
    %v1673 = vld [vmem:[%s1672] sm:$0x3]
    %1675 = vset.pattern.permute.xlu0 0
    %1676 = vperm.xlu0 %1675, %v1673
    %v1677 = vpop.permute.xlu0 %1676
    %v1679 = vmul.f32 %v1677, %v212
    %v1680 = vadd.f32 %v1679, %v111
    %1681 = vmatprep.subr.mxu0 0.0
    %1682 = vmatpush1.msra.mxu0 %v93
    %1683 = vmatprep.subr.mxu0 0.0
    %1684 = vmatpush1.msra.mxu0 %v94
    %1685 = vmatprep.subr.mxu0 0.0
    %1686 = vmatpush1.msra.mxu0 %v95
    %1687 = vmatprep.subr.mxu0 0.0
    %1688 = vmatpush1.msra.mxu0 %v96
    %1689 = vmatprep.subr.mxu0 0.0
    %1690 = vmatpush1.msra.mxu0 0.0
    %1691 = vmatprep.subr.mxu0 0.0
    %1692 = vmatpush1.msra.mxu0 0.0
    %1693 = vmatprep.subr.mxu0 0.0
    %1694 = vmatpush1.msra.mxu0 0.0
    %1695 = vmatprep.subr.mxu0 0.0
    %1696 = vmatpush1.msra.mxu0 0.0
    %1697 = vmatprep.subr.mxu0 0.0
    %1698 = vmatpush1.msra.mxu0 0.0
    %1699 = vmatprep.subr.mxu0 0.0
    %1700 = vmatpush1.msra.mxu0 0.0
    %1701 = vmatprep.subr.mxu0 0.0
    %1702 = vmatpush1.msra.mxu0 0.0
    %1703 = vmatprep.subr.mxu0 0.0
    %1704 = vmatpush1.msra.mxu0 0.0
    %1705 = vmatprep.subr.mxu0 0.0
    %1706 = vmatpush1.msra.mxu0 0.0
    %1707 = vmatprep.subr.mxu0 0.0
    %1708 = vmatpush1.msra.mxu0 0.0
    %1709 = vmatprep.subr.mxu0 0.0
    %1710 = vmatpush1.msra.mxu0 0.0
    %1711 = vmatprep.subr.mxu0 0.0
    %1712 = vmatpush1.msra.mxu0 0.0
    %1713 = vmatprep.subr.mxu0 0.0
    %1714 = vmatpush1.msra.mxu0 0.0
    %1715 = vmatprep.subr.mxu0 0.0
    %1716 = vmatpush1.msra.mxu0 0.0
    %1717 = vmatprep.subr.mxu0 0.0
    %1718 = vmatpush1.msra.mxu0 0.0
    %1719 = vmatprep.subr.mxu0 0.0
    %1720 = vmatpush1.msra.mxu0 0.0
    %1721 = vmatprep.subr.mxu0 0.0
    %1722 = vmatpush1.msra.mxu0 0.0
    %1723 = vmatprep.subr.mxu0 0.0
    %1724 = vmatpush1.msra.mxu0 0.0
    %1725 = vmatprep.subr.mxu0 0.0
    %1726 = vmatpush1.msra.mxu0 0.0
    %1727 = vmatprep.subr.mxu0 0.0
    %1728 = vmatpush1.msra.mxu0 0.0
    %1729 = vmatprep.subr.mxu0 0.0
    %1730 = vmatpush1.msra.mxu0 0.0
    %1731 = vmatprep.subr.mxu0 0.0
    %1732 = vmatpush1.msra.mxu0 0.0
    %1733 = vmatprep.subr.mxu0 0.0
    %1734 = vmatpush1.msra.mxu0 0.0
    %1735 = vmatprep.subr.mxu0 0.0
    %1736 = vmatpush1.msra.mxu0 0.0
    %1737 = vmatprep.subr.mxu0 0.0
    %1738 = vmatpush1.msra.mxu0 0.0
    %1739 = vmatprep.subr.mxu0 0.0
    %1740 = vmatpush1.msra.mxu0 0.0
    %1741 = vmatprep.subr.mxu0 0.0
    %1742 = vmatpush1.msra.mxu0 0.0
    %1743 = vmatprep.subr.mxu0 0.0
    %1744 = vmatpush1.msra.mxu0 0.0
    %1745 = vmatprep.mubr.f32.mxu0 0.0
    %1746 = vmatmul.mubr.f32.gmra.mrb[0].mxu0 %v1490
    %v1747 = vpop.f32.mrb[0].mxu0
    %v1748 = vadd.f32 0.0, %v1747
    %v1749 = vpop.f32.mrb[0].mxu0
    %1750 = vdwg.mxu0
    %v1751 = vadd.f32 %v1680, %v1748
    %v1752 = vxor.u32 %v1751, 2147483648
    %v1753 = vmul.f32 %v1752, 1.442695
    %v1754 = vpow.pop %v1753
    %v1755 = vadd.f32 %v1754, 1.0
    %v1756 = vrcp.pop %v1755
    %v1757 = vmul.f32 1.0, %v1756
    %v1758 = vtanh.pop %v1751
    %v1759 = vmul.f32 %v1757, %v1480
    %1761 = vrot.lane.b32.xlu0 %v1758, 64
    %v1762 = vpop.permute.xlu0 %1761
    %v1764 = vmul.f32 %v1757, %v1762
    %1766 = vrot.lane.b32.xlu0 %v1764, 32
    %v1767 = vpop.permute.xlu0 %1766
    %v1769 = vadd.f32 %v1759, %v1767
    %v1770 = vtanh.pop %v1769
    %1772 = vrot.lane.b32.xlu0 %v1770, 64
    %v1773 = vpop.permute.xlu0 %1772
    %v1775 = vmul.f32 %v1757, %v1773
    %1777 = vrot.lane.b32.xlu0 %v1775, 32
    %v1778 = vpop.permute.xlu0 %1777
    %v1779 = vsel %vm128, %v1778, 0
    %1781 = vmatprep.subr.mxu0 0.0
    %1782 = vmatpush1.msra.mxu0 %v97
    %1783 = vmatprep.subr.mxu0 0.0
    %1784 = vmatpush1.msra.mxu0 %v98
    %1785 = vmatprep.subr.mxu0 0.0
    %1786 = vmatpush1.msra.mxu0 %v99
    %1787 = vmatprep.subr.mxu0 0.0
    %1788 = vmatpush1.msra.mxu0 %v100
    %1789 = vmatprep.subr.mxu0 0.0
    %1790 = vmatpush1.msra.mxu0 0.0
    %1791 = vmatprep.subr.mxu0 0.0
    %1792 = vmatpush1.msra.mxu0 0.0
    %1793 = vmatprep.subr.mxu0 0.0
    %1794 = vmatpush1.msra.mxu0 0.0
    %1795 = vmatprep.subr.mxu0 0.0
    %1796 = vmatpush1.msra.mxu0 0.0
    %1797 = vmatprep.subr.mxu0 0.0
    %1798 = vmatpush1.msra.mxu0 0.0
    %1799 = vmatprep.subr.mxu0 0.0
    %1800 = vmatpush1.msra.mxu0 0.0
    %1801 = vmatprep.subr.mxu0 0.0
    %1802 = vmatpush1.msra.mxu0 0.0
    %1803 = vmatprep.subr.mxu0 0.0
    %1804 = vmatpush1.msra.mxu0 0.0
    %1805 = vmatprep.subr.mxu0 0.0
    %1806 = vmatpush1.msra.mxu0 0.0
    %1807 = vmatprep.subr.mxu0 0.0
    %1808 = vmatpush1.msra.mxu0 0.0
    %1809 = vmatprep.subr.mxu0 0.0
    %1810 = vmatpush1.msra.mxu0 0.0
    %1811 = vmatprep.subr.mxu0 0.0
    %1812 = vmatpush1.msra.mxu0 0.0
    %1813 = vmatprep.subr.mxu0 0.0
    %1814 = vmatpush1.msra.mxu0 0.0
    %1815 = vmatprep.subr.mxu0 0.0
    %1816 = vmatpush1.msra.mxu0 0.0
    %1817 = vmatprep.subr.mxu0 0.0
    %1818 = vmatpush1.msra.mxu0 0.0
    %1819 = vmatprep.subr.mxu0 0.0
    %1820 = vmatpush1.msra.mxu0 0.0
    %1821 = vmatprep.subr.mxu0 0.0
    %1822 = vmatpush1.msra.mxu0 0.0
    %1823 = vmatprep.subr.mxu0 0.0
    %1824 = vmatpush1.msra.mxu0 0.0
    %1825 = vmatprep.subr.mxu0 0.0
    %1826 = vmatpush1.msra.mxu0 0.0
    %1827 = vmatprep.subr.mxu0 0.0
    %1828 = vmatpush1.msra.mxu0 0.0
    %1829 = vmatprep.subr.mxu0 0.0
    %1830 = vmatpush1.msra.mxu0 0.0
    %1831 = vmatprep.subr.mxu0 0.0
    %1832 = vmatpush1.msra.mxu0 0.0
    %1833 = vmatprep.subr.mxu0 0.0
    %1834 = vmatpush1.msra.mxu0 0.0
    %1835 = vmatprep.subr.mxu0 0.0
    %1836 = vmatpush1.msra.mxu0 0.0
    %1837 = vmatprep.subr.mxu0 0.0
    %1838 = vmatpush1.msra.mxu0 0.0
    %1839 = vmatprep.subr.mxu0 0.0
    %1840 = vmatpush1.msra.mxu0 0.0
    %1841 = vmatprep.subr.mxu0 0.0
    %1842 = vmatpush1.msra.mxu0 0.0
    %1843 = vmatprep.subr.mxu0 0.0
    %1844 = vmatpush1.msra.mxu0 0.0
    %1845 = vmatprep.mubr.f32.mxu0 0.0
    %1846 = vmatmul.mubr.f32.gmra.mrb[0].mxu0 %v1779
    %v1847 = vpop.f32.mrb[0].mxu0
    %v1848 = vadd.f32 0.0, %v1847
    %v1849 = vpop.f32.mrb[0].mxu0
    %1850 = vdwg.mxu0
    %v1851 = vadd.f32 %v1669, %v1848
    %v1852 = vxor.u32 %v1851, 2147483648
    %v1853 = vmul.f32 %v1852, 1.442695
    %v1854 = vpow.pop %v1853
    %v1855 = vadd.f32 %v1854, 1.0
    %v1856 = vrcp.pop %v1855
    %v1857 = vmul.f32 1.0, %v1856
    %v1858 = vtanh.pop %v1851
    %v1859 = vmul.f32 %v1857, %v1580
    %1861 = vrot.lane.b32.xlu0 %v1858, 64
    %v1862 = vpop.permute.xlu0 %1861
    %v1864 = vmul.f32 %v1857, %v1862
    %1866 = vrot.lane.b32.xlu0 %v1864, 32
    %v1867 = vpop.permute.xlu0 %1866
    %v1869 = vadd.f32 %v1859, %v1867
    %v1870 = vtanh.pop %v1869
    %1872 = vrot.lane.b32.xlu0 %v1870, 64
    %v1873 = vpop.permute.xlu0 %1872
    %v1875 = vmul.f32 %v1857, %v1873
    %v1876 = vmul.f32 %v1875, %v428
    %1878 = vrot.lane.b32.xlu0 %v1876, 32
    %v1879 = vpop.permute.xlu0 %1878
    %v1881 = vsel %vm435, %v1879, 0.0
    %1882 = vadd.xlane.f32.xlu0 %v1881
    %v1883 = vpop.xlane.xlu0 %1882
    %vm1884 = vcmp.eq.s32.totalorder %v121, 5
    %v1885 = vsel %vm1884, %v1883, %v1596
    %1887 = vrot.lane.b32.xlu0 %v1875, 32
    %v1888 = vpop.permute.xlu0 %1887
    %v1889 = vsel %vm128, %v1888, 0
    %1891 = vmatprep.subr.mxu0 0.0
    %1892 = vmatpush1.msra.mxu0 %v101
    %1893 = vmatprep.subr.mxu0 0.0
    %1894 = vmatpush1.msra.mxu0 %v102
    %1895 = vmatprep.subr.mxu0 0.0
    %1896 = vmatpush1.msra.mxu0 %v103
    %1897 = vmatprep.subr.mxu0 0.0
    %1898 = vmatpush1.msra.mxu0 %v104
    %1899 = vmatprep.subr.mxu0 0.0
    %1900 = vmatpush1.msra.mxu0 0.0
    %1901 = vmatprep.subr.mxu0 0.0
    %1902 = vmatpush1.msra.mxu0 0.0
    %1903 = vmatprep.subr.mxu0 0.0
    %1904 = vmatpush1.msra.mxu0 0.0
    %1905 = vmatprep.subr.mxu0 0.0
    %1906 = vmatpush1.msra.mxu0 0.0
    %1907 = vmatprep.subr.mxu0 0.0
    %1908 = vmatpush1.msra.mxu0 0.0
    %1909 = vmatprep.subr.mxu0 0.0
    %1910 = vmatpush1.msra.mxu0 0.0
    %1911 = vmatprep.subr.mxu0 0.0
    %1912 = vmatpush1.msra.mxu0 0.0
    %1913 = vmatprep.subr.mxu0 0.0
    %1914 = vmatpush1.msra.mxu0 0.0
    %1915 = vmatprep.subr.mxu0 0.0
    %1916 = vmatpush1.msra.mxu0 0.0
    %1917 = vmatprep.subr.mxu0 0.0
    %1918 = vmatpush1.msra.mxu0 0.0
    %1919 = vmatprep.subr.mxu0 0.0
    %1920 = vmatpush1.msra.mxu0 0.0
    %1921 = vmatprep.subr.mxu0 0.0
    %1922 = vmatpush1.msra.mxu0 0.0
    %1923 = vmatprep.subr.mxu0 0.0
    %1924 = vmatpush1.msra.mxu0 0.0
    %1925 = vmatprep.subr.mxu0 0.0
    %1926 = vmatpush1.msra.mxu0 0.0
    %1927 = vmatprep.subr.mxu0 0.0
    %1928 = vmatpush1.msra.mxu0 0.0
    %1929 = vmatprep.subr.mxu0 0.0
    %1930 = vmatpush1.msra.mxu0 0.0
    %1931 = vmatprep.subr.mxu0 0.0
    %1932 = vmatpush1.msra.mxu0 0.0
    %1933 = vmatprep.subr.mxu0 0.0
    %1934 = vmatpush1.msra.mxu0 0.0
    %1935 = vmatprep.subr.mxu0 0.0
    %1936 = vmatpush1.msra.mxu0 0.0
    %1937 = vmatprep.subr.mxu0 0.0
    %1938 = vmatpush1.msra.mxu0 0.0
    %1939 = vmatprep.subr.mxu0 0.0
    %1940 = vmatpush1.msra.mxu0 0.0
    %1941 = vmatprep.subr.mxu0 0.0
    %1942 = vmatpush1.msra.mxu0 0.0
    %1943 = vmatprep.subr.mxu0 0.0
    %1944 = vmatpush1.msra.mxu0 0.0
    %1945 = vmatprep.subr.mxu0 0.0
    %1946 = vmatpush1.msra.mxu0 0.0
    %1947 = vmatprep.subr.mxu0 0.0
    %1948 = vmatpush1.msra.mxu0 0.0
    %1949 = vmatprep.subr.mxu0 0.0
    %1950 = vmatpush1.msra.mxu0 0.0
    %1951 = vmatprep.subr.mxu0 0.0
    %1952 = vmatpush1.msra.mxu0 0.0
    %1953 = vmatprep.subr.mxu0 0.0
    %1954 = vmatpush1.msra.mxu0 0.0
    %1955 = vmatprep.mubr.f32.mxu0 0.0
    %1956 = vmatmul.mubr.f32.gmra.mrb[0].mxu0 %v1889
    %v1957 = vpop.f32.mrb[0].mxu0
    %v1958 = vadd.f32 %v118, %v1957
    %v1959 = vpop.f32.mrb[0].mxu0
    %1960 = vdwg.mxu0
    %s1961 = scalar_lea.vmem %s0, 12
    %v1962 = vld [vmem:[%s1961] sm:$0x3]
    %1964 = vset.pattern.permute.xlu0 0
    %1965 = vperm.xlu0 %1964, %v1962
    %v1966 = vpop.permute.xlu0 %1965
    %v1968 = vmul.f32 %v1966, %v212
    %v1969 = vadd.f32 %v1968, %v111
    %1970 = vmatprep.subr.mxu0 0.0
    %1971 = vmatpush1.msra.mxu0 %v93
    %1972 = vmatprep.subr.mxu0 0.0
    %1973 = vmatpush1.msra.mxu0 %v94
    %1974 = vmatprep.subr.mxu0 0.0
    %1975 = vmatpush1.msra.mxu0 %v95
    %1976 = vmatprep.subr.mxu0 0.0
    %1977 = vmatpush1.msra.mxu0 %v96
    %1978 = vmatprep.subr.mxu0 0.0
    %1979 = vmatpush1.msra.mxu0 0.0
    %1980 = vmatprep.subr.mxu0 0.0
    %1981 = vmatpush1.msra.mxu0 0.0
    %1982 = vmatprep.subr.mxu0 0.0
    %1983 = vmatpush1.msra.mxu0 0.0
    %1984 = vmatprep.subr.mxu0 0.0
    %1985 = vmatpush1.msra.mxu0 0.0
    %1986 = vmatprep.subr.mxu0 0.0
    %1987 = vmatpush1.msra.mxu0 0.0
    %1988 = vmatprep.subr.mxu0 0.0
    %1989 = vmatpush1.msra.mxu0 0.0
    %1990 = vmatprep.subr.mxu0 0.0
    %1991 = vmatpush1.msra.mxu0 0.0
    %1992 = vmatprep.subr.mxu0 0.0
    %1993 = vmatpush1.msra.mxu0 0.0
    %1994 = vmatprep.subr.mxu0 0.0
    %1995 = vmatpush1.msra.mxu0 0.0
    %1996 = vmatprep.subr.mxu0 0.0
    %1997 = vmatpush1.msra.mxu0 0.0
    %1998 = vmatprep.subr.mxu0 0.0
    %1999 = vmatpush1.msra.mxu0 0.0
    %2000 = vmatprep.subr.mxu0 0.0
    %2001 = vmatpush1.msra.mxu0 0.0
    %2002 = vmatprep.subr.mxu0 0.0
    %2003 = vmatpush1.msra.mxu0 0.0
    %2004 = vmatprep.subr.mxu0 0.0
    %2005 = vmatpush1.msra.mxu0 0.0
    %2006 = vmatprep.subr.mxu0 0.0
    %2007 = vmatpush1.msra.mxu0 0.0
    %2008 = vmatprep.subr.mxu0 0.0
    %2009 = vmatpush1.msra.mxu0 0.0
    %2010 = vmatprep.subr.mxu0 0.0
    %2011 = vmatpush1.msra.mxu0 0.0
    %2012 = vmatprep.subr.mxu0 0.0
    %2013 = vmatpush1.msra.mxu0 0.0
    %2014 = vmatprep.subr.mxu0 0.0
    %2015 = vmatpush1.msra.mxu0 0.0
    %2016 = vmatprep.subr.mxu0 0.0
    %2017 = vmatpush1.msra.mxu0 0.0
    %2018 = vmatprep.subr.mxu0 0.0
    %2019 = vmatpush1.msra.mxu0 0.0
    %2020 = vmatprep.subr.mxu0 0.0
    %2021 = vmatpush1.msra.mxu0 0.0
    %2022 = vmatprep.subr.mxu0 0.0
    %2023 = vmatpush1.msra.mxu0 0.0
    %2024 = vmatprep.subr.mxu0 0.0
    %2025 = vmatpush1.msra.mxu0 0.0
    %2026 = vmatprep.subr.mxu0 0.0
    %2027 = vmatpush1.msra.mxu0 0.0
    %2028 = vmatprep.subr.mxu0 0.0
    %2029 = vmatpush1.msra.mxu0 0.0
    %2030 = vmatprep.subr.mxu0 0.0
    %2031 = vmatpush1.msra.mxu0 0.0
    %2032 = vmatprep.subr.mxu0 0.0
    %2033 = vmatpush1.msra.mxu0 0.0
    %2034 = vmatprep.mubr.f32.mxu0 0.0
    %2035 = vmatmul.mubr.f32.gmra.mrb[0].mxu0 %v1779
    %v2036 = vpop.f32.mrb[0].mxu0
    %v2037 = vadd.f32 0.0, %v2036
    %v2038 = vpop.f32.mrb[0].mxu0
    %2039 = vdwg.mxu0
    %v2040 = vadd.f32 %v1969, %v2037
    %v2041 = vxor.u32 %v2040, 2147483648
    %v2042 = vmul.f32 %v2041, 1.442695
    %v2043 = vpow.pop %v2042
    %v2044 = vadd.f32 %v2043, 1.0
    %v2045 = vrcp.pop %v2044
    %v2046 = vmul.f32 1.0, %v2045
    %v2047 = vtanh.pop %v2040
    %v2048 = vmul.f32 %v2046, %v1769
    %2050 = vrot.lane.b32.xlu0 %v2047, 64
    %v2051 = vpop.permute.xlu0 %2050
    %v2053 = vmul.f32 %v2046, %v2051
    %2055 = vrot.lane.b32.xlu0 %v2053, 32
    %v2056 = vpop.permute.xlu0 %2055
    %v2058 = vadd.f32 %v2048, %v2056
    %v2059 = vtanh.pop %v2058
    %2061 = vrot.lane.b32.xlu0 %v2059, 64
    %v2062 = vpop.permute.xlu0 %2061
    %v2064 = vmul.f32 %v2046, %v2062
    %2066 = vrot.lane.b32.xlu0 %v2064, 32
    %v2067 = vpop.permute.xlu0 %2066
    %v2068 = vsel %vm128, %v2067, 0
    %2070 = vmatprep.subr.mxu0 0.0
    %2071 = vmatpush1.msra.mxu0 %v97
    %2072 = vmatprep.subr.mxu0 0.0
    %2073 = vmatpush1.msra.mxu0 %v98
    %2074 = vmatprep.subr.mxu0 0.0
    %2075 = vmatpush1.msra.mxu0 %v99
    %2076 = vmatprep.subr.mxu0 0.0
    %2077 = vmatpush1.msra.mxu0 %v100
    %2078 = vmatprep.subr.mxu0 0.0
    %2079 = vmatpush1.msra.mxu0 0.0
    %2080 = vmatprep.subr.mxu0 0.0
    %2081 = vmatpush1.msra.mxu0 0.0
    %2082 = vmatprep.subr.mxu0 0.0
    %2083 = vmatpush1.msra.mxu0 0.0
    %2084 = vmatprep.subr.mxu0 0.0
    %2085 = vmatpush1.msra.mxu0 0.0
    %2086 = vmatprep.subr.mxu0 0.0
    %2087 = vmatpush1.msra.mxu0 0.0
    %2088 = vmatprep.subr.mxu0 0.0
    %2089 = vmatpush1.msra.mxu0 0.0
    %2090 = vmatprep.subr.mxu0 0.0
    %2091 = vmatpush1.msra.mxu0 0.0
    %2092 = vmatprep.subr.mxu0 0.0
    %2093 = vmatpush1.msra.mxu0 0.0
    %2094 = vmatprep.subr.mxu0 0.0
    %2095 = vmatpush1.msra.mxu0 0.0
    %2096 = vmatprep.subr.mxu0 0.0
    %2097 = vmatpush1.msra.mxu0 0.0
    %2098 = vmatprep.subr.mxu0 0.0
    %2099 = vmatpush1.msra.mxu0 0.0
    %2100 = vmatprep.subr.mxu0 0.0
    %2101 = vmatpush1.msra.mxu0 0.0
    %2102 = vmatprep.subr.mxu0 0.0
    %2103 = vmatpush1.msra.mxu0 0.0
    %2104 = vmatprep.subr.mxu0 0.0
    %2105 = vmatpush1.msra.mxu0 0.0
    %2106 = vmatprep.subr.mxu0 0.0
    %2107 = vmatpush1.msra.mxu0 0.0
    %2108 = vmatprep.subr.mxu0 0.0
    %2109 = vmatpush1.msra.mxu0 0.0
    %2110 = vmatprep.subr.mxu0 0.0
    %2111 = vmatpush1.msra.mxu0 0.0
    %2112 = vmatprep.subr.mxu0 0.0
    %2113 = vmatpush1.msra.mxu0 0.0
    %2114 = vmatprep.subr.mxu0 0.0
    %2115 = vmatpush1.msra.mxu0 0.0
    %2116 = vmatprep.subr.mxu0 0.0
    %2117 = vmatpush1.msra.mxu0 0.0
    %2118 = vmatprep.subr.mxu0 0.0
    %2119 = vmatpush1.msra.mxu0 0.0
    %2120 = vmatprep.subr.mxu0 0.0
    %2121 = vmatpush1.msra.mxu0 0.0
    %2122 = vmatprep.subr.mxu0 0.0
    %2123 = vmatpush1.msra.mxu0 0.0
    %2124 = vmatprep.subr.mxu0 0.0
    %2125 = vmatpush1.msra.mxu0 0.0
    %2126 = vmatprep.subr.mxu0 0.0
    %2127 = vmatpush1.msra.mxu0 0.0
    %2128 = vmatprep.subr.mxu0 0.0
    %2129 = vmatpush1.msra.mxu0 0.0
    %2130 = vmatprep.subr.mxu0 0.0
    %2131 = vmatpush1.msra.mxu0 0.0
    %2132 = vmatprep.subr.mxu0 0.0
    %2133 = vmatpush1.msra.mxu0 0.0
    %2134 = vmatprep.mubr.f32.mxu0 0.0
    %2135 = vmatmul.mubr.f32.gmra.mrb[0].mxu0 %v2068
    %v2136 = vpop.f32.mrb[0].mxu0
    %v2137 = vadd.f32 0.0, %v2136
    %v2138 = vpop.f32.mrb[0].mxu0
    %2139 = vdwg.mxu0
    %v2140 = vadd.f32 %v1958, %v2137
    %v2141 = vxor.u32 %v2140, 2147483648
    %v2142 = vmul.f32 %v2141, 1.442695
    %v2143 = vpow.pop %v2142
    %v2144 = vadd.f32 %v2143, 1.0
    %v2145 = vrcp.pop %v2144
    %v2146 = vmul.f32 1.0, %v2145
    %v2147 = vtanh.pop %v2140
    %v2148 = vmul.f32 %v2146, %v1869
    %2150 = vrot.lane.b32.xlu0 %v2147, 64
    %v2151 = vpop.permute.xlu0 %2150
    %v2153 = vmul.f32 %v2146, %v2151
    %2155 = vrot.lane.b32.xlu0 %v2153, 32
    %v2156 = vpop.permute.xlu0 %2155
    %v2158 = vadd.f32 %v2148, %v2156
    %v2159 = vtanh.pop %v2158
    %2161 = vrot.lane.b32.xlu0 %v2159, 64
    %v2162 = vpop.permute.xlu0 %2161
    %v2164 = vmul.f32 %v2146, %v2162
    %v2165 = vmul.f32 %v2164, %v428
    %2167 = vrot.lane.b32.xlu0 %v2165, 32
    %v2168 = vpop.permute.xlu0 %2167
    %v2170 = vsel %vm435, %v2168, 0.0
    %2171 = vadd.xlane.f32.xlu0 %v2170
    %v2172 = vpop.xlane.xlu0 %2171
    %vm2173 = vcmp.eq.s32.totalorder %v121, 6
    %v2174 = vsel %vm2173, %v2172, %v1885
    %2176 = vrot.lane.b32.xlu0 %v2164, 32
    %v2177 = vpop.permute.xlu0 %2176
    %v2178 = vsel %vm128, %v2177, 0
    %2180 = vmatprep.subr.mxu0 0.0
    %2181 = vmatpush1.msra.mxu0 %v101
    %2182 = vmatprep.subr.mxu0 0.0
    %2183 = vmatpush1.msra.mxu0 %v102
    %2184 = vmatprep.subr.mxu0 0.0
    %2185 = vmatpush1.msra.mxu0 %v103
    %2186 = vmatprep.subr.mxu0 0.0
    %2187 = vmatpush1.msra.mxu0 %v104
    %2188 = vmatprep.subr.mxu0 0.0
    %2189 = vmatpush1.msra.mxu0 0.0
    %2190 = vmatprep.subr.mxu0 0.0
    %2191 = vmatpush1.msra.mxu0 0.0
    %2192 = vmatprep.subr.mxu0 0.0
    %2193 = vmatpush1.msra.mxu0 0.0
    %2194 = vmatprep.subr.mxu0 0.0
    %2195 = vmatpush1.msra.mxu0 0.0
    %2196 = vmatprep.subr.mxu0 0.0
    %2197 = vmatpush1.msra.mxu0 0.0
    %2198 = vmatprep.subr.mxu0 0.0
    %2199 = vmatpush1.msra.mxu0 0.0
    %2200 = vmatprep.subr.mxu0 0.0
    %2201 = vmatpush1.msra.mxu0 0.0
    %2202 = vmatprep.subr.mxu0 0.0
    %2203 = vmatpush1.msra.mxu0 0.0
    %2204 = vmatprep.subr.mxu0 0.0
    %2205 = vmatpush1.msra.mxu0 0.0
    %2206 = vmatprep.subr.mxu0 0.0
    %2207 = vmatpush1.msra.mxu0 0.0
    %2208 = vmatprep.subr.mxu0 0.0
    %2209 = vmatpush1.msra.mxu0 0.0
    %2210 = vmatprep.subr.mxu0 0.0
    %2211 = vmatpush1.msra.mxu0 0.0
    %2212 = vmatprep.subr.mxu0 0.0
    %2213 = vmatpush1.msra.mxu0 0.0
    %2214 = vmatprep.subr.mxu0 0.0
    %2215 = vmatpush1.msra.mxu0 0.0
    %2216 = vmatprep.subr.mxu0 0.0
    %2217 = vmatpush1.msra.mxu0 0.0
    %2218 = vmatprep.subr.mxu0 0.0
    %2219 = vmatpush1.msra.mxu0 0.0
    %2220 = vmatprep.subr.mxu0 0.0
    %2221 = vmatpush1.msra.mxu0 0.0
    %2222 = vmatprep.subr.mxu0 0.0
    %2223 = vmatpush1.msra.mxu0 0.0
    %2224 = vmatprep.subr.mxu0 0.0
    %2225 = vmatpush1.msra.mxu0 0.0
    %2226 = vmatprep.subr.mxu0 0.0
    %2227 = vmatpush1.msra.mxu0 0.0
    %2228 = vmatprep.subr.mxu0 0.0
    %2229 = vmatpush1.msra.mxu0 0.0
    %2230 = vmatprep.subr.mxu0 0.0
    %2231 = vmatpush1.msra.mxu0 0.0
    %2232 = vmatprep.subr.mxu0 0.0
    %2233 = vmatpush1.msra.mxu0 0.0
    %2234 = vmatprep.subr.mxu0 0.0
    %2235 = vmatpush1.msra.mxu0 0.0
    %2236 = vmatprep.subr.mxu0 0.0
    %2237 = vmatpush1.msra.mxu0 0.0
    %2238 = vmatprep.subr.mxu0 0.0
    %2239 = vmatpush1.msra.mxu0 0.0
    %2240 = vmatprep.subr.mxu0 0.0
    %2241 = vmatpush1.msra.mxu0 0.0
    %2242 = vmatprep.subr.mxu0 0.0
    %2243 = vmatpush1.msra.mxu0 0.0
    %2244 = vmatprep.mubr.f32.mxu0 0.0
    %2245 = vmatmul.mubr.f32.gmra.mrb[0].mxu0 %v2178
    %v2246 = vpop.f32.mrb[0].mxu0
    %v2247 = vadd.f32 %v118, %v2246
    %v2248 = vpop.f32.mrb[0].mxu0
    %2249 = vdwg.mxu0
    %s2250 = scalar_lea.vmem %s0, 14
    %v2251 = vld [vmem:[%s2250] sm:$0x3]
    %2253 = vset.pattern.permute.xlu0 0
    %2254 = vperm.xlu0 %2253, %v2251
    %v2255 = vpop.permute.xlu0 %2254
    %v2257 = vmul.f32 %v2255, %v212
    %v2258 = vadd.f32 %v2257, %v111
    %2259 = vmatprep.subr.mxu0 0.0
    %2260 = vmatpush1.msra.mxu0 %v93
    %2261 = vmatprep.subr.mxu0 0.0
    %2262 = vmatpush1.msra.mxu0 %v94
    %2263 = vmatprep.subr.mxu0 0.0
    %2264 = vmatpush1.msra.mxu0 %v95
    %2265 = vmatprep.subr.mxu0 0.0
    %2266 = vmatpush1.msra.mxu0 %v96
    %2267 = vmatprep.subr.mxu0 0.0
    %2268 = vmatpush1.msra.mxu0 0.0
    %2269 = vmatprep.subr.mxu0 0.0
    %2270 = vmatpush1.msra.mxu0 0.0
    %2271 = vmatprep.subr.mxu0 0.0
    %2272 = vmatpush1.msra.mxu0 0.0
    %2273 = vmatprep.subr.mxu0 0.0
    %2274 = vmatpush1.msra.mxu0 0.0
    %2275 = vmatprep.subr.mxu0 0.0
    %2276 = vmatpush1.msra.mxu0 0.0
    %2277 = vmatprep.subr.mxu0 0.0
    %2278 = vmatpush1.msra.mxu0 0.0
    %2279 = vmatprep.subr.mxu0 0.0
    %2280 = vmatpush1.msra.mxu0 0.0
    %2281 = vmatprep.subr.mxu0 0.0
    %2282 = vmatpush1.msra.mxu0 0.0
    %2283 = vmatprep.subr.mxu0 0.0
    %2284 = vmatpush1.msra.mxu0 0.0
    %2285 = vmatprep.subr.mxu0 0.0
    %2286 = vmatpush1.msra.mxu0 0.0
    %2287 = vmatprep.subr.mxu0 0.0
    %2288 = vmatpush1.msra.mxu0 0.0
    %2289 = vmatprep.subr.mxu0 0.0
    %2290 = vmatpush1.msra.mxu0 0.0
    %2291 = vmatprep.subr.mxu0 0.0
    %2292 = vmatpush1.msra.mxu0 0.0
    %2293 = vmatprep.subr.mxu0 0.0
    %2294 = vmatpush1.msra.mxu0 0.0
    %2295 = vmatprep.subr.mxu0 0.0
    %2296 = vmatpush1.msra.mxu0 0.0
    %2297 = vmatprep.subr.mxu0 0.0
    %2298 = vmatpush1.msra.mxu0 0.0
    %2299 = vmatprep.subr.mxu0 0.0
    %2300 = vmatpush1.msra.mxu0 0.0
    %2301 = vmatprep.subr.mxu0 0.0
    %2302 = vmatpush1.msra.mxu0 0.0
    %2303 = vmatprep.subr.mxu0 0.0
    %2304 = vmatpush1.msra.mxu0 0.0
    %2305 = vmatprep.subr.mxu0 0.0
    %2306 = vmatpush1.msra.mxu0 0.0
    %2307 = vmatprep.subr.mxu0 0.0
    %2308 = vmatpush1.msra.mxu0 0.0
    %2309 = vmatprep.subr.mxu0 0.0
    %2310 = vmatpush1.msra.mxu0 0.0
    %2311 = vmatprep.subr.mxu0 0.0
    %2312 = vmatpush1.msra.mxu0 0.0
    %2313 = vmatprep.subr.mxu0 0.0
    %2314 = vmatpush1.msra.mxu0 0.0
    %2315 = vmatprep.subr.mxu0 0.0
    %2316 = vmatpush1.msra.mxu0 0.0
    %2317 = vmatprep.subr.mxu0 0.0
    %2318 = vmatpush1.msra.mxu0 0.0
    %2319 = vmatprep.subr.mxu0 0.0
    %2320 = vmatpush1.msra.mxu0 0.0
    %2321 = vmatprep.subr.mxu0 0.0
    %2322 = vmatpush1.msra.mxu0 0.0
    %2323 = vmatprep.mubr.f32.mxu0 0.0
    %2324 = vmatmul.mubr.f32.gmra.mrb[0].mxu0 %v2068
    %v2325 = vpop.f32.mrb[0].mxu0
    %v2326 = vadd.f32 0.0, %v2325
    %v2327 = vpop.f32.mrb[0].mxu0
    %2328 = vdwg.mxu0
    %v2329 = vadd.f32 %v2258, %v2326
    %v2330 = vxor.u32 %v2329, 2147483648
    %v2331 = vmul.f32 %v2330, 1.442695
    %v2332 = vpow.pop %v2331
    %v2333 = vadd.f32 %v2332, 1.0
    %v2334 = vrcp.pop %v2333
    %v2335 = vmul.f32 1.0, %v2334
    %v2336 = vtanh.pop %v2329
    %v2337 = vmul.f32 %v2335, %v2058
    %2339 = vrot.lane.b32.xlu0 %v2336, 64
    %v2340 = vpop.permute.xlu0 %2339
    %v2342 = vmul.f32 %v2335, %v2340
    %2344 = vrot.lane.b32.xlu0 %v2342, 32
    %v2345 = vpop.permute.xlu0 %2344
    %v2347 = vadd.f32 %v2337, %v2345
    %v2348 = vtanh.pop %v2347
    %2350 = vrot.lane.b32.xlu0 %v2348, 64
    %v2351 = vpop.permute.xlu0 %2350
    %v2353 = vmul.f32 %v2335, %v2351
    %2355 = vrot.lane.b32.xlu0 %v2353, 32
    %v2356 = vpop.permute.xlu0 %2355
    %v2357 = vsel %vm128, %v2356, 0
    %2359 = vmatprep.subr.mxu0 0.0
    %2360 = vmatpush1.msra.mxu0 %v97
    %2361 = vmatprep.subr.mxu0 0.0
    %2362 = vmatpush1.msra.mxu0 %v98
    %2363 = vmatprep.subr.mxu0 0.0
    %2364 = vmatpush1.msra.mxu0 %v99
    %2365 = vmatprep.subr.mxu0 0.0
    %2366 = vmatpush1.msra.mxu0 %v100
    %2367 = vmatprep.subr.mxu0 0.0
    %2368 = vmatpush1.msra.mxu0 0.0
    %2369 = vmatprep.subr.mxu0 0.0
    %2370 = vmatpush1.msra.mxu0 0.0
    %2371 = vmatprep.subr.mxu0 0.0
    %2372 = vmatpush1.msra.mxu0 0.0
    %2373 = vmatprep.subr.mxu0 0.0
    %2374 = vmatpush1.msra.mxu0 0.0
    %2375 = vmatprep.subr.mxu0 0.0
    %2376 = vmatpush1.msra.mxu0 0.0
    %2377 = vmatprep.subr.mxu0 0.0
    %2378 = vmatpush1.msra.mxu0 0.0
    %2379 = vmatprep.subr.mxu0 0.0
    %2380 = vmatpush1.msra.mxu0 0.0
    %2381 = vmatprep.subr.mxu0 0.0
    %2382 = vmatpush1.msra.mxu0 0.0
    %2383 = vmatprep.subr.mxu0 0.0
    %2384 = vmatpush1.msra.mxu0 0.0
    %2385 = vmatprep.subr.mxu0 0.0
    %2386 = vmatpush1.msra.mxu0 0.0
    %2387 = vmatprep.subr.mxu0 0.0
    %2388 = vmatpush1.msra.mxu0 0.0
    %2389 = vmatprep.subr.mxu0 0.0
    %2390 = vmatpush1.msra.mxu0 0.0
    %2391 = vmatprep.subr.mxu0 0.0
    %2392 = vmatpush1.msra.mxu0 0.0
    %2393 = vmatprep.subr.mxu0 0.0
    %2394 = vmatpush1.msra.mxu0 0.0
    %2395 = vmatprep.subr.mxu0 0.0
    %2396 = vmatpush1.msra.mxu0 0.0
    %2397 = vmatprep.subr.mxu0 0.0
    %2398 = vmatpush1.msra.mxu0 0.0
    %2399 = vmatprep.subr.mxu0 0.0
    %2400 = vmatpush1.msra.mxu0 0.0
    %2401 = vmatprep.subr.mxu0 0.0
    %2402 = vmatpush1.msra.mxu0 0.0
    %2403 = vmatprep.subr.mxu0 0.0
    %2404 = vmatpush1.msra.mxu0 0.0
    %2405 = vmatprep.subr.mxu0 0.0
    %2406 = vmatpush1.msra.mxu0 0.0
    %2407 = vmatprep.subr.mxu0 0.0
    %2408 = vmatpush1.msra.mxu0 0.0
    %2409 = vmatprep.subr.mxu0 0.0
    %2410 = vmatpush1.msra.mxu0 0.0
    %2411 = vmatprep.subr.mxu0 0.0
    %2412 = vmatpush1.msra.mxu0 0.0
    %2413 = vmatprep.subr.mxu0 0.0
    %2414 = vmatpush1.msra.mxu0 0.0
    %2415 = vmatprep.subr.mxu0 0.0
    %2416 = vmatpush1.msra.mxu0 0.0
    %2417 = vmatprep.subr.mxu0 0.0
    %2418 = vmatpush1.msra.mxu0 0.0
    %2419 = vmatprep.subr.mxu0 0.0
    %2420 = vmatpush1.msra.mxu0 0.0
    %2421 = vmatprep.subr.mxu0 0.0
    %2422 = vmatpush1.msra.mxu0 0.0
    %2423 = vmatprep.mubr.f32.mxu0 0.0
    %2424 = vmatmul.mubr.f32.gmra.mrb[0].mxu0 %v2357
    %v2425 = vpop.f32.mrb[0].mxu0
    %v2426 = vadd.f32 0.0, %v2425
    %v2427 = vpop.f32.mrb[0].mxu0
    %2428 = vdwg.mxu0
    %v2429 = vadd.f32 %v2247, %v2426
    %v2430 = vxor.u32 %v2429, 2147483648
    %v2431 = vmul.f32 %v2430, 1.442695
    %v2432 = vpow.pop %v2431
    %v2433 = vadd.f32 %v2432, 1.0
    %v2434 = vrcp.pop %v2433
    %v2435 = vmul.f32 1.0, %v2434
    %v2436 = vtanh.pop %v2429
    %v2437 = vmul.f32 %v2435, %v2158
    %2439 = vrot.lane.b32.xlu0 %v2436, 64
    %v2440 = vpop.permute.xlu0 %2439
    %v2442 = vmul.f32 %v2435, %v2440
    %2444 = vrot.lane.b32.xlu0 %v2442, 32
    %v2445 = vpop.permute.xlu0 %2444
    %v2447 = vadd.f32 %v2437, %v2445
    %v2448 = vtanh.pop %v2447
    %2450 = vrot.lane.b32.xlu0 %v2448, 64
    %v2451 = vpop.permute.xlu0 %2450
    %v2453 = vmul.f32 %v2435, %v2451
    %v2454 = vmul.f32 %v2453, %v428
    %2456 = vrot.lane.b32.xlu0 %v2454, 32
    %v2457 = vpop.permute.xlu0 %2456
    %v2459 = vsel %vm435, %v2457, 0.0
    %2460 = vadd.xlane.f32.xlu0 %v2459
    %v2461 = vpop.xlane.xlu0 %2460
    %vm2462 = vcmp.eq.s32.totalorder %v121, 7
    %v2463 = vsel %vm2462, %v2461, %v2174
    %v2464 = vld [vmem:[#allocation2] sm:$0x1]
    %v2466 = vlaneseq
    %v2467 = vshrl.u32 %v2466, 7
    %v2468 = vsub.s32 0, %v2467
    %v2469 = vrot.slane %v2464, %v2468
    %2470 = vset.pattern.permute.xlu0 0
    %2471 = vperm.xlu0 %2470, %v2469
    %v2472 = vpop.permute.xlu0 %2471
    %v2474 = vadd.f32 %v2463, %v2472
    %vm2475 = vcmask 58368
    %2476 = vst.msk [vmem:[#allocation11] sm:$0x3] %vm2475, %v2474
    // Predicated region
    $region62: #{tpu_custom_call.1} parent=1 // pred_check
      _
    $region63: #{tpu_custom_call.1} parent=1 // pred_check_branch
      %2478 = sbr.rel (0) target = $region65
    $region64: #{tpu_custom_call.1} parent=1 // pred_region
      %s2480 = ssub.s32 32, 32
      %2481 = vsyncadd [#allocation5], %s2480
      %s2483 = sshll.u32 [#allocation11], 4
      %s2484 = int_to_ptr.vmem [resolvable:$true] %s2483
      %2486 = dma.vmem_to_hbm [thread:$0]  %s2484, 32, %s11, [#allocation5]
    $region65: #{tpu_custom_call.1} parent=1 // pred_fallthru
      _
    // Predicated region
    $region66: #{tpu_custom_call.1} parent=1 // pred_check
      _
    $region67: #{tpu_custom_call.1} parent=1 // pred_check_branch
      %2488 = sbr.rel (0) target = $region69
    $region68: #{tpu_custom_call.1} parent=1 // pred_region
      %2489 = dma.done [#allocation5], 32
    $region69: #{tpu_custom_call.1} parent=1 // pred_fallthru
      _
    %2490 = vsyncpa [#allocation4], 1
    %2491 = vsyncpa [#allocation7], 1
    %2492 = vsyncpa [#allocation10], 1
    %2493 = vsyncpa [#allocation5], 1

</llo_original>
